<compile_context>
chip_gen: v5e
topology: v5e:2x2
jax: 0.10.0
libtpu: 0.0.40
codegen_flags: <defaults>
</compile_context>

<pallas_src>
import jax
import jax.numpy as jnp
from jax.experimental import pallas as pl
from jax.experimental.pallas import tpu as pltpu


def _round_up(a, m):
    return -(-a // m) * m


# ------------------------------ Pallas kernel ------------------------------ #
def _make_lenet_kernel(B):
    """Whole LeNet forward for one batch tile of B images (B % 16 == 0)."""

    def kernel(x_ref, m1_ref, b1_ref, m2_ref, b2_ref,
               fc1w_ref, fc1b_ref, fc2w_ref, fc2b_ref, fc3w_ref, fc3b_ref,
               o_ref):
        # x_ref: (4, 8, B, 96) bf16 = [h%4, h//4, b, w*3+cin] of the 3x32x32 tile.
        xres = [x_ref[r] for r in range(4)]               # each (8, B, 96) bf16
        b1 = b1_ref[...]                                  # (1, 256) f32, hoisted
        b2 = b2_ref[...]                                  # (1, 256) f32, hoisted

        # ---- conv1 + ReLU + 2x2 maxpool, phase decomposed ------------------ #
        # conv1 output row oh = 4t + p; m1[i] maps packed (w_in, cin) lanes to
        # [ow-even | ow-odd] x cout lanes, each parity half zero-padded to 128.
        def conv1_phase(p):
            acc = None
            for i in range(5):
                r, s = (p + i) % 4, (p + i) // 4
                xs = xres[r][s:s + 7].reshape(7 * B, 96)  # rows = t*B + b
                t = jnp.dot(xs, m1_ref[i], preferred_element_type=jnp.float32)
                acc = t if acc is None else acc + t       # (7B, 256) f32
            a = jnp.maximum(acc + b1, 0.0)
            return jnp.maximum(a[:, :128], a[:, 128:])    # pool over ow parity

        # Pool over oh parity pair-by-pair (p=0,1 -> even pooled rows,
        # p=2,3 -> odd pooled rows) to limit live intermediates.
        p1 = [jnp.maximum(conv1_phase(0), conv1_phase(1))
              .reshape(7, B, 128).astype(jnp.bfloat16),
              jnp.maximum(conv1_phase(2), conv1_phase(3))
              .reshape(7, B, 128).astype(jnp.bfloat16)]   # [parity][t, b, lane]

        # ---- conv2 + ReLU + 2x2 maxpool, phase decomposed ------------------ #
        def conv2_phase(ph):
            acc = None
            for i in range(5):
                par, s = (ph + i) % 2, (ph + i) // 2
                xs = p1[par][s:s + 5].reshape(5 * B, 128)
                t = jnp.dot(xs, m2_ref[i], preferred_element_type=jnp.float32)
                acc = t if acc is None else acc + t       # (5B, 256) f32
            a = jnp.maximum(acc + b2, 0.0)
            return jnp.maximum(a[:, :128], a[:, 128:])

        p2 = (jnp.maximum(conv2_phase(0), conv2_phase(1))
              .reshape(5, B, 128).astype(jnp.bfloat16))   # [h2, b, w2*16+c (pad 128)]

        # ---- fc1 + fc2 + fc3 (PyTorch (C,H,W) flatten folded into fc1w) ---- #
        acc = None
        for h in range(5):
            t = jnp.dot(p2[h], fc1w_ref[h], preferred_element_type=jnp.float32)
            acc = t if acc is None else acc + t           # (B, 120) f32
        h1 = jnp.maximum(acc + fc1b_ref[...], 0.0).astype(jnp.bfloat16)
        h2 = jnp.maximum(
            jnp.dot(h1, fc2w_ref[...], preferred_element_type=jnp.float32)
            + fc2b_ref[...], 0.0).astype(jnp.bfloat16)
        out = (jnp.dot(h2, fc3w_ref[...], preferred_element_type=jnp.float32)
               + fc3b_ref[...])                           # (B, 128); lanes 10.. = 0
        o_ref[...] = out.astype(o_ref.dtype)

    return kernel


# ------------------------------ wrapper / glue ------------------------------ #
def _banded_conv_matrices(w_oihw, w_in, w_out_half, in_lanes, half_lanes):
    """Per-kh banded matrices: packed (w_in, cin) input lanes -> packed
    [ow-even | ow-odd] x cout output lanes, each parity half zero-padded to
    `half_lanes` so the fused 2x2-pool max is a 128-lane-aligned VPU max."""
    cout, cin, kh, kw = w_oihw.shape
    j = jnp.arange(kw)[:, None, None, None]
    blk = jnp.arange(2)[None, :, None, None]
    v = jnp.arange(w_in)[None, None, :, None]
    u = jnp.arange(w_out_half)[None, None, None, :]
    sel = (v == 2 * u + blk + j).astype(jnp.float32)   # (kw, 2, w_in, w_out_half)
    m = jnp.einsum("jbvu,ocij->ibvcuo", sel, w_oihw,
                   precision=jax.lax.Precision.HIGHEST)
    m = m.transpose(0, 2, 3, 1, 4, 5).reshape(kh, w_in * cin, 2, w_out_half * cout)
    m = jnp.pad(m, ((0, 0), (0, in_lanes - w_in * cin), (0, 0),
                    (0, half_lanes - w_out_half * cout)))
    return m.reshape(kh, in_lanes, 2 * half_lanes)


def _padded_pool_bias(b, reps, half_lanes):
    half = jnp.pad(jnp.tile(b, reps), (0, half_lanes - reps * b.shape[0]))
    return jnp.concatenate([half, half]).reshape(1, 2 * half_lanes)


@jax.jit
def forward(params, x_nchw):
    n, c, hh, ww = x_nchw.shape
    assert (c, hh, ww) == (3, 32, 32), "TheModelClass implies 3x32x32 input"

    # Batch tile: multiple of 16 (bf16 sublane packing), capped at 128, and
    # >= 2 grid steps when the batch is big enough (v7x megacore sharding).
    n16 = _round_up(n, 16)
    b_tile = n16 if n16 <= 32 else min(128, _round_up(n16 // 2, 16))
    n_pad = _round_up(n, b_tile)

    # Single-pass input re-layout (bf16): NCHW -> [h%4, h//4, n, w*3+c].
    xh = x_nchw.astype(jnp.bfloat16).reshape(n, 3, 8, 4, 32)   # [n,c,h//4,h%4,w]
    xr = jnp.transpose(xh, (3, 2, 0, 4, 1)).reshape(4, 8, n, 96)
    if n_pad != n:
        xr = jnp.pad(xr, ((0, 0), (0, 0), (0, n_pad - n), (0, 0)))

    # Weight re-layouts (tiny, done under jit): bf16 MXU operands, f32 biases.
    m1 = _banded_conv_matrices(params["conv1_w"], 32, 14, 96, 128).astype(jnp.bfloat16)
    m2 = _banded_conv_matrices(params["conv2_w"], 14, 5, 128, 128).astype(jnp.bfloat16)
    b1p = _padded_pool_bias(params["conv1_b"].astype(jnp.float32), 14, 128)   # (1,256)
    b2p = _padded_pool_bias(params["conv2_b"].astype(jnp.float32), 5, 128)    # (1,256)
    fc1w = (params["fc1_w"].reshape(120, 16, 5, 5)                 # [o, c, h, w]
            .transpose(2, 3, 1, 0).reshape(5, 80, 120))            # [h][w*16+c, o]
    fc1w = jnp.pad(fc1w, ((0, 0), (0, 48), (0, 0))).astype(jnp.bfloat16)       # (5,128,120)
    fc1b = params["fc1_b"].reshape(1, 120).astype(jnp.float32)
    fc2w = params["fc2_w"].T.astype(jnp.bfloat16)                              # (120,84)
    fc2b = params["fc2_b"].reshape(1, 84).astype(jnp.float32)
    fc3w = jnp.pad(params["fc3_w"].T, ((0, 0), (0, 118))).astype(jnp.bfloat16) # (84,128)
    fc3b = jnp.pad(params["fc3_b"], (0, 118)).reshape(1, 128).astype(jnp.float32)

    def full(shape):
        return pl.BlockSpec(shape, lambda i, _nd=len(shape): (0,) * _nd)

    out = pl.pallas_call(
        _make_lenet_kernel(b_tile),
        out_shape=jax.ShapeDtypeStruct((n_pad, 128), jnp.float32),
        grid=(n_pad // b_tile,),
        in_specs=[
            pl.BlockSpec((4, 8, b_tile, 96), lambda i: (0, 0, i, 0)),
            full((5, 96, 256)), full((1, 256)),
            full((5, 128, 256)), full((1, 256)),
            full((5, 128, 120)), full((1, 120)),
            full((120, 84)), full((1, 84)),
            full((84, 128)), full((1, 128)),
        ],
        out_specs=pl.BlockSpec((b_tile, 128), lambda i: (i, 0)),
        compiler_params=pltpu.CompilerParams(
            dimension_semantics=("parallel",),
            vmem_limit_bytes=32 * 1024 * 1024,
        ),
    )(xr, m1, b1p, m2, b2p, fc1w, fc1b, fc2w, fc2b, fc3w, fc3b)
    return out[:n, :10]


# ------------------------------ params / reference -------------------------- #
def init_params(key):
    ks = jax.random.split(key, 10)

    def u(k, shape, fan_in):
        bound = 1.0 / jnp.sqrt(jnp.float32(fan_in))
        return jax.random.uniform(k, shape, jnp.float32, -bound, bound)

    return {
        "conv1_w": u(ks[0], (6, 3, 5, 5), 3 * 5 * 5),
        "conv1_b": u(ks[1], (6,), 3 * 5 * 5),
        "conv2_w": u(ks[2], (16, 6, 5, 5), 6 * 5 * 5),
        "conv2_b": u(ks[3], (16,), 6 * 5 * 5),
        "fc1_w": u(ks[4], (120, 400), 400),
        "fc1_b": u(ks[5], (120,), 400),
        "fc2_w": u(ks[6], (84, 120), 120),
        "fc2_b": u(ks[7], (84,), 120),
        "fc3_w": u(ks[8], (10, 84), 84),
        "fc3_b": u(ks[9], (10,), 84),
    }


def reference(params, x_nchw):
    """Pure-JAX re-implementation of TheModelClass.forward (validation only)."""
    x = x_nchw.astype(jnp.float32)

    def conv(x, w, b):
        y = jax.lax.conv_general_dilated(
            x, w, window_strides=(1, 1), padding="VALID",
            dimension_numbers=("NCHW", "OIHW", "NCHW"))
        return y + b[None, :, None, None]

    def pool(x):
        return jax.lax.reduce_window(
            x, -jnp.inf, jax.lax.max, (1, 1, 2, 2), (1, 1, 2, 2), "VALID")

    y = pool(jax.nn.relu(conv(x, params["conv1_w"], params["conv1_b"])))
    y = pool(jax.nn.relu(conv(y, params["conv2_w"], params["conv2_b"])))
    y = y.reshape(y.shape[0], 16 * 5 * 5)
    y = jax.nn.relu(y @ params["fc1_w"].T + params["fc1_b"])
    y = jax.nn.relu(y @ params["fc2_w"].T + params["fc2_b"])
    return y @ params["fc3_w"].T + params["fc3_b"]


if __name__ == "__main__":
    key = jax.random.PRNGKey(0)
    pkey, xkey = jax.random.split(key)
    params = init_params(pkey)
    x = jax.random.normal(xkey, (2, 3, 32, 32), dtype=jnp.float32)

    out = forward(params, x)
    jax.block_until_ready(out)
    assert out.shape == (2, 10) and out.dtype == jnp.float32

    with jax.default_matmul_precision("highest"):
        ref = reference(params, x)
    err = float(jnp.max(jnp.abs(out - ref)))
    assert err < 5e-2, f"Pallas output mismatch vs reference (max abs err {err})"
    print("KERNEL_OK")
</pallas_src>

<mosaic_0001>
module attributes {stable_mosaic.version = 11 : i64} {
  func.func @kernel(%arg0: i32, %arg1: memref<4x8x16x96xbf16, #tpu.memory_space<vmem>>, %arg2: memref<5x96x256xbf16, #tpu.memory_space<vmem>>, %arg3: memref<1x256xf32, #tpu.memory_space<vmem>>, %arg4: memref<5x128x256xbf16, #tpu.memory_space<vmem>>, %arg5: memref<1x256xf32, #tpu.memory_space<vmem>>, %arg6: memref<5x128x120xbf16, #tpu.memory_space<vmem>>, %arg7: memref<1x120xf32, #tpu.memory_space<vmem>>, %arg8: memref<120x84xbf16, #tpu.memory_space<vmem>>, %arg9: memref<1x84xf32, #tpu.memory_space<vmem>>, %arg10: memref<84x128xbf16, #tpu.memory_space<vmem>>, %arg11: memref<1x128xf32, #tpu.memory_space<vmem>>, %arg12: memref<16x128xf32, #tpu.memory_space<vmem>>) attributes {dimension_semantics = [#tpu.dimension_semantics<parallel>], iteration_bounds = array<i64: 1>, scalar_prefetch = 0 : i64, scratch_operands = 0 : i64, tpu.core_type = #tpu.core_type<tc>, window_params = [{transform_indices = @transform_0, window_bounds = array<i64: 4, 8, 16, 96>}, {pipeline_mode = #tpu.pipeline_mode<synchronous>, transform_indices = @transform_1, window_bounds = array<i64: 5, 96, 256>}, {pipeline_mode = #tpu.pipeline_mode<synchronous>, transform_indices = @transform_2, window_bounds = array<i64: 1, 256>}, {pipeline_mode = #tpu.pipeline_mode<synchronous>, transform_indices = @transform_3, window_bounds = array<i64: 5, 128, 256>}, {pipeline_mode = #tpu.pipeline_mode<synchronous>, transform_indices = @transform_4, window_bounds = array<i64: 1, 256>}, {pipeline_mode = #tpu.pipeline_mode<synchronous>, transform_indices = @transform_5, window_bounds = array<i64: 5, 128, 120>}, {pipeline_mode = #tpu.pipeline_mode<synchronous>, transform_indices = @transform_6, window_bounds = array<i64: 1, 120>}, {pipeline_mode = #tpu.pipeline_mode<synchronous>, transform_indices = @transform_7, window_bounds = array<i64: 120, 84>}, {pipeline_mode = #tpu.pipeline_mode<synchronous>, transform_indices = @transform_8, window_bounds = array<i64: 1, 84>}, {pipeline_mode = #tpu.pipeline_mode<synchronous>, transform_indices = @transform_9, window_bounds = array<i64: 84, 128>}, {pipeline_mode = #tpu.pipeline_mode<synchronous>, transform_indices = @transform_10, window_bounds = array<i64: 1, 128>}, {transform_indices = @transform_11, window_bounds = array<i64: 16, 128>}]} {
    %c0 = arith.constant 0 : index
    %c0_0 = arith.constant 0 : index
    %c0_1 = arith.constant 0 : index
    %c0_2 = arith.constant 0 : index
    %0 = vector.load %arg1[%c0, %c0_0, %c0_1, %c0_2] : memref<4x8x16x96xbf16, #tpu.memory_space<vmem>>, vector<1x8x16x96xbf16>
    %1 = vector.shape_cast %0 : vector<1x8x16x96xbf16> to vector<8x16x96xbf16>
    %c1 = arith.constant 1 : index
    %c0_3 = arith.constant 0 : index
    %c0_4 = arith.constant 0 : index
    %c0_5 = arith.constant 0 : index
    %2 = vector.load %arg1[%c1, %c0_3, %c0_4, %c0_5] : memref<4x8x16x96xbf16, #tpu.memory_space<vmem>>, vector<1x8x16x96xbf16>
    %3 = vector.shape_cast %2 : vector<1x8x16x96xbf16> to vector<8x16x96xbf16>
    %c2 = arith.constant 2 : index
    %c0_6 = arith.constant 0 : index
    %c0_7 = arith.constant 0 : index
    %c0_8 = arith.constant 0 : index
    %4 = vector.load %arg1[%c2, %c0_6, %c0_7, %c0_8] : memref<4x8x16x96xbf16, #tpu.memory_space<vmem>>, vector<1x8x16x96xbf16>
    %5 = vector.shape_cast %4 : vector<1x8x16x96xbf16> to vector<8x16x96xbf16>
    %c3 = arith.constant 3 : index
    %c0_9 = arith.constant 0 : index
    %c0_10 = arith.constant 0 : index
    %c0_11 = arith.constant 0 : index
    %6 = vector.load %arg1[%c3, %c0_9, %c0_10, %c0_11] : memref<4x8x16x96xbf16, #tpu.memory_space<vmem>>, vector<1x8x16x96xbf16>
    %7 = vector.shape_cast %6 : vector<1x8x16x96xbf16> to vector<8x16x96xbf16>
    %c0_12 = arith.constant 0 : index
    %c0_13 = arith.constant 0 : index
    %8 = vector.load %arg3[%c0_12, %c0_13] : memref<1x256xf32, #tpu.memory_space<vmem>>, vector<1x256xf32>
    %c0_14 = arith.constant 0 : index
    %c0_15 = arith.constant 0 : index
    %9 = vector.load %arg5[%c0_14, %c0_15] : memref<1x256xf32, #tpu.memory_space<vmem>>, vector<1x256xf32>
    %10 = vector.extract_strided_slice %1 {offsets = [0, 0, 0], sizes = [7, 16, 96], strides = [1, 1, 1]} : vector<8x16x96xbf16> to vector<7x16x96xbf16>
    %11 = vector.shape_cast %10 : vector<7x16x96xbf16> to vector<112x96xbf16>
    %c0_16 = arith.constant 0 : index
    %c0_17 = arith.constant 0 : index
    %c0_18 = arith.constant 0 : index
    %12 = vector.load %arg2[%c0_16, %c0_17, %c0_18] : memref<5x96x256xbf16, #tpu.memory_space<vmem>>, vector<1x96x256xbf16>
    %13 = vector.shape_cast %12 : vector<1x96x256xbf16> to vector<96x256xbf16>
    %cst = arith.constant dense<0.000000e+00> : vector<112x256xf32>
    %14 = tpu.matmul %11, %13, %cst {dimension_numbers = #tpu.dot_dimension_numbers<[1], [0], [0], [1], [0, 0, 1, 1], [], []>} : vector<112x96xbf16>, vector<96x256xbf16>, vector<112x256xf32> -> vector<112x256xf32>
    %15 = vector.extract_strided_slice %3 {offsets = [0, 0, 0], sizes = [7, 16, 96], strides = [1, 1, 1]} : vector<8x16x96xbf16> to vector<7x16x96xbf16>
    %16 = vector.shape_cast %15 : vector<7x16x96xbf16> to vector<112x96xbf16>
    %c1_19 = arith.constant 1 : index
    %c0_20 = arith.constant 0 : index
    %c0_21 = arith.constant 0 : index
    %17 = vector.load %arg2[%c1_19, %c0_20, %c0_21] : memref<5x96x256xbf16, #tpu.memory_space<vmem>>, vector<1x96x256xbf16>
    %18 = vector.shape_cast %17 : vector<1x96x256xbf16> to vector<96x256xbf16>
    %cst_22 = arith.constant dense<0.000000e+00> : vector<112x256xf32>
    %19 = tpu.matmul %16, %18, %cst_22 {dimension_numbers = #tpu.dot_dimension_numbers<[1], [0], [0], [1], [0, 0, 1, 1], [], []>} : vector<112x96xbf16>, vector<96x256xbf16>, vector<112x256xf32> -> vector<112x256xf32>
    %20 = arith.addf %14, %19 : vector<112x256xf32>
    %21 = vector.extract_strided_slice %5 {offsets = [0, 0, 0], sizes = [7, 16, 96], strides = [1, 1, 1]} : vector<8x16x96xbf16> to vector<7x16x96xbf16>
    %22 = vector.shape_cast %21 : vector<7x16x96xbf16> to vector<112x96xbf16>
    %c2_23 = arith.constant 2 : index
    %c0_24 = arith.constant 0 : index
    %c0_25 = arith.constant 0 : index
    %23 = vector.load %arg2[%c2_23, %c0_24, %c0_25] : memref<5x96x256xbf16, #tpu.memory_space<vmem>>, vector<1x96x256xbf16>
    %24 = vector.shape_cast %23 : vector<1x96x256xbf16> to vector<96x256xbf16>
    %cst_26 = arith.constant dense<0.000000e+00> : vector<112x256xf32>
    %25 = tpu.matmul %22, %24, %cst_26 {dimension_numbers = #tpu.dot_dimension_numbers<[1], [0], [0], [1], [0, 0, 1, 1], [], []>} : vector<112x96xbf16>, vector<96x256xbf16>, vector<112x256xf32> -> vector<112x256xf32>
    %26 = arith.addf %20, %25 : vector<112x256xf32>
    %27 = vector.extract_strided_slice %7 {offsets = [0, 0, 0], sizes = [7, 16, 96], strides = [1, 1, 1]} : vector<8x16x96xbf16> to vector<7x16x96xbf16>
    %28 = vector.shape_cast %27 : vector<7x16x96xbf16> to vector<112x96xbf16>
    %c3_27 = arith.constant 3 : index
    %c0_28 = arith.constant 0 : index
    %c0_29 = arith.constant 0 : index
    %29 = vector.load %arg2[%c3_27, %c0_28, %c0_29] : memref<5x96x256xbf16, #tpu.memory_space<vmem>>, vector<1x96x256xbf16>
    %30 = vector.shape_cast %29 : vector<1x96x256xbf16> to vector<96x256xbf16>
    %cst_30 = arith.constant dense<0.000000e+00> : vector<112x256xf32>
    %31 = tpu.matmul %28, %30, %cst_30 {dimension_numbers = #tpu.dot_dimension_numbers<[1], [0], [0], [1], [0, 0, 1, 1], [], []>} : vector<112x96xbf16>, vector<96x256xbf16>, vector<112x256xf32> -> vector<112x256xf32>
    %32 = arith.addf %26, %31 : vector<112x256xf32>
    %33 = vector.extract_strided_slice %1 {offsets = [1, 0, 0], sizes = [7, 16, 96], strides = [1, 1, 1]} : vector<8x16x96xbf16> to vector<7x16x96xbf16>
    %34 = vector.shape_cast %33 : vector<7x16x96xbf16> to vector<112x96xbf16>
    %c4 = arith.constant 4 : index
    %c0_31 = arith.constant 0 : index
    %c0_32 = arith.constant 0 : index
    %35 = vector.load %arg2[%c4, %c0_31, %c0_32] : memref<5x96x256xbf16, #tpu.memory_space<vmem>>, vector<1x96x256xbf16>
    %36 = vector.shape_cast %35 : vector<1x96x256xbf16> to vector<96x256xbf16>
    %cst_33 = arith.constant dense<0.000000e+00> : vector<112x256xf32>
    %37 = tpu.matmul %34, %36, %cst_33 {dimension_numbers = #tpu.dot_dimension_numbers<[1], [0], [0], [1], [0, 0, 1, 1], [], []>} : vector<112x96xbf16>, vector<96x256xbf16>, vector<112x256xf32> -> vector<112x256xf32>
    %38 = arith.addf %32, %37 : vector<112x256xf32>
    %39 = vector.broadcast %8 : vector<1x256xf32> to vector<112x256xf32>
    %40 = arith.addf %38, %39 : vector<112x256xf32>
    %cst_34 = arith.constant 0.000000e+00 : f32
    %41 = vector.broadcast %cst_34 : f32 to vector<112x256xf32>
    %42 = arith.maximumf %40, %41 : vector<112x256xf32>
    %43 = vector.extract_strided_slice %42 {offsets = [0, 0], sizes = [112, 128], strides = [1, 1]} : vector<112x256xf32> to vector<112x128xf32>
    %44 = vector.extract_strided_slice %42 {offsets = [0, 128], sizes = [112, 128], strides = [1, 1]} : vector<112x256xf32> to vector<112x128xf32>
    %45 = arith.maximumf %43, %44 : vector<112x128xf32>
    %46 = vector.extract_strided_slice %3 {offsets = [0, 0, 0], sizes = [7, 16, 96], strides = [1, 1, 1]} : vector<8x16x96xbf16> to vector<7x16x96xbf16>
    %47 = vector.shape_cast %46 : vector<7x16x96xbf16> to vector<112x96xbf16>
    %c0_35 = arith.constant 0 : index
    %c0_36 = arith.constant 0 : index
    %c0_37 = arith.constant 0 : index
    %48 = vector.load %arg2[%c0_35, %c0_36, %c0_37] : memref<5x96x256xbf16, #tpu.memory_space<vmem>>, vector<1x96x256xbf16>
    %49 = vector.shape_cast %48 : vector<1x96x256xbf16> to vector<96x256xbf16>
    %cst_38 = arith.constant dense<0.000000e+00> : vector<112x256xf32>
    %50 = tpu.matmul %47, %49, %cst_38 {dimension_numbers = #tpu.dot_dimension_numbers<[1], [0], [0], [1], [0, 0, 1, 1], [], []>} : vector<112x96xbf16>, vector<96x256xbf16>, vector<112x256xf32> -> vector<112x256xf32>
    %51 = vector.extract_strided_slice %5 {offsets = [0, 0, 0], sizes = [7, 16, 96], strides = [1, 1, 1]} : vector<8x16x96xbf16> to vector<7x16x96xbf16>
    %52 = vector.shape_cast %51 : vector<7x16x96xbf16> to vector<112x96xbf16>
    %c1_39 = arith.constant 1 : index
    %c0_40 = arith.constant 0 : index
    %c0_41 = arith.constant 0 : index
    %53 = vector.load %arg2[%c1_39, %c0_40, %c0_41] : memref<5x96x256xbf16, #tpu.memory_space<vmem>>, vector<1x96x256xbf16>
    %54 = vector.shape_cast %53 : vector<1x96x256xbf16> to vector<96x256xbf16>
    %cst_42 = arith.constant dense<0.000000e+00> : vector<112x256xf32>
    %55 = tpu.matmul %52, %54, %cst_42 {dimension_numbers = #tpu.dot_dimension_numbers<[1], [0], [0], [1], [0, 0, 1, 1], [], []>} : vector<112x96xbf16>, vector<96x256xbf16>, vector<112x256xf32> -> vector<112x256xf32>
    %56 = arith.addf %50, %55 : vector<112x256xf32>
    %57 = vector.extract_strided_slice %7 {offsets = [0, 0, 0], sizes = [7, 16, 96], strides = [1, 1, 1]} : vector<8x16x96xbf16> to vector<7x16x96xbf16>
    %58 = vector.shape_cast %57 : vector<7x16x96xbf16> to vector<112x96xbf16>
    %c2_43 = arith.constant 2 : index
    %c0_44 = arith.constant 0 : index
    %c0_45 = arith.constant 0 : index
    %59 = vector.load %arg2[%c2_43, %c0_44, %c0_45] : memref<5x96x256xbf16, #tpu.memory_space<vmem>>, vector<1x96x256xbf16>
    %60 = vector.shape_cast %59 : vector<1x96x256xbf16> to vector<96x256xbf16>
    %cst_46 = arith.constant dense<0.000000e+00> : vector<112x256xf32>
    %61 = tpu.matmul %58, %60, %cst_46 {dimension_numbers = #tpu.dot_dimension_numbers<[1], [0], [0], [1], [0, 0, 1, 1], [], []>} : vector<112x96xbf16>, vector<96x256xbf16>, vector<112x256xf32> -> vector<112x256xf32>
    %62 = arith.addf %56, %61 : vector<112x256xf32>
    %63 = vector.extract_strided_slice %1 {offsets = [1, 0, 0], sizes = [7, 16, 96], strides = [1, 1, 1]} : vector<8x16x96xbf16> to vector<7x16x96xbf16>
    %64 = vector.shape_cast %63 : vector<7x16x96xbf16> to vector<112x96xbf16>
    %c3_47 = arith.constant 3 : index
    %c0_48 = arith.constant 0 : index
    %c0_49 = arith.constant 0 : index
    %65 = vector.load %arg2[%c3_47, %c0_48, %c0_49] : memref<5x96x256xbf16, #tpu.memory_space<vmem>>, vector<1x96x256xbf16>
    %66 = vector.shape_cast %65 : vector<1x96x256xbf16> to vector<96x256xbf16>
    %cst_50 = arith.constant dense<0.000000e+00> : vector<112x256xf32>
    %67 = tpu.matmul %64, %66, %cst_50 {dimension_numbers = #tpu.dot_dimension_numbers<[1], [0], [0], [1], [0, 0, 1, 1], [], []>} : vector<112x96xbf16>, vector<96x256xbf16>, vector<112x256xf32> -> vector<112x256xf32>
    %68 = arith.addf %62, %67 : vector<112x256xf32>
    %69 = vector.extract_strided_slice %3 {offsets = [1, 0, 0], sizes = [7, 16, 96], strides = [1, 1, 1]} : vector<8x16x96xbf16> to vector<7x16x96xbf16>
    %70 = vector.shape_cast %69 : vector<7x16x96xbf16> to vector<112x96xbf16>
    %c4_51 = arith.constant 4 : index
    %c0_52 = arith.constant 0 : index
    %c0_53 = arith.constant 0 : index
    %71 = vector.load %arg2[%c4_51, %c0_52, %c0_53] : memref<5x96x256xbf16, #tpu.memory_space<vmem>>, vector<1x96x256xbf16>
    %72 = vector.shape_cast %71 : vector<1x96x256xbf16> to vector<96x256xbf16>
    %cst_54 = arith.constant dense<0.000000e+00> : vector<112x256xf32>
    %73 = tpu.matmul %70, %72, %cst_54 {dimension_numbers = #tpu.dot_dimension_numbers<[1], [0], [0], [1], [0, 0, 1, 1], [], []>} : vector<112x96xbf16>, vector<96x256xbf16>, vector<112x256xf32> -> vector<112x256xf32>
    %74 = arith.addf %68, %73 : vector<112x256xf32>
    %75 = vector.broadcast %8 : vector<1x256xf32> to vector<112x256xf32>
    %76 = arith.addf %74, %75 : vector<112x256xf32>
    %cst_55 = arith.constant 0.000000e+00 : f32
    %77 = vector.broadcast %cst_55 : f32 to vector<112x256xf32>
    %78 = arith.maximumf %76, %77 : vector<112x256xf32>
    %79 = vector.extract_strided_slice %78 {offsets = [0, 0], sizes = [112, 128], strides = [1, 1]} : vector<112x256xf32> to vector<112x128xf32>
    %80 = vector.extract_strided_slice %78 {offsets = [0, 128], sizes = [112, 128], strides = [1, 1]} : vector<112x256xf32> to vector<112x128xf32>
    %81 = arith.maximumf %79, %80 : vector<112x128xf32>
    %82 = arith.maximumf %45, %81 : vector<112x128xf32>
    %83 = vector.shape_cast %82 : vector<112x128xf32> to vector<7x16x128xf32>
    %84 = arith.truncf %83 : vector<7x16x128xf32> to vector<7x16x128xbf16>
    %85 = vector.extract_strided_slice %5 {offsets = [0, 0, 0], sizes = [7, 16, 96], strides = [1, 1, 1]} : vector<8x16x96xbf16> to vector<7x16x96xbf16>
    %86 = vector.shape_cast %85 : vector<7x16x96xbf16> to vector<112x96xbf16>
    %c0_56 = arith.constant 0 : index
    %c0_57 = arith.constant 0 : index
    %c0_58 = arith.constant 0 : index
    %87 = vector.load %arg2[%c0_56, %c0_57, %c0_58] : memref<5x96x256xbf16, #tpu.memory_space<vmem>>, vector<1x96x256xbf16>
    %88 = vector.shape_cast %87 : vector<1x96x256xbf16> to vector<96x256xbf16>
    %cst_59 = arith.constant dense<0.000000e+00> : vector<112x256xf32>
    %89 = tpu.matmul %86, %88, %cst_59 {dimension_numbers = #tpu.dot_dimension_numbers<[1], [0], [0], [1], [0, 0, 1, 1], [], []>} : vector<112x96xbf16>, vector<96x256xbf16>, vector<112x256xf32> -> vector<112x256xf32>
    %90 = vector.extract_strided_slice %7 {offsets = [0, 0, 0], sizes = [7, 16, 96], strides = [1, 1, 1]} : vector<8x16x96xbf16> to vector<7x16x96xbf16>
    %91 = vector.shape_cast %90 : vector<7x16x96xbf16> to vector<112x96xbf16>
    %c1_60 = arith.constant 1 : index
    %c0_61 = arith.constant 0 : index
    %c0_62 = arith.constant 0 : index
    %92 = vector.load %arg2[%c1_60, %c0_61, %c0_62] : memref<5x96x256xbf16, #tpu.memory_space<vmem>>, vector<1x96x256xbf16>
    %93 = vector.shape_cast %92 : vector<1x96x256xbf16> to vector<96x256xbf16>
    %cst_63 = arith.constant dense<0.000000e+00> : vector<112x256xf32>
    %94 = tpu.matmul %91, %93, %cst_63 {dimension_numbers = #tpu.dot_dimension_numbers<[1], [0], [0], [1], [0, 0, 1, 1], [], []>} : vector<112x96xbf16>, vector<96x256xbf16>, vector<112x256xf32> -> vector<112x256xf32>
    %95 = arith.addf %89, %94 : vector<112x256xf32>
    %96 = vector.extract_strided_slice %1 {offsets = [1, 0, 0], sizes = [7, 16, 96], strides = [1, 1, 1]} : vector<8x16x96xbf16> to vector<7x16x96xbf16>
    %97 = vector.shape_cast %96 : vector<7x16x96xbf16> to vector<112x96xbf16>
    %c2_64 = arith.constant 2 : index
    %c0_65 = arith.constant 0 : index
    %c0_66 = arith.constant 0 : index
    %98 = vector.load %arg2[%c2_64, %c0_65, %c0_66] : memref<5x96x256xbf16, #tpu.memory_space<vmem>>, vector<1x96x256xbf16>
    %99 = vector.shape_cast %98 : vector<1x96x256xbf16> to vector<96x256xbf16>
    %cst_67 = arith.constant dense<0.000000e+00> : vector<112x256xf32>
    %100 = tpu.matmul %97, %99, %cst_67 {dimension_numbers = #tpu.dot_dimension_numbers<[1], [0], [0], [1], [0, 0, 1, 1], [], []>} : vector<112x96xbf16>, vector<96x256xbf16>, vector<112x256xf32> -> vector<112x256xf32>
    %101 = arith.addf %95, %100 : vector<112x256xf32>
    %102 = vector.extract_strided_slice %3 {offsets = [1, 0, 0], sizes = [7, 16, 96], strides = [1, 1, 1]} : vector<8x16x96xbf16> to vector<7x16x96xbf16>
    %103 = vector.shape_cast %102 : vector<7x16x96xbf16> to vector<112x96xbf16>
    %c3_68 = arith.constant 3 : index
    %c0_69 = arith.constant 0 : index
    %c0_70 = arith.constant 0 : index
    %104 = vector.load %arg2[%c3_68, %c0_69, %c0_70] : memref<5x96x256xbf16, #tpu.memory_space<vmem>>, vector<1x96x256xbf16>
    %105 = vector.shape_cast %104 : vector<1x96x256xbf16> to vector<96x256xbf16>
    %cst_71 = arith.constant dense<0.000000e+00> : vector<112x256xf32>
    %106 = tpu.matmul %103, %105, %cst_71 {dimension_numbers = #tpu.dot_dimension_numbers<[1], [0], [0], [1], [0, 0, 1, 1], [], []>} : vector<112x96xbf16>, vector<96x256xbf16>, vector<112x256xf32> -> vector<112x256xf32>
    %107 = arith.addf %101, %106 : vector<112x256xf32>
    %108 = vector.extract_strided_slice %5 {offsets = [1, 0, 0], sizes = [7, 16, 96], strides = [1, 1, 1]} : vector<8x16x96xbf16> to vector<7x16x96xbf16>
    %109 = vector.shape_cast %108 : vector<7x16x96xbf16> to vector<112x96xbf16>
    %c4_72 = arith.constant 4 : index
    %c0_73 = arith.constant 0 : index
    %c0_74 = arith.constant 0 : index
    %110 = vector.load %arg2[%c4_72, %c0_73, %c0_74] : memref<5x96x256xbf16, #tpu.memory_space<vmem>>, vector<1x96x256xbf16>
    %111 = vector.shape_cast %110 : vector<1x96x256xbf16> to vector<96x256xbf16>
    %cst_75 = arith.constant dense<0.000000e+00> : vector<112x256xf32>
    %112 = tpu.matmul %109, %111, %cst_75 {dimension_numbers = #tpu.dot_dimension_numbers<[1], [0], [0], [1], [0, 0, 1, 1], [], []>} : vector<112x96xbf16>, vector<96x256xbf16>, vector<112x256xf32> -> vector<112x256xf32>
    %113 = arith.addf %107, %112 : vector<112x256xf32>
    %114 = vector.broadcast %8 : vector<1x256xf32> to vector<112x256xf32>
    %115 = arith.addf %113, %114 : vector<112x256xf32>
    %cst_76 = arith.constant 0.000000e+00 : f32
    %116 = vector.broadcast %cst_76 : f32 to vector<112x256xf32>
    %117 = arith.maximumf %115, %116 : vector<112x256xf32>
    %118 = vector.extract_strided_slice %117 {offsets = [0, 0], sizes = [112, 128], strides = [1, 1]} : vector<112x256xf32> to vector<112x128xf32>
    %119 = vector.extract_strided_slice %117 {offsets = [0, 128], sizes = [112, 128], strides = [1, 1]} : vector<112x256xf32> to vector<112x128xf32>
    %120 = arith.maximumf %118, %119 : vector<112x128xf32>
    %121 = vector.extract_strided_slice %7 {offsets = [0, 0, 0], sizes = [7, 16, 96], strides = [1, 1, 1]} : vector<8x16x96xbf16> to vector<7x16x96xbf16>
    %122 = vector.shape_cast %121 : vector<7x16x96xbf16> to vector<112x96xbf16>
    %c0_77 = arith.constant 0 : index
    %c0_78 = arith.constant 0 : index
    %c0_79 = arith.constant 0 : index
    %123 = vector.load %arg2[%c0_77, %c0_78, %c0_79] : memref<5x96x256xbf16, #tpu.memory_space<vmem>>, vector<1x96x256xbf16>
    %124 = vector.shape_cast %123 : vector<1x96x256xbf16> to vector<96x256xbf16>
    %cst_80 = arith.constant dense<0.000000e+00> : vector<112x256xf32>
    %125 = tpu.matmul %122, %124, %cst_80 {dimension_numbers = #tpu.dot_dimension_numbers<[1], [0], [0], [1], [0, 0, 1, 1], [], []>} : vector<112x96xbf16>, vector<96x256xbf16>, vector<112x256xf32> -> vector<112x256xf32>
    %126 = vector.extract_strided_slice %1 {offsets = [1, 0, 0], sizes = [7, 16, 96], strides = [1, 1, 1]} : vector<8x16x96xbf16> to vector<7x16x96xbf16>
    %127 = vector.shape_cast %126 : vector<7x16x96xbf16> to vector<112x96xbf16>
    %c1_81 = arith.constant 1 : index
    %c0_82 = arith.constant 0 : index
    %c0_83 = arith.constant 0 : index
    %128 = vector.load %arg2[%c1_81, %c0_82, %c0_83] : memref<5x96x256xbf16, #tpu.memory_space<vmem>>, vector<1x96x256xbf16>
    %129 = vector.shape_cast %128 : vector<1x96x256xbf16> to vector<96x256xbf16>
    %cst_84 = arith.constant dense<0.000000e+00> : vector<112x256xf32>
    %130 = tpu.matmul %127, %129, %cst_84 {dimension_numbers = #tpu.dot_dimension_numbers<[1], [0], [0], [1], [0, 0, 1, 1], [], []>} : vector<112x96xbf16>, vector<96x256xbf16>, vector<112x256xf32> -> vector<112x256xf32>
    %131 = arith.addf %125, %130 : vector<112x256xf32>
    %132 = vector.extract_strided_slice %3 {offsets = [1, 0, 0], sizes = [7, 16, 96], strides = [1, 1, 1]} : vector<8x16x96xbf16> to vector<7x16x96xbf16>
    %133 = vector.shape_cast %132 : vector<7x16x96xbf16> to vector<112x96xbf16>
    %c2_85 = arith.constant 2 : index
    %c0_86 = arith.constant 0 : index
    %c0_87 = arith.constant 0 : index
    %134 = vector.load %arg2[%c2_85, %c0_86, %c0_87] : memref<5x96x256xbf16, #tpu.memory_space<vmem>>, vector<1x96x256xbf16>
    %135 = vector.shape_cast %134 : vector<1x96x256xbf16> to vector<96x256xbf16>
    %cst_88 = arith.constant dense<0.000000e+00> : vector<112x256xf32>
    %136 = tpu.matmul %133, %135, %cst_88 {dimension_numbers = #tpu.dot_dimension_numbers<[1], [0], [0], [1], [0, 0, 1, 1], [], []>} : vector<112x96xbf16>, vector<96x256xbf16>, vector<112x256xf32> -> vector<112x256xf32>
    %137 = arith.addf %131, %136 : vector<112x256xf32>
    %138 = vector.extract_strided_slice %5 {offsets = [1, 0, 0], sizes = [7, 16, 96], strides = [1, 1, 1]} : vector<8x16x96xbf16> to vector<7x16x96xbf16>
    %139 = vector.shape_cast %138 : vector<7x16x96xbf16> to vector<112x96xbf16>
    %c3_89 = arith.constant 3 : index
    %c0_90 = arith.constant 0 : index
    %c0_91 = arith.constant 0 : index
    %140 = vector.load %arg2[%c3_89, %c0_90, %c0_91] : memref<5x96x256xbf16, #tpu.memory_space<vmem>>, vector<1x96x256xbf16>
    %141 = vector.shape_cast %140 : vector<1x96x256xbf16> to vector<96x256xbf16>
    %cst_92 = arith.constant dense<0.000000e+00> : vector<112x256xf32>
    %142 = tpu.matmul %139, %141, %cst_92 {dimension_numbers = #tpu.dot_dimension_numbers<[1], [0], [0], [1], [0, 0, 1, 1], [], []>} : vector<112x96xbf16>, vector<96x256xbf16>, vector<112x256xf32> -> vector<112x256xf32>
    %143 = arith.addf %137, %142 : vector<112x256xf32>
    %144 = vector.extract_strided_slice %7 {offsets = [1, 0, 0], sizes = [7, 16, 96], strides = [1, 1, 1]} : vector<8x16x96xbf16> to vector<7x16x96xbf16>
    %145 = vector.shape_cast %144 : vector<7x16x96xbf16> to vector<112x96xbf16>
    %c4_93 = arith.constant 4 : index
    %c0_94 = arith.constant 0 : index
    %c0_95 = arith.constant 0 : index
    %146 = vector.load %arg2[%c4_93, %c0_94, %c0_95] : memref<5x96x256xbf16, #tpu.memory_space<vmem>>, vector<1x96x256xbf16>
    %147 = vector.shape_cast %146 : vector<1x96x256xbf16> to vector<96x256xbf16>
    %cst_96 = arith.constant dense<0.000000e+00> : vector<112x256xf32>
    %148 = tpu.matmul %145, %147, %cst_96 {dimension_numbers = #tpu.dot_dimension_numbers<[1], [0], [0], [1], [0, 0, 1, 1], [], []>} : vector<112x96xbf16>, vector<96x256xbf16>, vector<112x256xf32> -> vector<112x256xf32>
    %149 = arith.addf %143, %148 : vector<112x256xf32>
    %150 = vector.broadcast %8 : vector<1x256xf32> to vector<112x256xf32>
    %151 = arith.addf %149, %150 : vector<112x256xf32>
    %cst_97 = arith.constant 0.000000e+00 : f32
    %152 = vector.broadcast %cst_97 : f32 to vector<112x256xf32>
    %153 = arith.maximumf %151, %152 : vector<112x256xf32>
    %154 = vector.extract_strided_slice %153 {offsets = [0, 0], sizes = [112, 128], strides = [1, 1]} : vector<112x256xf32> to vector<112x128xf32>
    %155 = vector.extract_strided_slice %153 {offsets = [0, 128], sizes = [112, 128], strides = [1, 1]} : vector<112x256xf32> to vector<112x128xf32>
    %156 = arith.maximumf %154, %155 : vector<112x128xf32>
    %157 = arith.maximumf %120, %156 : vector<112x128xf32>
    %158 = vector.shape_cast %157 : vector<112x128xf32> to vector<7x16x128xf32>
    %159 = arith.truncf %158 : vector<7x16x128xf32> to vector<7x16x128xbf16>
    %160 = vector.extract_strided_slice %84 {offsets = [0, 0, 0], sizes = [5, 16, 128], strides = [1, 1, 1]} : vector<7x16x128xbf16> to vector<5x16x128xbf16>
    %161 = vector.shape_cast %160 : vector<5x16x128xbf16> to vector<80x128xbf16>
    %c0_98 = arith.constant 0 : index
    %c0_99 = arith.constant 0 : index
    %c0_100 = arith.constant 0 : index
    %162 = vector.load %arg4[%c0_98, %c0_99, %c0_100] : memref<5x128x256xbf16, #tpu.memory_space<vmem>>, vector<1x128x256xbf16>
    %163 = vector.shape_cast %162 : vector<1x128x256xbf16> to vector<128x256xbf16>
    %cst_101 = arith.constant dense<0.000000e+00> : vector<80x256xf32>
    %164 = tpu.matmul %161, %163, %cst_101 {dimension_numbers = #tpu.dot_dimension_numbers<[1], [0], [0], [1], [0, 0, 1, 1], [], []>} : vector<80x128xbf16>, vector<128x256xbf16>, vector<80x256xf32> -> vector<80x256xf32>
    %165 = vector.extract_strided_slice %159 {offsets = [0, 0, 0], sizes = [5, 16, 128], strides = [1, 1, 1]} : vector<7x16x128xbf16> to vector<5x16x128xbf16>
    %166 = vector.shape_cast %165 : vector<5x16x128xbf16> to vector<80x128xbf16>
    %c1_102 = arith.constant 1 : index
    %c0_103 = arith.constant 0 : index
    %c0_104 = arith.constant 0 : index
    %167 = vector.load %arg4[%c1_102, %c0_103, %c0_104] : memref<5x128x256xbf16, #tpu.memory_space<vmem>>, vector<1x128x256xbf16>
    %168 = vector.shape_cast %167 : vector<1x128x256xbf16> to vector<128x256xbf16>
    %cst_105 = arith.constant dense<0.000000e+00> : vector<80x256xf32>
    %169 = tpu.matmul %166, %168, %cst_105 {dimension_numbers = #tpu.dot_dimension_numbers<[1], [0], [0], [1], [0, 0, 1, 1], [], []>} : vector<80x128xbf16>, vector<128x256xbf16>, vector<80x256xf32> -> vector<80x256xf32>
    %170 = arith.addf %164, %169 : vector<80x256xf32>
    %171 = vector.extract_strided_slice %84 {offsets = [1, 0, 0], sizes = [5, 16, 128], strides = [1, 1, 1]} : vector<7x16x128xbf16> to vector<5x16x128xbf16>
    %172 = vector.shape_cast %171 : vector<5x16x128xbf16> to vector<80x128xbf16>
    %c2_106 = arith.constant 2 : index
    %c0_107 = arith.constant 0 : index
    %c0_108 = arith.constant 0 : index
    %173 = vector.load %arg4[%c2_106, %c0_107, %c0_108] : memref<5x128x256xbf16, #tpu.memory_space<vmem>>, vector<1x128x256xbf16>
    %174 = vector.shape_cast %173 : vector<1x128x256xbf16> to vector<128x256xbf16>
    %cst_109 = arith.constant dense<0.000000e+00> : vector<80x256xf32>
    %175 = tpu.matmul %172, %174, %cst_109 {dimension_numbers = #tpu.dot_dimension_numbers<[1], [0], [0], [1], [0, 0, 1, 1], [], []>} : vector<80x128xbf16>, vector<128x256xbf16>, vector<80x256xf32> -> vector<80x256xf32>
    %176 = arith.addf %170, %175 : vector<80x256xf32>
    %177 = vector.extract_strided_slice %159 {offsets = [1, 0, 0], sizes = [5, 16, 128], strides = [1, 1, 1]} : vector<7x16x128xbf16> to vector<5x16x128xbf16>
    %178 = vector.shape_cast %177 : vector<5x16x128xbf16> to vector<80x128xbf16>
    %c3_110 = arith.constant 3 : index
    %c0_111 = arith.constant 0 : index
    %c0_112 = arith.constant 0 : index
    %179 = vector.load %arg4[%c3_110, %c0_111, %c0_112] : memref<5x128x256xbf16, #tpu.memory_space<vmem>>, vector<1x128x256xbf16>
    %180 = vector.shape_cast %179 : vector<1x128x256xbf16> to vector<128x256xbf16>
    %cst_113 = arith.constant dense<0.000000e+00> : vector<80x256xf32>
    %181 = tpu.matmul %178, %180, %cst_113 {dimension_numbers = #tpu.dot_dimension_numbers<[1], [0], [0], [1], [0, 0, 1, 1], [], []>} : vector<80x128xbf16>, vector<128x256xbf16>, vector<80x256xf32> -> vector<80x256xf32>
    %182 = arith.addf %176, %181 : vector<80x256xf32>
    %183 = vector.extract_strided_slice %84 {offsets = [2, 0, 0], sizes = [5, 16, 128], strides = [1, 1, 1]} : vector<7x16x128xbf16> to vector<5x16x128xbf16>
    %184 = vector.shape_cast %183 : vector<5x16x128xbf16> to vector<80x128xbf16>
    %c4_114 = arith.constant 4 : index
    %c0_115 = arith.constant 0 : index
    %c0_116 = arith.constant 0 : index
    %185 = vector.load %arg4[%c4_114, %c0_115, %c0_116] : memref<5x128x256xbf16, #tpu.memory_space<vmem>>, vector<1x128x256xbf16>
    %186 = vector.shape_cast %185 : vector<1x128x256xbf16> to vector<128x256xbf16>
    %cst_117 = arith.constant dense<0.000000e+00> : vector<80x256xf32>
    %187 = tpu.matmul %184, %186, %cst_117 {dimension_numbers = #tpu.dot_dimension_numbers<[1], [0], [0], [1], [0, 0, 1, 1], [], []>} : vector<80x128xbf16>, vector<128x256xbf16>, vector<80x256xf32> -> vector<80x256xf32>
    %188 = arith.addf %182, %187 : vector<80x256xf32>
    %189 = vector.broadcast %9 : vector<1x256xf32> to vector<80x256xf32>
    %190 = arith.addf %188, %189 : vector<80x256xf32>
    %cst_118 = arith.constant 0.000000e+00 : f32
    %191 = vector.broadcast %cst_118 : f32 to vector<80x256xf32>
    %192 = arith.maximumf %190, %191 : vector<80x256xf32>
    %193 = vector.extract_strided_slice %192 {offsets = [0, 0], sizes = [80, 128], strides = [1, 1]} : vector<80x256xf32> to vector<80x128xf32>
    %194 = vector.extract_strided_slice %192 {offsets = [0, 128], sizes = [80, 128], strides = [1, 1]} : vector<80x256xf32> to vector<80x128xf32>
    %195 = arith.maximumf %193, %194 : vector<80x128xf32>
    %196 = vector.extract_strided_slice %159 {offsets = [0, 0, 0], sizes = [5, 16, 128], strides = [1, 1, 1]} : vector<7x16x128xbf16> to vector<5x16x128xbf16>
    %197 = vector.shape_cast %196 : vector<5x16x128xbf16> to vector<80x128xbf16>
    %c0_119 = arith.constant 0 : index
    %c0_120 = arith.constant 0 : index
    %c0_121 = arith.constant 0 : index
    %198 = vector.load %arg4[%c0_119, %c0_120, %c0_121] : memref<5x128x256xbf16, #tpu.memory_space<vmem>>, vector<1x128x256xbf16>
    %199 = vector.shape_cast %198 : vector<1x128x256xbf16> to vector<128x256xbf16>
    %cst_122 = arith.constant dense<0.000000e+00> : vector<80x256xf32>
    %200 = tpu.matmul %197, %199, %cst_122 {dimension_numbers = #tpu.dot_dimension_numbers<[1], [0], [0], [1], [0, 0, 1, 1], [], []>} : vector<80x128xbf16>, vector<128x256xbf16>, vector<80x256xf32> -> vector<80x256xf32>
    %201 = vector.extract_strided_slice %84 {offsets = [1, 0, 0], sizes = [5, 16, 128], strides = [1, 1, 1]} : vector<7x16x128xbf16> to vector<5x16x128xbf16>
    %202 = vector.shape_cast %201 : vector<5x16x128xbf16> to vector<80x128xbf16>
    %c1_123 = arith.constant 1 : index
    %c0_124 = arith.constant 0 : index
    %c0_125 = arith.constant 0 : index
    %203 = vector.load %arg4[%c1_123, %c0_124, %c0_125] : memref<5x128x256xbf16, #tpu.memory_space<vmem>>, vector<1x128x256xbf16>
    %204 = vector.shape_cast %203 : vector<1x128x256xbf16> to vector<128x256xbf16>
    %cst_126 = arith.constant dense<0.000000e+00> : vector<80x256xf32>
    %205 = tpu.matmul %202, %204, %cst_126 {dimension_numbers = #tpu.dot_dimension_numbers<[1], [0], [0], [1], [0, 0, 1, 1], [], []>} : vector<80x128xbf16>, vector<128x256xbf16>, vector<80x256xf32> -> vector<80x256xf32>
    %206 = arith.addf %200, %205 : vector<80x256xf32>
    %207 = vector.extract_strided_slice %159 {offsets = [1, 0, 0], sizes = [5, 16, 128], strides = [1, 1, 1]} : vector<7x16x128xbf16> to vector<5x16x128xbf16>
    %208 = vector.shape_cast %207 : vector<5x16x128xbf16> to vector<80x128xbf16>
    %c2_127 = arith.constant 2 : index
    %c0_128 = arith.constant 0 : index
    %c0_129 = arith.constant 0 : index
    %209 = vector.load %arg4[%c2_127, %c0_128, %c0_129] : memref<5x128x256xbf16, #tpu.memory_space<vmem>>, vector<1x128x256xbf16>
    %210 = vector.shape_cast %209 : vector<1x128x256xbf16> to vector<128x256xbf16>
    %cst_130 = arith.constant dense<0.000000e+00> : vector<80x256xf32>
    %211 = tpu.matmul %208, %210, %cst_130 {dimension_numbers = #tpu.dot_dimension_numbers<[1], [0], [0], [1], [0, 0, 1, 1], [], []>} : vector<80x128xbf16>, vector<128x256xbf16>, vector<80x256xf32> -> vector<80x256xf32>
    %212 = arith.addf %206, %211 : vector<80x256xf32>
    %213 = vector.extract_strided_slice %84 {offsets = [2, 0, 0], sizes = [5, 16, 128], strides = [1, 1, 1]} : vector<7x16x128xbf16> to vector<5x16x128xbf16>
    %214 = vector.shape_cast %213 : vector<5x16x128xbf16> to vector<80x128xbf16>
    %c3_131 = arith.constant 3 : index
    %c0_132 = arith.constant 0 : index
    %c0_133 = arith.constant 0 : index
    %215 = vector.load %arg4[%c3_131, %c0_132, %c0_133] : memref<5x128x256xbf16, #tpu.memory_space<vmem>>, vector<1x128x256xbf16>
    %216 = vector.shape_cast %215 : vector<1x128x256xbf16> to vector<128x256xbf16>
    %cst_134 = arith.constant dense<0.000000e+00> : vector<80x256xf32>
    %217 = tpu.matmul %214, %216, %cst_134 {dimension_numbers = #tpu.dot_dimension_numbers<[1], [0], [0], [1], [0, 0, 1, 1], [], []>} : vector<80x128xbf16>, vector<128x256xbf16>, vector<80x256xf32> -> vector<80x256xf32>
    %218 = arith.addf %212, %217 : vector<80x256xf32>
    %219 = vector.extract_strided_slice %159 {offsets = [2, 0, 0], sizes = [5, 16, 128], strides = [1, 1, 1]} : vector<7x16x128xbf16> to vector<5x16x128xbf16>
    %220 = vector.shape_cast %219 : vector<5x16x128xbf16> to vector<80x128xbf16>
    %c4_135 = arith.constant 4 : index
    %c0_136 = arith.constant 0 : index
    %c0_137 = arith.constant 0 : index
    %221 = vector.load %arg4[%c4_135, %c0_136, %c0_137] : memref<5x128x256xbf16, #tpu.memory_space<vmem>>, vector<1x128x256xbf16>
    %222 = vector.shape_cast %221 : vector<1x128x256xbf16> to vector<128x256xbf16>
    %cst_138 = arith.constant dense<0.000000e+00> : vector<80x256xf32>
    %223 = tpu.matmul %220, %222, %cst_138 {dimension_numbers = #tpu.dot_dimension_numbers<[1], [0], [0], [1], [0, 0, 1, 1], [], []>} : vector<80x128xbf16>, vector<128x256xbf16>, vector<80x256xf32> -> vector<80x256xf32>
    %224 = arith.addf %218, %223 : vector<80x256xf32>
    %225 = vector.broadcast %9 : vector<1x256xf32> to vector<80x256xf32>
    %226 = arith.addf %224, %225 : vector<80x256xf32>
    %cst_139 = arith.constant 0.000000e+00 : f32
    %227 = vector.broadcast %cst_139 : f32 to vector<80x256xf32>
    %228 = arith.maximumf %226, %227 : vector<80x256xf32>
    %229 = vector.extract_strided_slice %228 {offsets = [0, 0], sizes = [80, 128], strides = [1, 1]} : vector<80x256xf32> to vector<80x128xf32>
    %230 = vector.extract_strided_slice %228 {offsets = [0, 128], sizes = [80, 128], strides = [1, 1]} : vector<80x256xf32> to vector<80x128xf32>
    %231 = arith.maximumf %229, %230 : vector<80x128xf32>
    %232 = arith.maximumf %195, %231 : vector<80x128xf32>
    %233 = vector.shape_cast %232 : vector<80x128xf32> to vector<5x16x128xf32>
    %234 = arith.truncf %233 : vector<5x16x128xf32> to vector<5x16x128xbf16>
    %235 = vector.extract_strided_slice %234 {offsets = [0, 0, 0], sizes = [1, 16, 128], strides = [1, 1, 1]} : vector<5x16x128xbf16> to vector<1x16x128xbf16>
    %236 = vector.shape_cast %235 : vector<1x16x128xbf16> to vector<16x128xbf16>
    %c0_140 = arith.constant 0 : index
    %c0_141 = arith.constant 0 : index
    %c0_142 = arith.constant 0 : index
    %237 = vector.load %arg6[%c0_140, %c0_141, %c0_142] : memref<5x128x120xbf16, #tpu.memory_space<vmem>>, vector<1x128x120xbf16>
    %238 = vector.shape_cast %237 : vector<1x128x120xbf16> to vector<128x120xbf16>
    %cst_143 = arith.constant dense<0.000000e+00> : vector<16x120xf32>
    %239 = tpu.matmul %236, %238, %cst_143 {dimension_numbers = #tpu.dot_dimension_numbers<[1], [0], [0], [1], [0, 0, 1, 1], [], []>} : vector<16x128xbf16>, vector<128x120xbf16>, vector<16x120xf32> -> vector<16x120xf32>
    %240 = vector.extract_strided_slice %234 {offsets = [1, 0, 0], sizes = [1, 16, 128], strides = [1, 1, 1]} : vector<5x16x128xbf16> to vector<1x16x128xbf16>
    %241 = vector.shape_cast %240 : vector<1x16x128xbf16> to vector<16x128xbf16>
    %c1_144 = arith.constant 1 : index
    %c0_145 = arith.constant 0 : index
    %c0_146 = arith.constant 0 : index
    %242 = vector.load %arg6[%c1_144, %c0_145, %c0_146] : memref<5x128x120xbf16, #tpu.memory_space<vmem>>, vector<1x128x120xbf16>
    %243 = vector.shape_cast %242 : vector<1x128x120xbf16> to vector<128x120xbf16>
    %cst_147 = arith.constant dense<0.000000e+00> : vector<16x120xf32>
    %244 = tpu.matmul %241, %243, %cst_147 {dimension_numbers = #tpu.dot_dimension_numbers<[1], [0], [0], [1], [0, 0, 1, 1], [], []>} : vector<16x128xbf16>, vector<128x120xbf16>, vector<16x120xf32> -> vector<16x120xf32>
    %245 = arith.addf %239, %244 : vector<16x120xf32>
    %246 = vector.extract_strided_slice %234 {offsets = [2, 0, 0], sizes = [1, 16, 128], strides = [1, 1, 1]} : vector<5x16x128xbf16> to vector<1x16x128xbf16>
    %247 = vector.shape_cast %246 : vector<1x16x128xbf16> to vector<16x128xbf16>
    %c2_148 = arith.constant 2 : index
    %c0_149 = arith.constant 0 : index
    %c0_150 = arith.constant 0 : index
    %248 = vector.load %arg6[%c2_148, %c0_149, %c0_150] : memref<5x128x120xbf16, #tpu.memory_space<vmem>>, vector<1x128x120xbf16>
    %249 = vector.shape_cast %248 : vector<1x128x120xbf16> to vector<128x120xbf16>
    %cst_151 = arith.constant dense<0.000000e+00> : vector<16x120xf32>
    %250 = tpu.matmul %247, %249, %cst_151 {dimension_numbers = #tpu.dot_dimension_numbers<[1], [0], [0], [1], [0, 0, 1, 1], [], []>} : vector<16x128xbf16>, vector<128x120xbf16>, vector<16x120xf32> -> vector<16x120xf32>
    %251 = arith.addf %245, %250 : vector<16x120xf32>
    %252 = vector.extract_strided_slice %234 {offsets = [3, 0, 0], sizes = [1, 16, 128], strides = [1, 1, 1]} : vector<5x16x128xbf16> to vector<1x16x128xbf16>
    %253 = vector.shape_cast %252 : vector<1x16x128xbf16> to vector<16x128xbf16>
    %c3_152 = arith.constant 3 : index
    %c0_153 = arith.constant 0 : index
    %c0_154 = arith.constant 0 : index
    %254 = vector.load %arg6[%c3_152, %c0_153, %c0_154] : memref<5x128x120xbf16, #tpu.memory_space<vmem>>, vector<1x128x120xbf16>
    %255 = vector.shape_cast %254 : vector<1x128x120xbf16> to vector<128x120xbf16>
    %cst_155 = arith.constant dense<0.000000e+00> : vector<16x120xf32>
    %256 = tpu.matmul %253, %255, %cst_155 {dimension_numbers = #tpu.dot_dimension_numbers<[1], [0], [0], [1], [0, 0, 1, 1], [], []>} : vector<16x128xbf16>, vector<128x120xbf16>, vector<16x120xf32> -> vector<16x120xf32>
    %257 = arith.addf %251, %256 : vector<16x120xf32>
    %258 = vector.extract_strided_slice %234 {offsets = [4, 0, 0], sizes = [1, 16, 128], strides = [1, 1, 1]} : vector<5x16x128xbf16> to vector<1x16x128xbf16>
    %259 = vector.shape_cast %258 : vector<1x16x128xbf16> to vector<16x128xbf16>
    %c4_156 = arith.constant 4 : index
    %c0_157 = arith.constant 0 : index
    %c0_158 = arith.constant 0 : index
    %260 = vector.load %arg6[%c4_156, %c0_157, %c0_158] : memref<5x128x120xbf16, #tpu.memory_space<vmem>>, vector<1x128x120xbf16>
    %261 = vector.shape_cast %260 : vector<1x128x120xbf16> to vector<128x120xbf16>
    %cst_159 = arith.constant dense<0.000000e+00> : vector<16x120xf32>
    %262 = tpu.matmul %259, %261, %cst_159 {dimension_numbers = #tpu.dot_dimension_numbers<[1], [0], [0], [1], [0, 0, 1, 1], [], []>} : vector<16x128xbf16>, vector<128x120xbf16>, vector<16x120xf32> -> vector<16x120xf32>
    %263 = arith.addf %257, %262 : vector<16x120xf32>
    %c0_160 = arith.constant 0 : index
    %c0_161 = arith.constant 0 : index
    %264 = vector.load %arg7[%c0_160, %c0_161] : memref<1x120xf32, #tpu.memory_space<vmem>>, vector<1x120xf32>
    %265 = vector.broadcast %264 : vector<1x120xf32> to vector<16x120xf32>
    %266 = arith.addf %263, %265 : vector<16x120xf32>
    %cst_162 = arith.constant 0.000000e+00 : f32
    %267 = vector.broadcast %cst_162 : f32 to vector<16x120xf32>
    %268 = arith.maximumf %266, %267 : vector<16x120xf32>
    %269 = arith.truncf %268 : vector<16x120xf32> to vector<16x120xbf16>
    %c0_163 = arith.constant 0 : index
    %c0_164 = arith.constant 0 : index
    %270 = vector.load %arg8[%c0_163, %c0_164] : memref<120x84xbf16, #tpu.memory_space<vmem>>, vector<120x84xbf16>
    %cst_165 = arith.constant dense<0.000000e+00> : vector<16x84xf32>
    %271 = tpu.matmul %269, %270, %cst_165 {dimension_numbers = #tpu.dot_dimension_numbers<[1], [0], [0], [1], [0, 0, 1, 1], [], []>} : vector<16x120xbf16>, vector<120x84xbf16>, vector<16x84xf32> -> vector<16x84xf32>
    %c0_166 = arith.constant 0 : index
    %c0_167 = arith.constant 0 : index
    %272 = vector.load %arg9[%c0_166, %c0_167] : memref<1x84xf32, #tpu.memory_space<vmem>>, vector<1x84xf32>
    %273 = vector.broadcast %272 : vector<1x84xf32> to vector<16x84xf32>
    %274 = arith.addf %271, %273 : vector<16x84xf32>
    %cst_168 = arith.constant 0.000000e+00 : f32
    %275 = vector.broadcast %cst_168 : f32 to vector<16x84xf32>
    %276 = arith.maximumf %274, %275 : vector<16x84xf32>
    %277 = arith.truncf %276 : vector<16x84xf32> to vector<16x84xbf16>
    %c0_169 = arith.constant 0 : index
    %c0_170 = arith.constant 0 : index
    %278 = vector.load %arg10[%c0_169, %c0_170] : memref<84x128xbf16, #tpu.memory_space<vmem>>, vector<84x128xbf16>
    %cst_171 = arith.constant dense<0.000000e+00> : vector<16x128xf32>
    %279 = tpu.matmul %277, %278, %cst_171 {dimension_numbers = #tpu.dot_dimension_numbers<[1], [0], [0], [1], [0, 0, 1, 1], [], []>} : vector<16x84xbf16>, vector<84x128xbf16>, vector<16x128xf32> -> vector<16x128xf32>
    %c0_172 = arith.constant 0 : index
    %c0_173 = arith.constant 0 : index
    %280 = vector.load %arg11[%c0_172, %c0_173] : memref<1x128xf32, #tpu.memory_space<vmem>>, vector<1x128xf32>
    %281 = vector.broadcast %280 : vector<1x128xf32> to vector<16x128xf32>
    %282 = arith.addf %279, %281 : vector<16x128xf32>
    %c0_174 = arith.constant 0 : index
    %c0_175 = arith.constant 0 : index
    %283 = vector.load %arg12[%c0_174, %c0_175] : memref<16x128xf32, #tpu.memory_space<vmem>>, vector<16x128xf32>
    tpu.vector_store %arg12[%c0_174, %c0_175], %282 {strides = array<i32>} : memref<16x128xf32, #tpu.memory_space<vmem>>, vector<16x128xf32>,
    return
  }
  func.func @transform_0(%arg0: i32) -> (i32, i32, i32, i32) {
    %c0_i32 = arith.constant 0 : i32
    %c0_i32_0 = arith.constant 0 : i32
    %c0_i32_1 = arith.constant 0 : i32
    %c0_i32_2 = arith.constant 0 : i32
    return %c0_i32, %c0_i32_0, %arg0, %c0_i32_1 : i32, i32, i32, i32
  }
  func.func @transform_1(%arg0: i32) -> (i32, i32, i32) {
    %c0_i32 = arith.constant 0 : i32
    %c0_i32_0 = arith.constant 0 : i32
    %c0_i32_1 = arith.constant 0 : i32
    %c0_i32_2 = arith.constant 0 : i32
    return %c0_i32, %c0_i32_0, %c0_i32_1 : i32, i32, i32
  }
  func.func @transform_2(%arg0: i32) -> (i32, i32) {
    %c0_i32 = arith.constant 0 : i32
    %c0_i32_0 = arith.constant 0 : i32
    %c0_i32_1 = arith.constant 0 : i32
    return %c0_i32, %c0_i32_0 : i32, i32
  }
  func.func @transform_3(%arg0: i32) -> (i32, i32, i32) {
    %c0_i32 = arith.constant 0 : i32
    %c0_i32_0 = arith.constant 0 : i32
    %c0_i32_1 = arith.constant 0 : i32
    %c0_i32_2 = arith.constant 0 : i32
    return %c0_i32, %c0_i32_0, %c0_i32_1 : i32, i32, i32
  }
  func.func @transform_4(%arg0: i32) -> (i32, i32) {
    %c0_i32 = arith.constant 0 : i32
    %c0_i32_0 = arith.constant 0 : i32
    %c0_i32_1 = arith.constant 0 : i32
    return %c0_i32, %c0_i32_0 : i32, i32
  }
  func.func @transform_5(%arg0: i32) -> (i32, i32, i32) {
    %c0_i32 = arith.constant 0 : i32
    %c0_i32_0 = arith.constant 0 : i32
    %c0_i32_1 = arith.constant 0 : i32
    %c0_i32_2 = arith.constant 0 : i32
    return %c0_i32, %c0_i32_0, %c0_i32_1 : i32, i32, i32
  }
  func.func @transform_6(%arg0: i32) -> (i32, i32) {
    %c0_i32 = arith.constant 0 : i32
    %c0_i32_0 = arith.constant 0 : i32
    %c0_i32_1 = arith.constant 0 : i32
    return %c0_i32, %c0_i32_0 : i32, i32
  }
  func.func @transform_7(%arg0: i32) -> (i32, i32) {
    %c0_i32 = arith.constant 0 : i32
    %c0_i32_0 = arith.constant 0 : i32
    %c0_i32_1 = arith.constant 0 : i32
    return %c0_i32, %c0_i32_0 : i32, i32
  }
  func.func @transform_8(%arg0: i32) -> (i32, i32) {
    %c0_i32 = arith.constant 0 : i32
    %c0_i32_0 = arith.constant 0 : i32
    %c0_i32_1 = arith.constant 0 : i32
    return %c0_i32, %c0_i32_0 : i32, i32
  }
  func.func @transform_9(%arg0: i32) -> (i32, i32) {
    %c0_i32 = arith.constant 0 : i32
    %c0_i32_0 = arith.constant 0 : i32
    %c0_i32_1 = arith.constant 0 : i32
    return %c0_i32, %c0_i32_0 : i32, i32
  }
  func.func @transform_10(%arg0: i32) -> (i32, i32) {
    %c0_i32 = arith.constant 0 : i32
    %c0_i32_0 = arith.constant 0 : i32
    %c0_i32_1 = arith.constant 0 : i32
    return %c0_i32, %c0_i32_0 : i32, i32
  }
  func.func @transform_11(%arg0: i32) -> (i32, i32) {
    %c0_i32 = arith.constant 0 : i32
    %c0_i32_0 = arith.constant 0 : i32
    return %arg0, %c0_i32 : i32, i32
  }
}

</mosaic_0001>

<llo_original>
// kernel: tile.13
$region0: #{tile.13}
  #allocation0 [shape = 's32[1]{0}', space=sflag, size = 0x4, scoped, tag = 'scoped memory for tile.13']
  %s0 = inlined_call_operand.vmem [shape: f32[6], index: 0, kind: input, shape index: {}]
  %s1 = inlined_call_operand.vmem [shape: f32[14,6], index: 1, kind: output, shape index: {}]
  // Predicated region
  $region2: #{tile.13} parent=0 // pred_check
    _
  $region3: #{tile.13} parent=0 // pred_check_branch
    %3 = sbr.rel (0) target = $region5
  $region4: #{tile.13} parent=0 // pred_region
    _
  $region5: #{tile.13} parent=0 // pred_fallthru
    _
  %v4 = vld [vmem:[%s0] ss:$0 sm:$0xff]
  %5 = vst [vmem:[%s1] sm:$0xff] %v4
  %s6 = scalar_lea.vmem %s1, 8
  %7 = vst [vmem:[%s6] sm:$0xff] %v4

// kernel: tile.14
$region0: #{tile.14}
  %s0 = inlined_call_operand.vmem [shape: f32[14,6], index: 0, kind: input, shape index: {}]
  %s1 = inlined_call_operand.vmem [shape: f32[84], index: 1, kind: output, shape index: {}]
  $region1: #{tile.14} parent=0
    #allocation0 [shape = 'u8[4096]{0}', space=vmem, size = 0x1000, scoped, tag = 'scoped mem for output reshape']
    %v2 = vld [vmem:[%s0] sm:$0x1]
    %vm3 = vcmask 48128
    %4 = vst.msk [vmem:[#allocation0] sm:$0x1] %vm3, %v2
    %s5 = scalar_lea.vmem %s0, 13
    %v6 = vld [vmem:[%s5] sm:$0x1]
    %7 = vrot.lane.b32.xlu0 %v6, 78
    %v8 = vpop.permute.xlu0 %7
    %vm9 = vcmask 687728
    %10 = vst.msk [vmem:[#allocation0] sm:$0x1] %vm9, %v8
    %s11 = scalar_lea.vmem %s0, 12
    %v12 = vld [vmem:[%s11] sm:$0x1]
    %13 = vrot.lane.b32.xlu0 %v12, 72
    %v14 = vpop.permute.xlu0 %13
    %vm15 = vcmask 638528
    %16 = vst.msk [vmem:[#allocation0] sm:$0x1] %vm15, %v14
    %s17 = scalar_lea.vmem %s0, 11
    %v18 = vld [vmem:[%s17] sm:$0x1]
    %19 = vrot.lane.b32.xlu0 %v18, 66
    %v20 = vpop.permute.xlu0 %19
    %vm21 = vcmask 589328
    %22 = vst.msk [vmem:[#allocation0] sm:$0x1] %vm21, %v20
    %s23 = scalar_lea.vmem %s0, 10
    %v24 = vld [vmem:[%s23] sm:$0x1]
    %25 = vrot.lane.b32.xlu0 %v24, 60
    %v26 = vpop.permute.xlu0 %25
    %vm27 = vcmask 540128
    %28 = vst.msk [vmem:[#allocation0] sm:$0x1] %vm27, %v26
    %s29 = scalar_lea.vmem %s0, 9
    %v30 = vld [vmem:[%s29] sm:$0x1]
    %31 = vrot.lane.b32.xlu0 %v30, 54
    %v32 = vpop.permute.xlu0 %31
    %vm33 = vcmask 490928
    %34 = vst.msk [vmem:[#allocation0] sm:$0x1] %vm33, %v32
    %s35 = scalar_lea.vmem %s0, 8
    %v36 = vld [vmem:[%s35] sm:$0x1]
    %37 = vrot.lane.b32.xlu0 %v36, 48
    %v38 = vpop.permute.xlu0 %37
    %vm39 = vcmask 441728
    %40 = vst.msk [vmem:[#allocation0] sm:$0x1] %vm39, %v38
    %s41 = scalar_lea.vmem %s0, 7
    %v42 = vld [vmem:[%s41] sm:$0x1]
    %43 = vrot.lane.b32.xlu0 %v42, 42
    %v44 = vpop.permute.xlu0 %43
    %vm45 = vcmask 392528
    %46 = vst.msk [vmem:[#allocation0] sm:$0x1] %vm45, %v44
    %s47 = scalar_lea.vmem %s0, 6
    %v48 = vld [vmem:[%s47] sm:$0x1]
    %49 = vrot.lane.b32.xlu0 %v48, 36
    %v50 = vpop.permute.xlu0 %49
    %vm51 = vcmask 343328
    %52 = vst.msk [vmem:[#allocation0] sm:$0x1] %vm51, %v50
    %s53 = scalar_lea.vmem %s0, 5
    %v54 = vld [vmem:[%s53] sm:$0x1]
    %55 = vrot.lane.b32.xlu0 %v54, 30
    %v56 = vpop.permute.xlu0 %55
    %vm57 = vcmask 294128
    %58 = vst.msk [vmem:[#allocation0] sm:$0x1] %vm57, %v56
    %s59 = scalar_lea.vmem %s0, 4
    %v60 = vld [vmem:[%s59] sm:$0x1]
    %61 = vrot.lane.b32.xlu0 %v60, 24
    %v62 = vpop.permute.xlu0 %61
    %vm63 = vcmask 244928
    %64 = vst.msk [vmem:[#allocation0] sm:$0x1] %vm63, %v62
    %s65 = scalar_lea.vmem %s0, 3
    %v66 = vld [vmem:[%s65] sm:$0x1]
    %67 = vrot.lane.b32.xlu0 %v66, 18
    %v68 = vpop.permute.xlu0 %67
    %vm69 = vcmask 195728
    %70 = vst.msk [vmem:[#allocation0] sm:$0x1] %vm69, %v68
    %s71 = scalar_lea.vmem %s0, 2
    %v72 = vld [vmem:[%s71] sm:$0x1]
    %73 = vrot.lane.b32.xlu0 %v72, 12
    %v74 = vpop.permute.xlu0 %73
    %vm75 = vcmask 146528
    %76 = vst.msk [vmem:[#allocation0] sm:$0x1] %vm75, %v74
    %s77 = scalar_lea.vmem %s0, 1
    %v78 = vld [vmem:[%s77] sm:$0x1]
    %79 = vrot.lane.b32.xlu0 %v78, 6
    %v80 = vpop.permute.xlu0 %79
    %vm81 = vcmask 97328
    %82 = vst.msk [vmem:[#allocation0] sm:$0x1] %vm81, %v80
    %s84 = ssub.s32 2, 1
    %v85 = vld [vmem:[#allocation0] sm:%s84]
    %s87 = ssub.s32 2, 1
    %88 = vst [vmem:[%s1] sm:%s87] %v85

// kernel: tile.18
$region0: #{tile.18}
  #allocation0 [shape = 's32[1]{0}', space=sflag, size = 0x4, scoped, tag = 'scoped memory for tile.18']
  %s0 = inlined_call_operand.vmem [shape: f32[16], index: 0, kind: input, shape index: {}]
  %s1 = inlined_call_operand.vmem [shape: f32[5,16], index: 1, kind: output, shape index: {}]
  // Predicated region
  $region2: #{tile.18} parent=0 // pred_check
    _
  $region3: #{tile.18} parent=0 // pred_check_branch
    %3 = sbr.rel (0) target = $region5
  $region4: #{tile.18} parent=0 // pred_region
    _
  $region5: #{tile.18} parent=0 // pred_fallthru
    _
  %v4 = vld [vmem:[%s0] ss:$0 sm:$0xff]
  %5 = vst [vmem:[%s1] sm:$0xff] %v4

// kernel: tile.19
$region0: #{tile.19}
  %s0 = inlined_call_operand.vmem [shape: f32[5,16], index: 0, kind: input, shape index: {}]
  %s1 = inlined_call_operand.vmem [shape: f32[80], index: 1, kind: output, shape index: {}]
  $region1: #{tile.19} parent=0
    #allocation0 [shape = 'u8[4096]{0}', space=vmem, size = 0x1000, scoped, tag = 'scoped mem for output reshape']
    %v2 = vld [vmem:[%s0] sm:$0x1]
    %vm3 = vcmask 130048
    %4 = vst.msk [vmem:[#allocation0] sm:$0x1] %vm3, %v2
    %s5 = scalar_lea.vmem %s0, 4
    %v6 = vld [vmem:[%s5] sm:$0x1]
    %7 = vrot.lane.b32.xlu0 %v6, 64
    %v8 = vpop.permute.xlu0 %7
    %vm9 = vcmask 654848
    %10 = vst.msk [vmem:[#allocation0] sm:$0x1] %vm9, %v8
    %s11 = scalar_lea.vmem %s0, 3
    %v12 = vld [vmem:[%s11] sm:$0x1]
    %13 = vrot.lane.b32.xlu0 %v12, 48
    %v14 = vpop.permute.xlu0 %13
    %vm15 = vcmask 523648
    %16 = vst.msk [vmem:[#allocation0] sm:$0x1] %vm15, %v14
    %s17 = scalar_lea.vmem %s0, 2
    %v18 = vld [vmem:[%s17] sm:$0x1]
    %19 = vrot.lane.b32.xlu0 %v18, 32
    %v20 = vpop.permute.xlu0 %19
    %vm21 = vcmask 392448
    %22 = vst.msk [vmem:[#allocation0] sm:$0x1] %vm21, %v20
    %s23 = scalar_lea.vmem %s0, 1
    %v24 = vld [vmem:[%s23] sm:$0x1]
    %25 = vrot.lane.b32.xlu0 %v24, 16
    %v26 = vpop.permute.xlu0 %25
    %vm27 = vcmask 261248
    %28 = vst.msk [vmem:[#allocation0] sm:$0x1] %vm27, %v26
    %s30 = ssub.s32 2, 1
    %v31 = vld [vmem:[#allocation0] sm:%s30]
    %s33 = ssub.s32 2, 1
    %34 = vst [vmem:[%s1] sm:%s33] %v31

// kernel: forward.1
$region0: #{forward.1}
  #allocation0 [shape = 'u32[]', space=smem, size = 0x4, offset = 0x4, fixed_abs, tag = 'smem constant byte address 0x4 - core index']
  #allocation1 [shape = 'u32[72,128]{1,0:T(1,128)}', space=vmem, size = 0x9000, scoped, tag = 'internal scratch']
  %s0 = inlined_call_operand.vmem [shape: bf16[4,8,16,96], index: 0, kind: input, shape index: {}]
  %s1 = inlined_call_operand.vmem [shape: bf16[5,96,256], index: 1, kind: input, shape index: {}]
  %s2 = inlined_call_operand.vmem [shape: f32[1,256], index: 2, kind: input, shape index: {}]
  %s3 = inlined_call_operand.vmem [shape: bf16[5,128,256], index: 3, kind: input, shape index: {}]
  %s4 = inlined_call_operand.vmem [shape: f32[1,256], index: 4, kind: input, shape index: {}]
  %s5 = inlined_call_operand.vmem [shape: bf16[5,128,120], index: 5, kind: input, shape index: {}]
  %s6 = inlined_call_operand.vmem [shape: f32[1,120], index: 6, kind: input, shape index: {}]
  %s7 = inlined_call_operand.vmem [shape: bf16[120,84], index: 7, kind: input, shape index: {}]
  %s8 = inlined_call_operand.vmem [shape: f32[1,84], index: 8, kind: input, shape index: {}]
  %s9 = inlined_call_operand.vmem [shape: bf16[84,128], index: 9, kind: input, shape index: {}]
  %s10 = inlined_call_operand.vmem [shape: f32[1,128], index: 10, kind: input, shape index: {}]
  %s11 = inlined_call_operand.vmem [shape: f32[16,128], index: 11, kind: output, shape index: {}]
  %s12 = sld [smem:[#allocation0]]
  $region54: #{forward.1} parent=0
    _
  %s14 = ssub.s32 1, %s12
  %s15 = scalar_select 0, %s14, %s12
  // Predicated region
  $region2: #{forward.1} parent=0 // pred_check
    _
  $region3: #{forward.1} parent=0 // pred_check_branch
    %17 = sbr.rel (0) target = $region5
  $region4: #{forward.1} parent=0 // pred_region
    _
  $region5: #{forward.1} parent=0 // pred_fallthru
    _
  // Predicated region
  $region6: #{forward.1} parent=0 // pred_check
    _
  $region7: #{forward.1} parent=0 // pred_check_branch
    %19 = sbr.rel (0) target = $region9
  $region8: #{forward.1} parent=0 // pred_region
    _
  $region9: #{forward.1} parent=0 // pred_fallthru
    _
  // Predicated region
  $region10: #{forward.1} parent=0 // pred_check
    _
  $region11: #{forward.1} parent=0 // pred_check_branch
    %21 = sbr.rel (0) target = $region13
  $region12: #{forward.1} parent=0 // pred_region
    _
  $region13: #{forward.1} parent=0 // pred_fallthru
    _
  // Predicated region
  $region14: #{forward.1} parent=0 // pred_check
    _
  $region15: #{forward.1} parent=0 // pred_check_branch
    %23 = sbr.rel (0) target = $region17
  $region16: #{forward.1} parent=0 // pred_region
    _
  $region17: #{forward.1} parent=0 // pred_fallthru
    _
  // Predicated region
  $region18: #{forward.1} parent=0 // pred_check
    _
  $region19: #{forward.1} parent=0 // pred_check_branch
    %25 = sbr.rel (0) target = $region21
  $region20: #{forward.1} parent=0 // pred_region
    _
  $region21: #{forward.1} parent=0 // pred_fallthru
    _
  // Predicated region
  $region22: #{forward.1} parent=0 // pred_check
    _
  $region23: #{forward.1} parent=0 // pred_check_branch
    %27 = sbr.rel (0) target = $region25
  $region24: #{forward.1} parent=0 // pred_region
    _
  $region25: #{forward.1} parent=0 // pred_fallthru
    _
  // Predicated region
  $region26: #{forward.1} parent=0 // pred_check
    _
  $region27: #{forward.1} parent=0 // pred_check_branch
    %29 = sbr.rel (0) target = $region29
  $region28: #{forward.1} parent=0 // pred_region
    _
  $region29: #{forward.1} parent=0 // pred_fallthru
    _
  // Predicated region
  $region30: #{forward.1} parent=0 // pred_check
    _
  $region31: #{forward.1} parent=0 // pred_check_branch
    %31 = sbr.rel (0) target = $region33
  $region32: #{forward.1} parent=0 // pred_region
    _
  $region33: #{forward.1} parent=0 // pred_fallthru
    _
  // Predicated region
  $region34: #{forward.1} parent=0 // pred_check
    _
  $region35: #{forward.1} parent=0 // pred_check_branch
    %33 = sbr.rel (0) target = $region37
  $region36: #{forward.1} parent=0 // pred_region
    _
  $region37: #{forward.1} parent=0 // pred_fallthru
    _
  // Predicated region
  $region38: #{forward.1} parent=0 // pred_check
    _
  $region39: #{forward.1} parent=0 // pred_check_branch
    %35 = sbr.rel (0) target = $region41
  $region40: #{forward.1} parent=0 // pred_region
    _
  $region41: #{forward.1} parent=0 // pred_fallthru
    _
  // Predicated region
  $region42: #{forward.1} parent=0 // pred_check
    _
  $region43: #{forward.1} parent=0 // pred_check_branch
    %37 = sbr.rel (0) target = $region45
  $region44: #{forward.1} parent=0 // pred_region
    _
  $region45: #{forward.1} parent=0 // pred_fallthru
    _
  %v39 = vld [vmem:[%s0] sm:$0xf]
  %v40 = vld [vmem:[%s0 + $0x4] sm:$0xf]
  %v41 = vld [vmem:[%s0 + $0x8] sm:$0xf]
  %v42 = vld [vmem:[%s0 + $0xc] sm:$0xf]
  %v43 = vld [vmem:[%s0 + $0x10] sm:$0xf]
  %v44 = vld [vmem:[%s0 + $0x14] sm:$0xf]
  %v45 = vld [vmem:[%s0 + $0x18] sm:$0xf]
  %v46 = vld [vmem:[%s0 + $0x1c] sm:$0xf]
  %v47 = vld [vmem:[%s0 + $0x20] sm:$0xf]
  %v48 = vld [vmem:[%s0 + $0x24] sm:$0xf]
  %v49 = vld [vmem:[%s0 + $0x28] sm:$0xf]
  %v50 = vld [vmem:[%s0 + $0x2c] sm:$0xf]
  %v51 = vld [vmem:[%s0 + $0x30] sm:$0xf]
  %v52 = vld [vmem:[%s0 + $0x34] sm:$0xf]
  %v53 = vld [vmem:[%s0 + $0x38] sm:$0xf]
  %v54 = vld [vmem:[%s0 + $0x3c] sm:$0xf]
  %s55 = scalar_lea.vmem %s0, 64
  %v56 = vld [vmem:[%s55] sm:$0xf]
  %v57 = vld [vmem:[%s55 + $0x4] sm:$0xf]
  %v58 = vld [vmem:[%s55 + $0x8] sm:$0xf]
  %v59 = vld [vmem:[%s55 + $0xc] sm:$0xf]
  %v60 = vld [vmem:[%s55 + $0x10] sm:$0xf]
  %v61 = vld [vmem:[%s55 + $0x14] sm:$0xf]
  %v62 = vld [vmem:[%s55 + $0x18] sm:$0xf]
  %v63 = vld [vmem:[%s55 + $0x1c] sm:$0xf]
  %v64 = vld [vmem:[%s55 + $0x20] sm:$0xf]
  %v65 = vld [vmem:[%s55 + $0x24] sm:$0xf]
  %v66 = vld [vmem:[%s55 + $0x28] sm:$0xf]
  %v67 = vld [vmem:[%s55 + $0x2c] sm:$0xf]
  %v68 = vld [vmem:[%s55 + $0x30] sm:$0xf]
  %v69 = vld [vmem:[%s55 + $0x34] sm:$0xf]
  %v70 = vld [vmem:[%s55 + $0x38] sm:$0xf]
  %v71 = vld [vmem:[%s55 + $0x3c] sm:$0xf]
  %s72 = scalar_lea.vmem %s0, 128
  %v73 = vld [vmem:[%s72] sm:$0xf]
  %v74 = vld [vmem:[%s72 + $0x4] sm:$0xf]
  %v75 = vld [vmem:[%s72 + $0x8] sm:$0xf]
  %v76 = vld [vmem:[%s72 + $0xc] sm:$0xf]
  %v77 = vld [vmem:[%s72 + $0x10] sm:$0xf]
  %v78 = vld [vmem:[%s72 + $0x14] sm:$0xf]
  %v79 = vld [vmem:[%s72 + $0x18] sm:$0xf]
  %v80 = vld [vmem:[%s72 + $0x1c] sm:$0xf]
  %v81 = vld [vmem:[%s72 + $0x20] sm:$0xf]
  %v82 = vld [vmem:[%s72 + $0x24] sm:$0xf]
  %v83 = vld [vmem:[%s72 + $0x28] sm:$0xf]
  %v84 = vld [vmem:[%s72 + $0x2c] sm:$0xf]
  %v85 = vld [vmem:[%s72 + $0x30] sm:$0xf]
  %v86 = vld [vmem:[%s72 + $0x34] sm:$0xf]
  %v87 = vld [vmem:[%s72 + $0x38] sm:$0xf]
  %v88 = vld [vmem:[%s72 + $0x3c] sm:$0xf]
  %s89 = scalar_lea.vmem %s0, 192
  %v90 = vld [vmem:[%s89] sm:$0xf]
  %v91 = vld [vmem:[%s89 + $0x4] sm:$0xf]
  %v92 = vld [vmem:[%s89 + $0x8] sm:$0xf]
  %v93 = vld [vmem:[%s89 + $0xc] sm:$0xf]
  %v94 = vld [vmem:[%s89 + $0x10] sm:$0xf]
  %v95 = vld [vmem:[%s89 + $0x14] sm:$0xf]
  %v96 = vld [vmem:[%s89 + $0x18] sm:$0xf]
  %v97 = vld [vmem:[%s89 + $0x1c] sm:$0xf]
  %v98 = vld [vmem:[%s89 + $0x20] sm:$0xf]
  %v99 = vld [vmem:[%s89 + $0x24] sm:$0xf]
  %v100 = vld [vmem:[%s89 + $0x28] sm:$0xf]
  %v101 = vld [vmem:[%s89 + $0x2c] sm:$0xf]
  %v102 = vld [vmem:[%s89 + $0x30] sm:$0xf]
  %v103 = vld [vmem:[%s89 + $0x34] sm:$0xf]
  %v104 = vld [vmem:[%s89 + $0x38] sm:$0xf]
  %v105 = vld [vmem:[%s89 + $0x3c] sm:$0xf]
  %v106 = vld [vmem:[%s2] sm:$0x3]
  %v107 = vld [vmem:[%s4] sm:$0x3]
  %v108 = vld [vmem:[%s1] sm:$0xff]
  %v109 = vld [vmem:[%s1 + $0x8] sm:$0xff]
  %v110 = vld [vmem:[%s1 + $0x10] sm:$0xff]
  %v111 = vld [vmem:[%s1 + $0x18] sm:$0xff]
  %v112 = vld [vmem:[%s1 + $0x20] sm:$0xff]
  %v113 = vld [vmem:[%s1 + $0x28] sm:$0xff]
  %v114 = vld [vmem:[%s1 + $0x30] sm:$0xff]
  %v115 = vld [vmem:[%s1 + $0x38] sm:$0xff]
  %v116 = vld [vmem:[%s1 + $0x40] sm:$0xff]
  %v117 = vld [vmem:[%s1 + $0x48] sm:$0xff]
  %v118 = vld [vmem:[%s1 + $0x50] sm:$0xff]
  %v119 = vld [vmem:[%s1 + $0x58] sm:$0xff]
  %s120 = scalar_lea.vmem %s1, 96
  %v121 = vld [vmem:[%s120] sm:$0xff]
  %v122 = vld [vmem:[%s120 + $0x8] sm:$0xff]
  %v123 = vld [vmem:[%s120 + $0x10] sm:$0xff]
  %v124 = vld [vmem:[%s120 + $0x18] sm:$0xff]
  %v125 = vld [vmem:[%s120 + $0x20] sm:$0xff]
  %v126 = vld [vmem:[%s120 + $0x28] sm:$0xff]
  %v127 = vld [vmem:[%s120 + $0x30] sm:$0xff]
  %v128 = vld [vmem:[%s120 + $0x38] sm:$0xff]
  %v129 = vld [vmem:[%s120 + $0x40] sm:$0xff]
  %v130 = vld [vmem:[%s120 + $0x48] sm:$0xff]
  %v131 = vld [vmem:[%s120 + $0x50] sm:$0xff]
  %v132 = vld [vmem:[%s120 + $0x58] sm:$0xff]
  %v147 = vunpack.c.l.b16 %v56
  %v148 = vunpack.c.l.b16 %v57
  %v149 = vunpack.c.l.b16 %v58
  %v150 = vunpack.c.l.b16 %v59
  %v151 = vunpack.c.l.b16 %v60
  %v152 = vunpack.c.l.b16 %v61
  %v153 = vunpack.c.l.b16 %v62
  %v154 = vunpack.c.l.b16 %v63
  %v155 = vunpack.c.l.b16 %v64
  %v156 = vunpack.c.l.b16 %v65
  %v157 = vunpack.c.l.b16 %v66
  %v158 = vunpack.c.l.b16 %v67
  %v159 = vunpack.c.l.b16 %v68
  %v160 = vunpack.c.l.b16 %v69
  %v161 = vpack.c.b16 %v148, %v147
  %v162 = vpack.c.b16 %v150, %v149
  %v163 = vpack.c.b16 %v152, %v151
  %v164 = vpack.c.b16 %v154, %v153
  %v165 = vpack.c.b16 %v156, %v155
  %v166 = vpack.c.b16 %v158, %v157
  %v167 = vpack.c.b16 %v160, %v159
  %v180 = vunpack.c.l.b16 %v121
  %v181 = vunpack.c.h.b16 %v121
  %v182 = vunpack.c.l.b16 %v122
  %v183 = vunpack.c.h.b16 %v122
  %v184 = vunpack.c.l.b16 %v123
  %v185 = vunpack.c.h.b16 %v123
  %v186 = vunpack.c.l.b16 %v124
  %v187 = vunpack.c.h.b16 %v124
  %v188 = vunpack.c.l.b16 %v125
  %v189 = vunpack.c.h.b16 %v125
  %v190 = vunpack.c.l.b16 %v126
  %v191 = vunpack.c.h.b16 %v126
  %v192 = vunpack.c.l.b16 %v127
  %v193 = vunpack.c.h.b16 %v127
  %v194 = vunpack.c.l.b16 %v128
  %v195 = vunpack.c.h.b16 %v128
  %v196 = vunpack.c.l.b16 %v129
  %v197 = vunpack.c.h.b16 %v129
  %v198 = vunpack.c.l.b16 %v130
  %v199 = vunpack.c.h.b16 %v130
  %v200 = vunpack.c.l.b16 %v131
  %v201 = vunpack.c.h.b16 %v131
  %v202 = vunpack.c.l.b16 %v132
  %v203 = vunpack.c.h.b16 %v132
  %v204 = vpack.c.b16 %v182, %v180
  %v205 = vpack.c.b16 %v183, %v181
  %v206 = vpack.c.b16 %v186, %v184
  %v207 = vpack.c.b16 %v187, %v185
  %v208 = vpack.c.b16 %v190, %v188
  %v209 = vpack.c.b16 %v191, %v189
  %v210 = vpack.c.b16 %v194, %v192
  %v211 = vpack.c.b16 %v195, %v193
  %v212 = vpack.c.b16 %v198, %v196
  %v213 = vpack.c.b16 %v199, %v197
  %v214 = vpack.c.b16 %v202, %v200
  %v215 = vpack.c.b16 %v203, %v201
  %vm228 = vcmask 785408
  %v230 = vsel %vm228, %v161, 0
  %v233 = vsel %vm228, %v162, 0
  %v236 = vsel %vm228, %v163, 0
  %v239 = vsel %vm228, %v164, 0
  %v242 = vsel %vm228, %v165, 0
  %v245 = vsel %vm228, %v166, 0
  %v248 = vsel %vm228, %v167, 0
  %250 = vmatpush.bf16.msra.mxu0 0
  %251 = vmatpush.bf16.msra.mxu0 0
  %252 = vmatpush.bf16.msra.mxu0 %v214
  %253 = vmatpush.bf16.msra.mxu0 %v212
  %254 = vmatpush.bf16.msra.mxu0 %v210
  %255 = vmatpush.bf16.msra.mxu0 %v208
  %256 = vmatpush.bf16.msra.mxu0 %v206
  %257 = vmatpush.bf16.msra.mxu0 %v204
  %258 = vmatmul.bf16.gmra.mxu0 %v230
  %v259 = vpop.f32.mrf.mxu0
  %v260 = vadd.f32 0.0, %v259
  %v261 = vpop.f32.mrf.mxu0
  %v262 = vadd.f32 0.0, %v261
  %263 = vmatmul.bf16.gmra.mxu0 %v233
  %v264 = vpop.f32.mrf.mxu0
  %v265 = vadd.f32 0.0, %v264
  %v266 = vpop.f32.mrf.mxu0
  %v267 = vadd.f32 0.0, %v266
  %268 = vmatmul.bf16.gmra.mxu0 %v236
  %v269 = vpop.f32.mrf.mxu0
  %v270 = vadd.f32 0.0, %v269
  %v271 = vpop.f32.mrf.mxu0
  %v272 = vadd.f32 0.0, %v271
  %273 = vmatmul.bf16.gmra.mxu0 %v239
  %v274 = vpop.f32.mrf.mxu0
  %v275 = vadd.f32 0.0, %v274
  %v276 = vpop.f32.mrf.mxu0
  %v277 = vadd.f32 0.0, %v276
  %278 = vmatmul.bf16.gmra.mxu0 %v242
  %v279 = vpop.f32.mrf.mxu0
  %v280 = vadd.f32 0.0, %v279
  %v281 = vpop.f32.mrf.mxu0
  %v282 = vadd.f32 0.0, %v281
  %283 = vmatmul.bf16.gmra.mxu0 %v245
  %v284 = vpop.f32.mrf.mxu0
  %v285 = vadd.f32 0.0, %v284
  %v286 = vpop.f32.mrf.mxu0
  %v287 = vadd.f32 0.0, %v286
  %288 = vmatmul.bf16.gmra.mxu0 %v248
  %v289 = vpop.f32.mrf.mxu0
  %v290 = vadd.f32 0.0, %v289
  %v291 = vpop.f32.mrf.mxu0
  %v292 = vadd.f32 0.0, %v291
  %293 = vdwg.mxu0
  %294 = vmatpush.bf16.msra.mxu0 0
  %295 = vmatpush.bf16.msra.mxu0 0
  %296 = vmatpush.bf16.msra.mxu0 %v215
  %297 = vmatpush.bf16.msra.mxu0 %v213
  %298 = vmatpush.bf16.msra.mxu0 %v211
  %299 = vmatpush.bf16.msra.mxu0 %v209
  %300 = vmatpush.bf16.msra.mxu0 %v207
  %301 = vmatpush.bf16.msra.mxu0 %v205
  %302 = vmatmul.bf16.gmra.mxu0 %v230
  %v303 = vpop.f32.mrf.mxu0
  %v304 = vadd.f32 0.0, %v303
  %v305 = vpop.f32.mrf.mxu0
  %v306 = vadd.f32 0.0, %v305
  %307 = vmatmul.bf16.gmra.mxu0 %v233
  %v308 = vpop.f32.mrf.mxu0
  %v309 = vadd.f32 0.0, %v308
  %v310 = vpop.f32.mrf.mxu0
  %v311 = vadd.f32 0.0, %v310
  %312 = vmatmul.bf16.gmra.mxu0 %v236
  %v313 = vpop.f32.mrf.mxu0
  %v314 = vadd.f32 0.0, %v313
  %v315 = vpop.f32.mrf.mxu0
  %v316 = vadd.f32 0.0, %v315
  %317 = vmatmul.bf16.gmra.mxu0 %v239
  %v318 = vpop.f32.mrf.mxu0
  %v319 = vadd.f32 0.0, %v318
  %v320 = vpop.f32.mrf.mxu0
  %v321 = vadd.f32 0.0, %v320
  %322 = vmatmul.bf16.gmra.mxu0 %v242
  %v323 = vpop.f32.mrf.mxu0
  %v324 = vadd.f32 0.0, %v323
  %v325 = vpop.f32.mrf.mxu0
  %v326 = vadd.f32 0.0, %v325
  %327 = vmatmul.bf16.gmra.mxu0 %v245
  %v328 = vpop.f32.mrf.mxu0
  %v329 = vadd.f32 0.0, %v328
  %v330 = vpop.f32.mrf.mxu0
  %v331 = vadd.f32 0.0, %v330
  %332 = vmatmul.bf16.gmra.mxu0 %v248
  %v333 = vpop.f32.mrf.mxu0
  %v334 = vadd.f32 0.0, %v333
  %v335 = vpop.f32.mrf.mxu0
  %v336 = vadd.f32 0.0, %v335
  %337 = vdwg.mxu0
  %v352 = vunpack.c.l.b16 %v39
  %v353 = vunpack.c.l.b16 %v40
  %v354 = vunpack.c.l.b16 %v41
  %v355 = vunpack.c.l.b16 %v42
  %v356 = vunpack.c.l.b16 %v43
  %v357 = vunpack.c.l.b16 %v44
  %v358 = vunpack.c.l.b16 %v45
  %v359 = vunpack.c.l.b16 %v46
  %v360 = vunpack.c.l.b16 %v47
  %v361 = vunpack.c.l.b16 %v48
  %v362 = vunpack.c.l.b16 %v49
  %v363 = vunpack.c.l.b16 %v50
  %v364 = vunpack.c.l.b16 %v51
  %v365 = vunpack.c.l.b16 %v52
  %v366 = vpack.c.b16 %v353, %v352
  %v367 = vpack.c.b16 %v355, %v354
  %v368 = vpack.c.b16 %v357, %v356
  %v369 = vpack.c.b16 %v359, %v358
  %v370 = vpack.c.b16 %v361, %v360
  %v371 = vpack.c.b16 %v363, %v362
  %v372 = vpack.c.b16 %v365, %v364
  %v385 = vunpack.c.l.b16 %v108
  %v386 = vunpack.c.h.b16 %v108
  %v387 = vunpack.c.l.b16 %v109
  %v388 = vunpack.c.h.b16 %v109
  %v389 = vunpack.c.l.b16 %v110
  %v390 = vunpack.c.h.b16 %v110
  %v391 = vunpack.c.l.b16 %v111
  %v392 = vunpack.c.h.b16 %v111
  %v393 = vunpack.c.l.b16 %v112
  %v394 = vunpack.c.h.b16 %v112
  %v395 = vunpack.c.l.b16 %v113
  %v396 = vunpack.c.h.b16 %v113
  %v397 = vunpack.c.l.b16 %v114
  %v398 = vunpack.c.h.b16 %v114
  %v399 = vunpack.c.l.b16 %v115
  %v400 = vunpack.c.h.b16 %v115
  %v401 = vunpack.c.l.b16 %v116
  %v402 = vunpack.c.h.b16 %v116
  %v403 = vunpack.c.l.b16 %v117
  %v404 = vunpack.c.h.b16 %v117
  %v405 = vunpack.c.l.b16 %v118
  %v406 = vunpack.c.h.b16 %v118
  %v407 = vunpack.c.l.b16 %v119
  %v408 = vunpack.c.h.b16 %v119
  %v409 = vpack.c.b16 %v387, %v385
  %v410 = vpack.c.b16 %v388, %v386
  %v411 = vpack.c.b16 %v391, %v389
  %v412 = vpack.c.b16 %v392, %v390
  %v413 = vpack.c.b16 %v395, %v393
  %v414 = vpack.c.b16 %v396, %v394
  %v415 = vpack.c.b16 %v399, %v397
  %v416 = vpack.c.b16 %v400, %v398
  %v417 = vpack.c.b16 %v403, %v401
  %v418 = vpack.c.b16 %v404, %v402
  %v419 = vpack.c.b16 %v407, %v405
  %v420 = vpack.c.b16 %v408, %v406
  %v434 = vsel %vm228, %v366, 0
  %v437 = vsel %vm228, %v367, 0
  %v440 = vsel %vm228, %v368, 0
  %v443 = vsel %vm228, %v369, 0
  %v446 = vsel %vm228, %v370, 0
  %v449 = vsel %vm228, %v371, 0
  %v452 = vsel %vm228, %v372, 0
  %454 = vmatpush.bf16.msra.mxu0 0
  %455 = vmatpush.bf16.msra.mxu0 0
  %456 = vmatpush.bf16.msra.mxu0 %v419
  %457 = vmatpush.bf16.msra.mxu0 %v417
  %458 = vmatpush.bf16.msra.mxu0 %v415
  %459 = vmatpush.bf16.msra.mxu0 %v413
  %460 = vmatpush.bf16.msra.mxu0 %v411
  %461 = vmatpush.bf16.msra.mxu0 %v409
  %462 = vmatmul.bf16.gmra.mxu0 %v434
  %v463 = vpop.f32.mrf.mxu0
  %v464 = vadd.f32 %v260, %v463
  %v465 = vpop.f32.mrf.mxu0
  %v466 = vadd.f32 %v262, %v465
  %467 = vmatmul.bf16.gmra.mxu0 %v437
  %v468 = vpop.f32.mrf.mxu0
  %v469 = vadd.f32 %v265, %v468
  %v470 = vpop.f32.mrf.mxu0
  %v471 = vadd.f32 %v267, %v470
  %472 = vmatmul.bf16.gmra.mxu0 %v440
  %v473 = vpop.f32.mrf.mxu0
  %v474 = vadd.f32 %v270, %v473
  %v475 = vpop.f32.mrf.mxu0
  %v476 = vadd.f32 %v272, %v475
  %477 = vmatmul.bf16.gmra.mxu0 %v443
  %v478 = vpop.f32.mrf.mxu0
  %v479 = vadd.f32 %v275, %v478
  %v480 = vpop.f32.mrf.mxu0
  %v481 = vadd.f32 %v277, %v480
  %482 = vmatmul.bf16.gmra.mxu0 %v446
  %v483 = vpop.f32.mrf.mxu0
  %v484 = vadd.f32 %v280, %v483
  %v485 = vpop.f32.mrf.mxu0
  %v486 = vadd.f32 %v282, %v485
  %487 = vmatmul.bf16.gmra.mxu0 %v449
  %v488 = vpop.f32.mrf.mxu0
  %v489 = vadd.f32 %v285, %v488
  %v490 = vpop.f32.mrf.mxu0
  %v491 = vadd.f32 %v287, %v490
  %492 = vmatmul.bf16.gmra.mxu0 %v452
  %v493 = vpop.f32.mrf.mxu0
  %v494 = vadd.f32 %v290, %v493
  %v495 = vpop.f32.mrf.mxu0
  %v496 = vadd.f32 %v292, %v495
  %497 = vdwg.mxu0
  %498 = vmatpush.bf16.msra.mxu0 0
  %499 = vmatpush.bf16.msra.mxu0 0
  %500 = vmatpush.bf16.msra.mxu0 %v420
  %501 = vmatpush.bf16.msra.mxu0 %v418
  %502 = vmatpush.bf16.msra.mxu0 %v416
  %503 = vmatpush.bf16.msra.mxu0 %v414
  %504 = vmatpush.bf16.msra.mxu0 %v412
  %505 = vmatpush.bf16.msra.mxu0 %v410
  %506 = vmatmul.bf16.gmra.mxu0 %v434
  %v507 = vpop.f32.mrf.mxu0
  %v508 = vadd.f32 %v304, %v507
  %v509 = vpop.f32.mrf.mxu0
  %v510 = vadd.f32 %v306, %v509
  %511 = vmatmul.bf16.gmra.mxu0 %v437
  %v512 = vpop.f32.mrf.mxu0
  %v513 = vadd.f32 %v309, %v512
  %v514 = vpop.f32.mrf.mxu0
  %v515 = vadd.f32 %v311, %v514
  %516 = vmatmul.bf16.gmra.mxu0 %v440
  %v517 = vpop.f32.mrf.mxu0
  %v518 = vadd.f32 %v314, %v517
  %v519 = vpop.f32.mrf.mxu0
  %v520 = vadd.f32 %v316, %v519
  %521 = vmatmul.bf16.gmra.mxu0 %v443
  %v522 = vpop.f32.mrf.mxu0
  %v523 = vadd.f32 %v319, %v522
  %v524 = vpop.f32.mrf.mxu0
  %v525 = vadd.f32 %v321, %v524
  %526 = vmatmul.bf16.gmra.mxu0 %v446
  %v527 = vpop.f32.mrf.mxu0
  %v528 = vadd.f32 %v324, %v527
  %v529 = vpop.f32.mrf.mxu0
  %v530 = vadd.f32 %v326, %v529
  %531 = vmatmul.bf16.gmra.mxu0 %v449
  %v532 = vpop.f32.mrf.mxu0
  %v533 = vadd.f32 %v329, %v532
  %v534 = vpop.f32.mrf.mxu0
  %v535 = vadd.f32 %v331, %v534
  %536 = vmatmul.bf16.gmra.mxu0 %v452
  %v537 = vpop.f32.mrf.mxu0
  %v538 = vadd.f32 %v334, %v537
  %v539 = vpop.f32.mrf.mxu0
  %v540 = vadd.f32 %v336, %v539
  %541 = vdwg.mxu0
  %s542 = scalar_lea.vmem %s1, 192
  %v543 = vld [vmem:[%s542] sm:$0xff]
  %v544 = vld [vmem:[%s542 + $0x8] sm:$0xff]
  %v545 = vld [vmem:[%s542 + $0x10] sm:$0xff]
  %v546 = vld [vmem:[%s542 + $0x18] sm:$0xff]
  %v547 = vld [vmem:[%s542 + $0x20] sm:$0xff]
  %v548 = vld [vmem:[%s542 + $0x28] sm:$0xff]
  %v549 = vld [vmem:[%s542 + $0x30] sm:$0xff]
  %v550 = vld [vmem:[%s542 + $0x38] sm:$0xff]
  %v551 = vld [vmem:[%s542 + $0x40] sm:$0xff]
  %v552 = vld [vmem:[%s542 + $0x48] sm:$0xff]
  %v553 = vld [vmem:[%s542 + $0x50] sm:$0xff]
  %v554 = vld [vmem:[%s542 + $0x58] sm:$0xff]
  %v569 = vunpack.c.l.b16 %v73
  %v570 = vunpack.c.l.b16 %v74
  %v571 = vunpack.c.l.b16 %v75
  %v572 = vunpack.c.l.b16 %v76
  %v573 = vunpack.c.l.b16 %v77
  %v574 = vunpack.c.l.b16 %v78
  %v575 = vunpack.c.l.b16 %v79
  %v576 = vunpack.c.l.b16 %v80
  %v577 = vunpack.c.l.b16 %v81
  %v578 = vunpack.c.l.b16 %v82
  %v579 = vunpack.c.l.b16 %v83
  %v580 = vunpack.c.l.b16 %v84
  %v581 = vunpack.c.l.b16 %v85
  %v582 = vunpack.c.l.b16 %v86
  %v583 = vpack.c.b16 %v570, %v569
  %v584 = vpack.c.b16 %v572, %v571
  %v585 = vpack.c.b16 %v574, %v573
  %v586 = vpack.c.b16 %v576, %v575
  %v587 = vpack.c.b16 %v578, %v577
  %v588 = vpack.c.b16 %v580, %v579
  %v589 = vpack.c.b16 %v582, %v581
  %v602 = vunpack.c.l.b16 %v543
  %v603 = vunpack.c.h.b16 %v543
  %v604 = vunpack.c.l.b16 %v544
  %v605 = vunpack.c.h.b16 %v544
  %v606 = vunpack.c.l.b16 %v545
  %v607 = vunpack.c.h.b16 %v545
  %v608 = vunpack.c.l.b16 %v546
  %v609 = vunpack.c.h.b16 %v546
  %v610 = vunpack.c.l.b16 %v547
  %v611 = vunpack.c.h.b16 %v547
  %v612 = vunpack.c.l.b16 %v548
  %v613 = vunpack.c.h.b16 %v548
  %v614 = vunpack.c.l.b16 %v549
  %v615 = vunpack.c.h.b16 %v549
  %v616 = vunpack.c.l.b16 %v550
  %v617 = vunpack.c.h.b16 %v550
  %v618 = vunpack.c.l.b16 %v551
  %v619 = vunpack.c.h.b16 %v551
  %v620 = vunpack.c.l.b16 %v552
  %v621 = vunpack.c.h.b16 %v552
  %v622 = vunpack.c.l.b16 %v553
  %v623 = vunpack.c.h.b16 %v553
  %v624 = vunpack.c.l.b16 %v554
  %v625 = vunpack.c.h.b16 %v554
  %v626 = vpack.c.b16 %v604, %v602
  %v627 = vpack.c.b16 %v605, %v603
  %v628 = vpack.c.b16 %v608, %v606
  %v629 = vpack.c.b16 %v609, %v607
  %v630 = vpack.c.b16 %v612, %v610
  %v631 = vpack.c.b16 %v613, %v611
  %v632 = vpack.c.b16 %v616, %v614
  %v633 = vpack.c.b16 %v617, %v615
  %v634 = vpack.c.b16 %v620, %v618
  %v635 = vpack.c.b16 %v621, %v619
  %v636 = vpack.c.b16 %v624, %v622
  %v637 = vpack.c.b16 %v625, %v623
  %v651 = vsel %vm228, %v583, 0
  %v654 = vsel %vm228, %v584, 0
  %v657 = vsel %vm228, %v585, 0
  %v660 = vsel %vm228, %v586, 0
  %v663 = vsel %vm228, %v587, 0
  %v666 = vsel %vm228, %v588, 0
  %v669 = vsel %vm228, %v589, 0
  %671 = vmatpush.bf16.msra.mxu0 0
  %672 = vmatpush.bf16.msra.mxu0 0
  %673 = vmatpush.bf16.msra.mxu0 %v636
  %674 = vmatpush.bf16.msra.mxu0 %v634
  %675 = vmatpush.bf16.msra.mxu0 %v632
  %676 = vmatpush.bf16.msra.mxu0 %v630
  %677 = vmatpush.bf16.msra.mxu0 %v628
  %678 = vmatpush.bf16.msra.mxu0 %v626
  %679 = vmatmul.bf16.gmra.mxu0 %v651
  %v680 = vpop.f32.mrf.mxu0
  %v681 = vadd.f32 0.0, %v680
  %v682 = vpop.f32.mrf.mxu0
  %v683 = vadd.f32 0.0, %v682
  %684 = vmatmul.bf16.gmra.mxu0 %v654
  %v685 = vpop.f32.mrf.mxu0
  %v686 = vadd.f32 0.0, %v685
  %v687 = vpop.f32.mrf.mxu0
  %v688 = vadd.f32 0.0, %v687
  %689 = vmatmul.bf16.gmra.mxu0 %v657
  %v690 = vpop.f32.mrf.mxu0
  %v691 = vadd.f32 0.0, %v690
  %v692 = vpop.f32.mrf.mxu0
  %v693 = vadd.f32 0.0, %v692
  %694 = vmatmul.bf16.gmra.mxu0 %v660
  %v695 = vpop.f32.mrf.mxu0
  %v696 = vadd.f32 0.0, %v695
  %v697 = vpop.f32.mrf.mxu0
  %v698 = vadd.f32 0.0, %v697
  %699 = vmatmul.bf16.gmra.mxu0 %v663
  %v700 = vpop.f32.mrf.mxu0
  %v701 = vadd.f32 0.0, %v700
  %v702 = vpop.f32.mrf.mxu0
  %v703 = vadd.f32 0.0, %v702
  %704 = vmatmul.bf16.gmra.mxu0 %v666
  %v705 = vpop.f32.mrf.mxu0
  %v706 = vadd.f32 0.0, %v705
  %v707 = vpop.f32.mrf.mxu0
  %v708 = vadd.f32 0.0, %v707
  %709 = vmatmul.bf16.gmra.mxu0 %v669
  %v710 = vpop.f32.mrf.mxu0
  %v711 = vadd.f32 0.0, %v710
  %v712 = vpop.f32.mrf.mxu0
  %v713 = vadd.f32 0.0, %v712
  %714 = vdwg.mxu0
  %715 = vmatpush.bf16.msra.mxu0 0
  %716 = vmatpush.bf16.msra.mxu0 0
  %717 = vmatpush.bf16.msra.mxu0 %v637
  %718 = vmatpush.bf16.msra.mxu0 %v635
  %719 = vmatpush.bf16.msra.mxu0 %v633
  %720 = vmatpush.bf16.msra.mxu0 %v631
  %721 = vmatpush.bf16.msra.mxu0 %v629
  %722 = vmatpush.bf16.msra.mxu0 %v627
  %723 = vmatmul.bf16.gmra.mxu0 %v651
  %v724 = vpop.f32.mrf.mxu0
  %v725 = vadd.f32 0.0, %v724
  %v726 = vpop.f32.mrf.mxu0
  %v727 = vadd.f32 0.0, %v726
  %728 = vmatmul.bf16.gmra.mxu0 %v654
  %v729 = vpop.f32.mrf.mxu0
  %v730 = vadd.f32 0.0, %v729
  %v731 = vpop.f32.mrf.mxu0
  %v732 = vadd.f32 0.0, %v731
  %733 = vmatmul.bf16.gmra.mxu0 %v657
  %v734 = vpop.f32.mrf.mxu0
  %v735 = vadd.f32 0.0, %v734
  %v736 = vpop.f32.mrf.mxu0
  %v737 = vadd.f32 0.0, %v736
  %738 = vmatmul.bf16.gmra.mxu0 %v660
  %v739 = vpop.f32.mrf.mxu0
  %v740 = vadd.f32 0.0, %v739
  %v741 = vpop.f32.mrf.mxu0
  %v742 = vadd.f32 0.0, %v741
  %743 = vmatmul.bf16.gmra.mxu0 %v663
  %v744 = vpop.f32.mrf.mxu0
  %v745 = vadd.f32 0.0, %v744
  %v746 = vpop.f32.mrf.mxu0
  %v747 = vadd.f32 0.0, %v746
  %748 = vmatmul.bf16.gmra.mxu0 %v666
  %v749 = vpop.f32.mrf.mxu0
  %v750 = vadd.f32 0.0, %v749
  %v751 = vpop.f32.mrf.mxu0
  %v752 = vadd.f32 0.0, %v751
  %753 = vmatmul.bf16.gmra.mxu0 %v669
  %v754 = vpop.f32.mrf.mxu0
  %v755 = vadd.f32 0.0, %v754
  %v756 = vpop.f32.mrf.mxu0
  %v757 = vadd.f32 0.0, %v756
  %758 = vdwg.mxu0
  %v759 = vadd.f32 %v464, %v681
  %v760 = vadd.f32 %v508, %v725
  %v761 = vadd.f32 %v466, %v683
  %v762 = vadd.f32 %v510, %v727
  %v763 = vadd.f32 %v469, %v686
  %v764 = vadd.f32 %v513, %v730
  %v765 = vadd.f32 %v471, %v688
  %v766 = vadd.f32 %v515, %v732
  %v767 = vadd.f32 %v474, %v691
  %v768 = vadd.f32 %v518, %v735
  %v769 = vadd.f32 %v476, %v693
  %v770 = vadd.f32 %v520, %v737
  %v771 = vadd.f32 %v479, %v696
  %v772 = vadd.f32 %v523, %v740
  %v773 = vadd.f32 %v481, %v698
  %v774 = vadd.f32 %v525, %v742
  %v775 = vadd.f32 %v484, %v701
  %v776 = vadd.f32 %v528, %v745
  %v777 = vadd.f32 %v486, %v703
  %v778 = vadd.f32 %v530, %v747
  %v779 = vadd.f32 %v489, %v706
  %v780 = vadd.f32 %v533, %v750
  %v781 = vadd.f32 %v491, %v708
  %v782 = vadd.f32 %v535, %v752
  %v783 = vadd.f32 %v494, %v711
  %v784 = vadd.f32 %v538, %v755
  %v785 = vadd.f32 %v496, %v713
  %v786 = vadd.f32 %v540, %v757
  %s787 = scalar_lea.vmem %s1, 288
  %v788 = vld [vmem:[%s787] sm:$0xff]
  %v789 = vld [vmem:[%s787 + $0x8] sm:$0xff]
  %v790 = vld [vmem:[%s787 + $0x10] sm:$0xff]
  %v791 = vld [vmem:[%s787 + $0x18] sm:$0xff]
  %v792 = vld [vmem:[%s787 + $0x20] sm:$0xff]
  %v793 = vld [vmem:[%s787 + $0x28] sm:$0xff]
  %v794 = vld [vmem:[%s787 + $0x30] sm:$0xff]
  %v795 = vld [vmem:[%s787 + $0x38] sm:$0xff]
  %v796 = vld [vmem:[%s787 + $0x40] sm:$0xff]
  %v797 = vld [vmem:[%s787 + $0x48] sm:$0xff]
  %v798 = vld [vmem:[%s787 + $0x50] sm:$0xff]
  %v799 = vld [vmem:[%s787 + $0x58] sm:$0xff]
  %v814 = vunpack.c.l.b16 %v90
  %v815 = vunpack.c.l.b16 %v91
  %v816 = vunpack.c.l.b16 %v92
  %v817 = vunpack.c.l.b16 %v93
  %v818 = vunpack.c.l.b16 %v94
  %v819 = vunpack.c.l.b16 %v95
  %v820 = vunpack.c.l.b16 %v96
  %v821 = vunpack.c.l.b16 %v97
  %v822 = vunpack.c.l.b16 %v98
  %v823 = vunpack.c.l.b16 %v99
  %v824 = vunpack.c.l.b16 %v100
  %v825 = vunpack.c.l.b16 %v101
  %v826 = vunpack.c.l.b16 %v102
  %v827 = vunpack.c.l.b16 %v103
  %v828 = vpack.c.b16 %v815, %v814
  %v829 = vpack.c.b16 %v817, %v816
  %v830 = vpack.c.b16 %v819, %v818
  %v831 = vpack.c.b16 %v821, %v820
  %v832 = vpack.c.b16 %v823, %v822
  %v833 = vpack.c.b16 %v825, %v824
  %v834 = vpack.c.b16 %v827, %v826
  %v847 = vunpack.c.l.b16 %v788
  %v848 = vunpack.c.h.b16 %v788
  %v849 = vunpack.c.l.b16 %v789
  %v850 = vunpack.c.h.b16 %v789
  %v851 = vunpack.c.l.b16 %v790
  %v852 = vunpack.c.h.b16 %v790
  %v853 = vunpack.c.l.b16 %v791
  %v854 = vunpack.c.h.b16 %v791
  %v855 = vunpack.c.l.b16 %v792
  %v856 = vunpack.c.h.b16 %v792
  %v857 = vunpack.c.l.b16 %v793
  %v858 = vunpack.c.h.b16 %v793
  %v859 = vunpack.c.l.b16 %v794
  %v860 = vunpack.c.h.b16 %v794
  %v861 = vunpack.c.l.b16 %v795
  %v862 = vunpack.c.h.b16 %v795
  %v863 = vunpack.c.l.b16 %v796
  %v864 = vunpack.c.h.b16 %v796
  %v865 = vunpack.c.l.b16 %v797
  %v866 = vunpack.c.h.b16 %v797
  %v867 = vunpack.c.l.b16 %v798
  %v868 = vunpack.c.h.b16 %v798
  %v869 = vunpack.c.l.b16 %v799
  %v870 = vunpack.c.h.b16 %v799
  %v871 = vpack.c.b16 %v849, %v847
  %v872 = vpack.c.b16 %v850, %v848
  %v873 = vpack.c.b16 %v853, %v851
  %v874 = vpack.c.b16 %v854, %v852
  %v875 = vpack.c.b16 %v857, %v855
  %v876 = vpack.c.b16 %v858, %v856
  %v877 = vpack.c.b16 %v861, %v859
  %v878 = vpack.c.b16 %v862, %v860
  %v879 = vpack.c.b16 %v865, %v863
  %v880 = vpack.c.b16 %v866, %v864
  %v881 = vpack.c.b16 %v869, %v867
  %v882 = vpack.c.b16 %v870, %v868
  %v896 = vsel %vm228, %v828, 0
  %v899 = vsel %vm228, %v829, 0
  %v902 = vsel %vm228, %v830, 0
  %v905 = vsel %vm228, %v831, 0
  %v908 = vsel %vm228, %v832, 0
  %v911 = vsel %vm228, %v833, 0
  %v914 = vsel %vm228, %v834, 0
  %916 = vmatpush.bf16.msra.mxu0 0
  %917 = vmatpush.bf16.msra.mxu0 0
  %918 = vmatpush.bf16.msra.mxu0 %v881
  %919 = vmatpush.bf16.msra.mxu0 %v879
  %920 = vmatpush.bf16.msra.mxu0 %v877
  %921 = vmatpush.bf16.msra.mxu0 %v875
  %922 = vmatpush.bf16.msra.mxu0 %v873
  %923 = vmatpush.bf16.msra.mxu0 %v871
  %924 = vmatmul.bf16.gmra.mxu0 %v896
  %v925 = vpop.f32.mrf.mxu0
  %v926 = vadd.f32 0.0, %v925
  %v927 = vpop.f32.mrf.mxu0
  %v928 = vadd.f32 0.0, %v927
  %929 = vmatmul.bf16.gmra.mxu0 %v899
  %v930 = vpop.f32.mrf.mxu0
  %v931 = vadd.f32 0.0, %v930
  %v932 = vpop.f32.mrf.mxu0
  %v933 = vadd.f32 0.0, %v932
  %934 = vmatmul.bf16.gmra.mxu0 %v902
  %v935 = vpop.f32.mrf.mxu0
  %v936 = vadd.f32 0.0, %v935
  %v937 = vpop.f32.mrf.mxu0
  %v938 = vadd.f32 0.0, %v937
  %939 = vmatmul.bf16.gmra.mxu0 %v905
  %v940 = vpop.f32.mrf.mxu0
  %v941 = vadd.f32 0.0, %v940
  %v942 = vpop.f32.mrf.mxu0
  %v943 = vadd.f32 0.0, %v942
  %944 = vmatmul.bf16.gmra.mxu0 %v908
  %v945 = vpop.f32.mrf.mxu0
  %v946 = vadd.f32 0.0, %v945
  %v947 = vpop.f32.mrf.mxu0
  %v948 = vadd.f32 0.0, %v947
  %949 = vmatmul.bf16.gmra.mxu0 %v911
  %v950 = vpop.f32.mrf.mxu0
  %v951 = vadd.f32 0.0, %v950
  %v952 = vpop.f32.mrf.mxu0
  %v953 = vadd.f32 0.0, %v952
  %954 = vmatmul.bf16.gmra.mxu0 %v914
  %v955 = vpop.f32.mrf.mxu0
  %v956 = vadd.f32 0.0, %v955
  %v957 = vpop.f32.mrf.mxu0
  %v958 = vadd.f32 0.0, %v957
  %959 = vdwg.mxu0
  %960 = vmatpush.bf16.msra.mxu0 0
  %961 = vmatpush.bf16.msra.mxu0 0
  %962 = vmatpush.bf16.msra.mxu0 %v882
  %963 = vmatpush.bf16.msra.mxu0 %v880
  %964 = vmatpush.bf16.msra.mxu0 %v878
  %965 = vmatpush.bf16.msra.mxu0 %v876
  %966 = vmatpush.bf16.msra.mxu0 %v874
  %967 = vmatpush.bf16.msra.mxu0 %v872
  %968 = vmatmul.bf16.gmra.mxu0 %v896
  %v969 = vpop.f32.mrf.mxu0
  %v970 = vadd.f32 0.0, %v969
  %v971 = vpop.f32.mrf.mxu0
  %v972 = vadd.f32 0.0, %v971
  %973 = vmatmul.bf16.gmra.mxu0 %v899
  %v974 = vpop.f32.mrf.mxu0
  %v975 = vadd.f32 0.0, %v974
  %v976 = vpop.f32.mrf.mxu0
  %v977 = vadd.f32 0.0, %v976
  %978 = vmatmul.bf16.gmra.mxu0 %v902
  %v979 = vpop.f32.mrf.mxu0
  %v980 = vadd.f32 0.0, %v979
  %v981 = vpop.f32.mrf.mxu0
  %v982 = vadd.f32 0.0, %v981
  %983 = vmatmul.bf16.gmra.mxu0 %v905
  %v984 = vpop.f32.mrf.mxu0
  %v985 = vadd.f32 0.0, %v984
  %v986 = vpop.f32.mrf.mxu0
  %v987 = vadd.f32 0.0, %v986
  %988 = vmatmul.bf16.gmra.mxu0 %v908
  %v989 = vpop.f32.mrf.mxu0
  %v990 = vadd.f32 0.0, %v989
  %v991 = vpop.f32.mrf.mxu0
  %v992 = vadd.f32 0.0, %v991
  %993 = vmatmul.bf16.gmra.mxu0 %v911
  %v994 = vpop.f32.mrf.mxu0
  %v995 = vadd.f32 0.0, %v994
  %v996 = vpop.f32.mrf.mxu0
  %v997 = vadd.f32 0.0, %v996
  %998 = vmatmul.bf16.gmra.mxu0 %v914
  %v999 = vpop.f32.mrf.mxu0
  %v1000 = vadd.f32 0.0, %v999
  %v1001 = vpop.f32.mrf.mxu0
  %v1002 = vadd.f32 0.0, %v1001
  %1003 = vdwg.mxu0
  %v1004 = vadd.f32 %v759, %v926
  %v1005 = vadd.f32 %v760, %v970
  %v1006 = vadd.f32 %v761, %v928
  %v1007 = vadd.f32 %v762, %v972
  %v1008 = vadd.f32 %v763, %v931
  %v1009 = vadd.f32 %v764, %v975
  %v1010 = vadd.f32 %v765, %v933
  %v1011 = vadd.f32 %v766, %v977
  %v1012 = vadd.f32 %v767, %v936
  %v1013 = vadd.f32 %v768, %v980
  %v1014 = vadd.f32 %v769, %v938
  %v1015 = vadd.f32 %v770, %v982
  %v1016 = vadd.f32 %v771, %v941
  %v1017 = vadd.f32 %v772, %v985
  %v1018 = vadd.f32 %v773, %v943
  %v1019 = vadd.f32 %v774, %v987
  %v1020 = vadd.f32 %v775, %v946
  %v1021 = vadd.f32 %v776, %v990
  %v1022 = vadd.f32 %v777, %v948
  %v1023 = vadd.f32 %v778, %v992
  %v1024 = vadd.f32 %v779, %v951
  %v1025 = vadd.f32 %v780, %v995
  %v1026 = vadd.f32 %v781, %v953
  %v1027 = vadd.f32 %v782, %v997
  %v1028 = vadd.f32 %v783, %v956
  %v1029 = vadd.f32 %v784, %v1000
  %v1030 = vadd.f32 %v785, %v958
  %v1031 = vadd.f32 %v786, %v1002
  %s1032 = scalar_lea.vmem %s1, 384
  %v1033 = vld [vmem:[%s1032] sm:$0xff]
  %v1034 = vld [vmem:[%s1032 + $0x8] sm:$0xff]
  %v1035 = vld [vmem:[%s1032 + $0x10] sm:$0xff]
  %v1036 = vld [vmem:[%s1032 + $0x18] sm:$0xff]
  %v1037 = vld [vmem:[%s1032 + $0x20] sm:$0xff]
  %v1038 = vld [vmem:[%s1032 + $0x28] sm:$0xff]
  %v1039 = vld [vmem:[%s1032 + $0x30] sm:$0xff]
  %v1040 = vld [vmem:[%s1032 + $0x38] sm:$0xff]
  %v1041 = vld [vmem:[%s1032 + $0x40] sm:$0xff]
  %v1042 = vld [vmem:[%s1032 + $0x48] sm:$0xff]
  %v1043 = vld [vmem:[%s1032 + $0x50] sm:$0xff]
  %v1044 = vld [vmem:[%s1032 + $0x58] sm:$0xff]
  %v1047 = vunpack.c.l.b16 %v53
  %v1048 = vunpack.c.l.b16 %v54
  %v1049 = vpack.c.b16 %v1048, %v1047
  %v1062 = vunpack.c.l.b16 %v1033
  %v1063 = vunpack.c.h.b16 %v1033
  %v1064 = vunpack.c.l.b16 %v1034
  %v1065 = vunpack.c.h.b16 %v1034
  %v1066 = vunpack.c.l.b16 %v1035
  %v1067 = vunpack.c.h.b16 %v1035
  %v1068 = vunpack.c.l.b16 %v1036
  %v1069 = vunpack.c.h.b16 %v1036
  %v1070 = vunpack.c.l.b16 %v1037
  %v1071 = vunpack.c.h.b16 %v1037
  %v1072 = vunpack.c.l.b16 %v1038
  %v1073 = vunpack.c.h.b16 %v1038
  %v1074 = vunpack.c.l.b16 %v1039
  %v1075 = vunpack.c.h.b16 %v1039
  %v1076 = vunpack.c.l.b16 %v1040
  %v1077 = vunpack.c.h.b16 %v1040
  %v1078 = vunpack.c.l.b16 %v1041
  %v1079 = vunpack.c.h.b16 %v1041
  %v1080 = vunpack.c.l.b16 %v1042
  %v1081 = vunpack.c.h.b16 %v1042
  %v1082 = vunpack.c.l.b16 %v1043
  %v1083 = vunpack.c.h.b16 %v1043
  %v1084 = vunpack.c.l.b16 %v1044
  %v1085 = vunpack.c.h.b16 %v1044
  %v1086 = vpack.c.b16 %v1064, %v1062
  %v1087 = vpack.c.b16 %v1065, %v1063
  %v1088 = vpack.c.b16 %v1068, %v1066
  %v1089 = vpack.c.b16 %v1069, %v1067
  %v1090 = vpack.c.b16 %v1072, %v1070
  %v1091 = vpack.c.b16 %v1073, %v1071
  %v1092 = vpack.c.b16 %v1076, %v1074
  %v1093 = vpack.c.b16 %v1077, %v1075
  %v1094 = vpack.c.b16 %v1080, %v1078
  %v1095 = vpack.c.b16 %v1081, %v1079
  %v1096 = vpack.c.b16 %v1084, %v1082
  %v1097 = vpack.c.b16 %v1085, %v1083
  %v1111 = vsel %vm228, %v1049, 0
  %1113 = vmatpush.bf16.msra.mxu0 0
  %1114 = vmatpush.bf16.msra.mxu0 0
  %1115 = vmatpush.bf16.msra.mxu0 %v1096
  %1116 = vmatpush.bf16.msra.mxu0 %v1094
  %1117 = vmatpush.bf16.msra.mxu0 %v1092
  %1118 = vmatpush.bf16.msra.mxu0 %v1090
  %1119 = vmatpush.bf16.msra.mxu0 %v1088
  %1120 = vmatpush.bf16.msra.mxu0 %v1086
  %1121 = vmatmul.bf16.gmra.mxu0 %v437
  %v1122 = vpop.f32.mrf.mxu0
  %v1123 = vadd.f32 0.0, %v1122
  %v1124 = vpop.f32.mrf.mxu0
  %v1125 = vadd.f32 0.0, %v1124
  %1126 = vmatmul.bf16.gmra.mxu0 %v440
  %v1127 = vpop.f32.mrf.mxu0
  %v1128 = vadd.f32 0.0, %v1127
  %v1129 = vpop.f32.mrf.mxu0
  %v1130 = vadd.f32 0.0, %v1129
  %1131 = vmatmul.bf16.gmra.mxu0 %v443
  %v1132 = vpop.f32.mrf.mxu0
  %v1133 = vadd.f32 0.0, %v1132
  %v1134 = vpop.f32.mrf.mxu0
  %v1135 = vadd.f32 0.0, %v1134
  %1136 = vmatmul.bf16.gmra.mxu0 %v446
  %v1137 = vpop.f32.mrf.mxu0
  %v1138 = vadd.f32 0.0, %v1137
  %v1139 = vpop.f32.mrf.mxu0
  %v1140 = vadd.f32 0.0, %v1139
  %1141 = vmatmul.bf16.gmra.mxu0 %v449
  %v1142 = vpop.f32.mrf.mxu0
  %v1143 = vadd.f32 0.0, %v1142
  %v1144 = vpop.f32.mrf.mxu0
  %v1145 = vadd.f32 0.0, %v1144
  %1146 = vmatmul.bf16.gmra.mxu0 %v452
  %v1147 = vpop.f32.mrf.mxu0
  %v1148 = vadd.f32 0.0, %v1147
  %v1149 = vpop.f32.mrf.mxu0
  %v1150 = vadd.f32 0.0, %v1149
  %1151 = vmatmul.bf16.gmra.mxu0 %v1111
  %v1152 = vpop.f32.mrf.mxu0
  %v1153 = vadd.f32 0.0, %v1152
  %v1154 = vpop.f32.mrf.mxu0
  %v1155 = vadd.f32 0.0, %v1154
  %1156 = vdwg.mxu0
  %1157 = vmatpush.bf16.msra.mxu0 0
  %1158 = vmatpush.bf16.msra.mxu0 0
  %1159 = vmatpush.bf16.msra.mxu0 %v1097
  %1160 = vmatpush.bf16.msra.mxu0 %v1095
  %1161 = vmatpush.bf16.msra.mxu0 %v1093
  %1162 = vmatpush.bf16.msra.mxu0 %v1091
  %1163 = vmatpush.bf16.msra.mxu0 %v1089
  %1164 = vmatpush.bf16.msra.mxu0 %v1087
  %1165 = vmatmul.bf16.gmra.mxu0 %v437
  %v1166 = vpop.f32.mrf.mxu0
  %v1167 = vadd.f32 0.0, %v1166
  %v1168 = vpop.f32.mrf.mxu0
  %v1169 = vadd.f32 0.0, %v1168
  %1170 = vmatmul.bf16.gmra.mxu0 %v440
  %v1171 = vpop.f32.mrf.mxu0
  %v1172 = vadd.f32 0.0, %v1171
  %v1173 = vpop.f32.mrf.mxu0
  %v1174 = vadd.f32 0.0, %v1173
  %1175 = vmatmul.bf16.gmra.mxu0 %v443
  %v1176 = vpop.f32.mrf.mxu0
  %v1177 = vadd.f32 0.0, %v1176
  %v1178 = vpop.f32.mrf.mxu0
  %v1179 = vadd.f32 0.0, %v1178
  %1180 = vmatmul.bf16.gmra.mxu0 %v446
  %v1181 = vpop.f32.mrf.mxu0
  %v1182 = vadd.f32 0.0, %v1181
  %v1183 = vpop.f32.mrf.mxu0
  %v1184 = vadd.f32 0.0, %v1183
  %1185 = vmatmul.bf16.gmra.mxu0 %v449
  %v1186 = vpop.f32.mrf.mxu0
  %v1187 = vadd.f32 0.0, %v1186
  %v1188 = vpop.f32.mrf.mxu0
  %v1189 = vadd.f32 0.0, %v1188
  %1190 = vmatmul.bf16.gmra.mxu0 %v452
  %v1191 = vpop.f32.mrf.mxu0
  %v1192 = vadd.f32 0.0, %v1191
  %v1193 = vpop.f32.mrf.mxu0
  %v1194 = vadd.f32 0.0, %v1193
  %1195 = vmatmul.bf16.gmra.mxu0 %v1111
  %v1196 = vpop.f32.mrf.mxu0
  %v1197 = vadd.f32 0.0, %v1196
  %v1198 = vpop.f32.mrf.mxu0
  %v1199 = vadd.f32 0.0, %v1198
  %1200 = vdwg.mxu0
  %v1201 = vadd.f32 %v1004, %v1123
  %v1202 = vadd.f32 %v1005, %v1167
  %v1203 = vadd.f32 %v1006, %v1125
  %v1204 = vadd.f32 %v1007, %v1169
  %v1205 = vadd.f32 %v1008, %v1128
  %v1206 = vadd.f32 %v1009, %v1172
  %v1207 = vadd.f32 %v1010, %v1130
  %v1208 = vadd.f32 %v1011, %v1174
  %v1209 = vadd.f32 %v1012, %v1133
  %v1210 = vadd.f32 %v1013, %v1177
  %v1211 = vadd.f32 %v1014, %v1135
  %v1212 = vadd.f32 %v1015, %v1179
  %v1213 = vadd.f32 %v1016, %v1138
  %v1214 = vadd.f32 %v1017, %v1182
  %v1215 = vadd.f32 %v1018, %v1140
  %v1216 = vadd.f32 %v1019, %v1184
  %v1217 = vadd.f32 %v1020, %v1143
  %v1218 = vadd.f32 %v1021, %v1187
  %v1219 = vadd.f32 %v1022, %v1145
  %v1220 = vadd.f32 %v1023, %v1189
  %v1221 = vadd.f32 %v1024, %v1148
  %v1222 = vadd.f32 %v1025, %v1192
  %v1223 = vadd.f32 %v1026, %v1150
  %v1224 = vadd.f32 %v1027, %v1194
  %v1225 = vadd.f32 %v1028, %v1153
  %v1226 = vadd.f32 %v1029, %v1197
  %v1227 = vadd.f32 %v1030, %v1155
  %v1228 = vadd.f32 %v1031, %v1199
  %v1230 = vperm.slane %v106, 0
  %v1231 = vperm.slane %v106, 1
  %v1234 = vadd.f32 %v1201, %v1230
  %v1235 = vadd.f32 %v1202, %v1231
  %v1236 = vadd.f32 %v1203, %v1230
  %v1237 = vadd.f32 %v1204, %v1231
  %v1238 = vadd.f32 %v1205, %v1230
  %v1239 = vadd.f32 %v1206, %v1231
  %v1240 = vadd.f32 %v1207, %v1230
  %v1241 = vadd.f32 %v1208, %v1231
  %v1242 = vadd.f32 %v1209, %v1230
  %v1243 = vadd.f32 %v1210, %v1231
  %v1244 = vadd.f32 %v1211, %v1230
  %v1245 = vadd.f32 %v1212, %v1231
  %v1246 = vadd.f32 %v1213, %v1230
  %v1247 = vadd.f32 %v1214, %v1231
  %v1248 = vadd.f32 %v1215, %v1230
  %v1249 = vadd.f32 %v1216, %v1231
  %v1250 = vadd.f32 %v1217, %v1230
  %v1251 = vadd.f32 %v1218, %v1231
  %v1252 = vadd.f32 %v1219, %v1230
  %v1253 = vadd.f32 %v1220, %v1231
  %v1254 = vadd.f32 %v1221, %v1230
  %v1255 = vadd.f32 %v1222, %v1231
  %v1256 = vadd.f32 %v1223, %v1230
  %v1257 = vadd.f32 %v1224, %v1231
  %v1258 = vadd.f32 %v1225, %v1230
  %v1259 = vadd.f32 %v1226, %v1231
  %v1260 = vadd.f32 %v1227, %v1230
  %v1261 = vadd.f32 %v1228, %v1231
  %v1262 = vmax.f32 %v1234, 0.0
  %v1263 = vmax.f32 %v1235, 0.0
  %v1264 = vmax.f32 %v1236, 0.0
  %v1265 = vmax.f32 %v1237, 0.0
  %v1266 = vmax.f32 %v1238, 0.0
  %v1267 = vmax.f32 %v1239, 0.0
  %v1268 = vmax.f32 %v1240, 0.0
  %v1269 = vmax.f32 %v1241, 0.0
  %v1270 = vmax.f32 %v1242, 0.0
  %v1271 = vmax.f32 %v1243, 0.0
  %v1272 = vmax.f32 %v1244, 0.0
  %v1273 = vmax.f32 %v1245, 0.0
  %v1274 = vmax.f32 %v1246, 0.0
  %v1275 = vmax.f32 %v1247, 0.0
  %v1276 = vmax.f32 %v1248, 0.0
  %v1277 = vmax.f32 %v1249, 0.0
  %v1278 = vmax.f32 %v1250, 0.0
  %v1279 = vmax.f32 %v1251, 0.0
  %v1280 = vmax.f32 %v1252, 0.0
  %v1281 = vmax.f32 %v1253, 0.0
  %v1282 = vmax.f32 %v1254, 0.0
  %v1283 = vmax.f32 %v1255, 0.0
  %v1284 = vmax.f32 %v1256, 0.0
  %v1285 = vmax.f32 %v1257, 0.0
  %v1286 = vmax.f32 %v1258, 0.0
  %v1287 = vmax.f32 %v1259, 0.0
  %v1288 = vmax.f32 %v1260, 0.0
  %v1289 = vmax.f32 %v1261, 0.0
  %v1290 = vmax.f32 %v1262, %v1263
  %v1291 = vmax.f32 %v1264, %v1265
  %v1292 = vmax.f32 %v1266, %v1267
  %v1293 = vmax.f32 %v1268, %v1269
  %v1294 = vmax.f32 %v1270, %v1271
  %v1295 = vmax.f32 %v1272, %v1273
  %v1296 = vmax.f32 %v1274, %v1275
  %v1297 = vmax.f32 %v1276, %v1277
  %v1298 = vmax.f32 %v1278, %v1279
  %v1299 = vmax.f32 %v1280, %v1281
  %v1300 = vmax.f32 %v1282, %v1283
  %v1301 = vmax.f32 %v1284, %v1285
  %v1302 = vmax.f32 %v1286, %v1287
  %v1303 = vmax.f32 %v1288, %v1289
  %1304 = vmatpush.bf16.msra.mxu0 0
  %1305 = vmatpush.bf16.msra.mxu0 0
  %1306 = vmatpush.bf16.msra.mxu0 %v214
  %1307 = vmatpush.bf16.msra.mxu0 %v212
  %1308 = vmatpush.bf16.msra.mxu0 %v210
  %1309 = vmatpush.bf16.msra.mxu0 %v208
  %1310 = vmatpush.bf16.msra.mxu0 %v206
  %1311 = vmatpush.bf16.msra.mxu0 %v204
  %1312 = vmatmul.bf16.gmra.mxu0 %v651
  %v1313 = vpop.f32.mrf.mxu0
  %v1314 = vadd.f32 0.0, %v1313
  %v1315 = vpop.f32.mrf.mxu0
  %v1316 = vadd.f32 0.0, %v1315
  %1317 = vmatmul.bf16.gmra.mxu0 %v654
  %v1318 = vpop.f32.mrf.mxu0
  %v1319 = vadd.f32 0.0, %v1318
  %v1320 = vpop.f32.mrf.mxu0
  %v1321 = vadd.f32 0.0, %v1320
  %1322 = vmatmul.bf16.gmra.mxu0 %v657
  %v1323 = vpop.f32.mrf.mxu0
  %v1324 = vadd.f32 0.0, %v1323
  %v1325 = vpop.f32.mrf.mxu0
  %v1326 = vadd.f32 0.0, %v1325
  %1327 = vmatmul.bf16.gmra.mxu0 %v660
  %v1328 = vpop.f32.mrf.mxu0
  %v1329 = vadd.f32 0.0, %v1328
  %v1330 = vpop.f32.mrf.mxu0
  %v1331 = vadd.f32 0.0, %v1330
  %1332 = vmatmul.bf16.gmra.mxu0 %v663
  %v1333 = vpop.f32.mrf.mxu0
  %v1334 = vadd.f32 0.0, %v1333
  %v1335 = vpop.f32.mrf.mxu0
  %v1336 = vadd.f32 0.0, %v1335
  %1337 = vmatmul.bf16.gmra.mxu0 %v666
  %v1338 = vpop.f32.mrf.mxu0
  %v1339 = vadd.f32 0.0, %v1338
  %v1340 = vpop.f32.mrf.mxu0
  %v1341 = vadd.f32 0.0, %v1340
  %1342 = vmatmul.bf16.gmra.mxu0 %v669
  %v1343 = vpop.f32.mrf.mxu0
  %v1344 = vadd.f32 0.0, %v1343
  %v1345 = vpop.f32.mrf.mxu0
  %v1346 = vadd.f32 0.0, %v1345
  %1347 = vdwg.mxu0
  %1348 = vmatpush.bf16.msra.mxu0 0
  %1349 = vmatpush.bf16.msra.mxu0 0
  %1350 = vmatpush.bf16.msra.mxu0 %v215
  %1351 = vmatpush.bf16.msra.mxu0 %v213
  %1352 = vmatpush.bf16.msra.mxu0 %v211
  %1353 = vmatpush.bf16.msra.mxu0 %v209
  %1354 = vmatpush.bf16.msra.mxu0 %v207
  %1355 = vmatpush.bf16.msra.mxu0 %v205
  %1356 = vmatmul.bf16.gmra.mxu0 %v651
  %v1357 = vpop.f32.mrf.mxu0
  %v1358 = vadd.f32 0.0, %v1357
  %v1359 = vpop.f32.mrf.mxu0
  %v1360 = vadd.f32 0.0, %v1359
  %1361 = vmatmul.bf16.gmra.mxu0 %v654
  %v1362 = vpop.f32.mrf.mxu0
  %v1363 = vadd.f32 0.0, %v1362
  %v1364 = vpop.f32.mrf.mxu0
  %v1365 = vadd.f32 0.0, %v1364
  %1366 = vmatmul.bf16.gmra.mxu0 %v657
  %v1367 = vpop.f32.mrf.mxu0
  %v1368 = vadd.f32 0.0, %v1367
  %v1369 = vpop.f32.mrf.mxu0
  %v1370 = vadd.f32 0.0, %v1369
  %1371 = vmatmul.bf16.gmra.mxu0 %v660
  %v1372 = vpop.f32.mrf.mxu0
  %v1373 = vadd.f32 0.0, %v1372
  %v1374 = vpop.f32.mrf.mxu0
  %v1375 = vadd.f32 0.0, %v1374
  %1376 = vmatmul.bf16.gmra.mxu0 %v663
  %v1377 = vpop.f32.mrf.mxu0
  %v1378 = vadd.f32 0.0, %v1377
  %v1379 = vpop.f32.mrf.mxu0
  %v1380 = vadd.f32 0.0, %v1379
  %1381 = vmatmul.bf16.gmra.mxu0 %v666
  %v1382 = vpop.f32.mrf.mxu0
  %v1383 = vadd.f32 0.0, %v1382
  %v1384 = vpop.f32.mrf.mxu0
  %v1385 = vadd.f32 0.0, %v1384
  %1386 = vmatmul.bf16.gmra.mxu0 %v669
  %v1387 = vpop.f32.mrf.mxu0
  %v1388 = vadd.f32 0.0, %v1387
  %v1389 = vpop.f32.mrf.mxu0
  %v1390 = vadd.f32 0.0, %v1389
  %1391 = vdwg.mxu0
  %1392 = vmatpush.bf16.msra.mxu0 0
  %1393 = vmatpush.bf16.msra.mxu0 0
  %1394 = vmatpush.bf16.msra.mxu0 %v419
  %1395 = vmatpush.bf16.msra.mxu0 %v417
  %1396 = vmatpush.bf16.msra.mxu0 %v415
  %1397 = vmatpush.bf16.msra.mxu0 %v413
  %1398 = vmatpush.bf16.msra.mxu0 %v411
  %1399 = vmatpush.bf16.msra.mxu0 %v409
  %1400 = vmatmul.bf16.gmra.mxu0 %v230
  %v1401 = vpop.f32.mrf.mxu0
  %v1402 = vadd.f32 %v1314, %v1401
  %v1403 = vpop.f32.mrf.mxu0
  %v1404 = vadd.f32 %v1316, %v1403
  %1405 = vmatmul.bf16.gmra.mxu0 %v233
  %v1406 = vpop.f32.mrf.mxu0
  %v1407 = vadd.f32 %v1319, %v1406
  %v1408 = vpop.f32.mrf.mxu0
  %v1409 = vadd.f32 %v1321, %v1408
  %1410 = vmatmul.bf16.gmra.mxu0 %v236
  %v1411 = vpop.f32.mrf.mxu0
  %v1412 = vadd.f32 %v1324, %v1411
  %v1413 = vpop.f32.mrf.mxu0
  %v1414 = vadd.f32 %v1326, %v1413
  %1415 = vmatmul.bf16.gmra.mxu0 %v239
  %v1416 = vpop.f32.mrf.mxu0
  %v1417 = vadd.f32 %v1329, %v1416
  %v1418 = vpop.f32.mrf.mxu0
  %v1419 = vadd.f32 %v1331, %v1418
  %1420 = vmatmul.bf16.gmra.mxu0 %v242
  %v1421 = vpop.f32.mrf.mxu0
  %v1422 = vadd.f32 %v1334, %v1421
  %v1423 = vpop.f32.mrf.mxu0
  %v1424 = vadd.f32 %v1336, %v1423
  %1425 = vmatmul.bf16.gmra.mxu0 %v245
  %v1426 = vpop.f32.mrf.mxu0
  %v1427 = vadd.f32 %v1339, %v1426
  %v1428 = vpop.f32.mrf.mxu0
  %v1429 = vadd.f32 %v1341, %v1428
  %1430 = vmatmul.bf16.gmra.mxu0 %v248
  %v1431 = vpop.f32.mrf.mxu0
  %v1432 = vadd.f32 %v1344, %v1431
  %v1433 = vpop.f32.mrf.mxu0
  %v1434 = vadd.f32 %v1346, %v1433
  %1435 = vdwg.mxu0
  %1436 = vmatpush.bf16.msra.mxu0 0
  %1437 = vmatpush.bf16.msra.mxu0 0
  %1438 = vmatpush.bf16.msra.mxu0 %v420
  %1439 = vmatpush.bf16.msra.mxu0 %v418
  %1440 = vmatpush.bf16.msra.mxu0 %v416
  %1441 = vmatpush.bf16.msra.mxu0 %v414
  %1442 = vmatpush.bf16.msra.mxu0 %v412
  %1443 = vmatpush.bf16.msra.mxu0 %v410
  %1444 = vmatmul.bf16.gmra.mxu0 %v230
  %v1445 = vpop.f32.mrf.mxu0
  %v1446 = vadd.f32 %v1358, %v1445
  %v1447 = vpop.f32.mrf.mxu0
  %v1448 = vadd.f32 %v1360, %v1447
  %1449 = vmatmul.bf16.gmra.mxu0 %v233
  %v1450 = vpop.f32.mrf.mxu0
  %v1451 = vadd.f32 %v1363, %v1450
  %v1452 = vpop.f32.mrf.mxu0
  %v1453 = vadd.f32 %v1365, %v1452
  %1454 = vmatmul.bf16.gmra.mxu0 %v236
  %v1455 = vpop.f32.mrf.mxu0
  %v1456 = vadd.f32 %v1368, %v1455
  %v1457 = vpop.f32.mrf.mxu0
  %v1458 = vadd.f32 %v1370, %v1457
  %1459 = vmatmul.bf16.gmra.mxu0 %v239
  %v1460 = vpop.f32.mrf.mxu0
  %v1461 = vadd.f32 %v1373, %v1460
  %v1462 = vpop.f32.mrf.mxu0
  %v1463 = vadd.f32 %v1375, %v1462
  %1464 = vmatmul.bf16.gmra.mxu0 %v242
  %v1465 = vpop.f32.mrf.mxu0
  %v1466 = vadd.f32 %v1378, %v1465
  %v1467 = vpop.f32.mrf.mxu0
  %v1468 = vadd.f32 %v1380, %v1467
  %1469 = vmatmul.bf16.gmra.mxu0 %v245
  %v1470 = vpop.f32.mrf.mxu0
  %v1471 = vadd.f32 %v1383, %v1470
  %v1472 = vpop.f32.mrf.mxu0
  %v1473 = vadd.f32 %v1385, %v1472
  %1474 = vmatmul.bf16.gmra.mxu0 %v248
  %v1475 = vpop.f32.mrf.mxu0
  %v1476 = vadd.f32 %v1388, %v1475
  %v1477 = vpop.f32.mrf.mxu0
  %v1478 = vadd.f32 %v1390, %v1477
  %1479 = vdwg.mxu0
  %1480 = vmatpush.bf16.msra.mxu0 0
  %1481 = vmatpush.bf16.msra.mxu0 0
  %1482 = vmatpush.bf16.msra.mxu0 %v636
  %1483 = vmatpush.bf16.msra.mxu0 %v634
  %1484 = vmatpush.bf16.msra.mxu0 %v632
  %1485 = vmatpush.bf16.msra.mxu0 %v630
  %1486 = vmatpush.bf16.msra.mxu0 %v628
  %1487 = vmatpush.bf16.msra.mxu0 %v626
  %1488 = vmatmul.bf16.gmra.mxu0 %v896
  %v1489 = vpop.f32.mrf.mxu0
  %v1490 = vadd.f32 0.0, %v1489
  %v1491 = vpop.f32.mrf.mxu0
  %v1492 = vadd.f32 0.0, %v1491
  %1493 = vmatmul.bf16.gmra.mxu0 %v899
  %v1494 = vpop.f32.mrf.mxu0
  %v1495 = vadd.f32 0.0, %v1494
  %v1496 = vpop.f32.mrf.mxu0
  %v1497 = vadd.f32 0.0, %v1496
  %1498 = vmatmul.bf16.gmra.mxu0 %v902
  %v1499 = vpop.f32.mrf.mxu0
  %v1500 = vadd.f32 0.0, %v1499
  %v1501 = vpop.f32.mrf.mxu0
  %v1502 = vadd.f32 0.0, %v1501
  %1503 = vmatmul.bf16.gmra.mxu0 %v905
  %v1504 = vpop.f32.mrf.mxu0
  %v1505 = vadd.f32 0.0, %v1504
  %v1506 = vpop.f32.mrf.mxu0
  %v1507 = vadd.f32 0.0, %v1506
  %1508 = vmatmul.bf16.gmra.mxu0 %v908
  %v1509 = vpop.f32.mrf.mxu0
  %v1510 = vadd.f32 0.0, %v1509
  %v1511 = vpop.f32.mrf.mxu0
  %v1512 = vadd.f32 0.0, %v1511
  %1513 = vmatmul.bf16.gmra.mxu0 %v911
  %v1514 = vpop.f32.mrf.mxu0
  %v1515 = vadd.f32 0.0, %v1514
  %v1516 = vpop.f32.mrf.mxu0
  %v1517 = vadd.f32 0.0, %v1516
  %1518 = vmatmul.bf16.gmra.mxu0 %v914
  %v1519 = vpop.f32.mrf.mxu0
  %v1520 = vadd.f32 0.0, %v1519
  %v1521 = vpop.f32.mrf.mxu0
  %v1522 = vadd.f32 0.0, %v1521
  %1523 = vdwg.mxu0
  %1524 = vmatpush.bf16.msra.mxu0 0
  %1525 = vmatpush.bf16.msra.mxu0 0
  %1526 = vmatpush.bf16.msra.mxu0 %v637
  %1527 = vmatpush.bf16.msra.mxu0 %v635
  %1528 = vmatpush.bf16.msra.mxu0 %v633
  %1529 = vmatpush.bf16.msra.mxu0 %v631
  %1530 = vmatpush.bf16.msra.mxu0 %v629
  %1531 = vmatpush.bf16.msra.mxu0 %v627
  %1532 = vmatmul.bf16.gmra.mxu0 %v896
  %v1533 = vpop.f32.mrf.mxu0
  %v1534 = vadd.f32 0.0, %v1533
  %v1535 = vpop.f32.mrf.mxu0
  %v1536 = vadd.f32 0.0, %v1535
  %1537 = vmatmul.bf16.gmra.mxu0 %v899
  %v1538 = vpop.f32.mrf.mxu0
  %v1539 = vadd.f32 0.0, %v1538
  %v1540 = vpop.f32.mrf.mxu0
  %v1541 = vadd.f32 0.0, %v1540
  %1542 = vmatmul.bf16.gmra.mxu0 %v902
  %v1543 = vpop.f32.mrf.mxu0
  %v1544 = vadd.f32 0.0, %v1543
  %v1545 = vpop.f32.mrf.mxu0
  %v1546 = vadd.f32 0.0, %v1545
  %1547 = vmatmul.bf16.gmra.mxu0 %v905
  %v1548 = vpop.f32.mrf.mxu0
  %v1549 = vadd.f32 0.0, %v1548
  %v1550 = vpop.f32.mrf.mxu0
  %v1551 = vadd.f32 0.0, %v1550
  %1552 = vmatmul.bf16.gmra.mxu0 %v908
  %v1553 = vpop.f32.mrf.mxu0
  %v1554 = vadd.f32 0.0, %v1553
  %v1555 = vpop.f32.mrf.mxu0
  %v1556 = vadd.f32 0.0, %v1555
  %1557 = vmatmul.bf16.gmra.mxu0 %v911
  %v1558 = vpop.f32.mrf.mxu0
  %v1559 = vadd.f32 0.0, %v1558
  %v1560 = vpop.f32.mrf.mxu0
  %v1561 = vadd.f32 0.0, %v1560
  %1562 = vmatmul.bf16.gmra.mxu0 %v914
  %v1563 = vpop.f32.mrf.mxu0
  %v1564 = vadd.f32 0.0, %v1563
  %v1565 = vpop.f32.mrf.mxu0
  %v1566 = vadd.f32 0.0, %v1565
  %1567 = vdwg.mxu0
  %v1568 = vadd.f32 %v1402, %v1490
  %v1569 = vadd.f32 %v1446, %v1534
  %v1570 = vadd.f32 %v1404, %v1492
  %v1571 = vadd.f32 %v1448, %v1536
  %v1572 = vadd.f32 %v1407, %v1495
  %v1573 = vadd.f32 %v1451, %v1539
  %v1574 = vadd.f32 %v1409, %v1497
  %v1575 = vadd.f32 %v1453, %v1541
  %v1576 = vadd.f32 %v1412, %v1500
  %v1577 = vadd.f32 %v1456, %v1544
  %v1578 = vadd.f32 %v1414, %v1502
  %v1579 = vadd.f32 %v1458, %v1546
  %v1580 = vadd.f32 %v1417, %v1505
  %v1581 = vadd.f32 %v1461, %v1549
  %v1582 = vadd.f32 %v1419, %v1507
  %v1583 = vadd.f32 %v1463, %v1551
  %v1584 = vadd.f32 %v1422, %v1510
  %v1585 = vadd.f32 %v1466, %v1554
  %v1586 = vadd.f32 %v1424, %v1512
  %v1587 = vadd.f32 %v1468, %v1556
  %v1588 = vadd.f32 %v1427, %v1515
  %v1589 = vadd.f32 %v1471, %v1559
  %v1590 = vadd.f32 %v1429, %v1517
  %v1591 = vadd.f32 %v1473, %v1561
  %v1592 = vadd.f32 %v1432, %v1520
  %v1593 = vadd.f32 %v1476, %v1564
  %v1594 = vadd.f32 %v1434, %v1522
  %v1595 = vadd.f32 %v1478, %v1566
  %1596 = vmatpush.bf16.msra.mxu0 0
  %1597 = vmatpush.bf16.msra.mxu0 0
  %1598 = vmatpush.bf16.msra.mxu0 %v881
  %1599 = vmatpush.bf16.msra.mxu0 %v879
  %1600 = vmatpush.bf16.msra.mxu0 %v877
  %1601 = vmatpush.bf16.msra.mxu0 %v875
  %1602 = vmatpush.bf16.msra.mxu0 %v873
  %1603 = vmatpush.bf16.msra.mxu0 %v871
  %1604 = vmatmul.bf16.gmra.mxu0 %v437
  %v1605 = vpop.f32.mrf.mxu0
  %v1606 = vadd.f32 0.0, %v1605
  %v1607 = vpop.f32.mrf.mxu0
  %v1608 = vadd.f32 0.0, %v1607
  %1609 = vmatmul.bf16.gmra.mxu0 %v440
  %v1610 = vpop.f32.mrf.mxu0
  %v1611 = vadd.f32 0.0, %v1610
  %v1612 = vpop.f32.mrf.mxu0
  %v1613 = vadd.f32 0.0, %v1612
  %1614 = vmatmul.bf16.gmra.mxu0 %v443
  %v1615 = vpop.f32.mrf.mxu0
  %v1616 = vadd.f32 0.0, %v1615
  %v1617 = vpop.f32.mrf.mxu0
  %v1618 = vadd.f32 0.0, %v1617
  %1619 = vmatmul.bf16.gmra.mxu0 %v446
  %v1620 = vpop.f32.mrf.mxu0
  %v1621 = vadd.f32 0.0, %v1620
  %v1622 = vpop.f32.mrf.mxu0
  %v1623 = vadd.f32 0.0, %v1622
  %1624 = vmatmul.bf16.gmra.mxu0 %v449
  %v1625 = vpop.f32.mrf.mxu0
  %v1626 = vadd.f32 0.0, %v1625
  %v1627 = vpop.f32.mrf.mxu0
  %v1628 = vadd.f32 0.0, %v1627
  %1629 = vmatmul.bf16.gmra.mxu0 %v452
  %v1630 = vpop.f32.mrf.mxu0
  %v1631 = vadd.f32 0.0, %v1630
  %v1632 = vpop.f32.mrf.mxu0
  %v1633 = vadd.f32 0.0, %v1632
  %1634 = vmatmul.bf16.gmra.mxu0 %v1111
  %v1635 = vpop.f32.mrf.mxu0
  %v1636 = vadd.f32 0.0, %v1635
  %v1637 = vpop.f32.mrf.mxu0
  %v1638 = vadd.f32 0.0, %v1637
  %1639 = vdwg.mxu0
  %1640 = vmatpush.bf16.msra.mxu0 0
  %1641 = vmatpush.bf16.msra.mxu0 0
  %1642 = vmatpush.bf16.msra.mxu0 %v882
  %1643 = vmatpush.bf16.msra.mxu0 %v880
  %1644 = vmatpush.bf16.msra.mxu0 %v878
  %1645 = vmatpush.bf16.msra.mxu0 %v876
  %1646 = vmatpush.bf16.msra.mxu0 %v874
  %1647 = vmatpush.bf16.msra.mxu0 %v872
  %1648 = vmatmul.bf16.gmra.mxu0 %v437
  %v1649 = vpop.f32.mrf.mxu0
  %v1650 = vadd.f32 0.0, %v1649
  %v1651 = vpop.f32.mrf.mxu0
  %v1652 = vadd.f32 0.0, %v1651
  %1653 = vmatmul.bf16.gmra.mxu0 %v440
  %v1654 = vpop.f32.mrf.mxu0
  %v1655 = vadd.f32 0.0, %v1654
  %v1656 = vpop.f32.mrf.mxu0
  %v1657 = vadd.f32 0.0, %v1656
  %1658 = vmatmul.bf16.gmra.mxu0 %v443
  %v1659 = vpop.f32.mrf.mxu0
  %v1660 = vadd.f32 0.0, %v1659
  %v1661 = vpop.f32.mrf.mxu0
  %v1662 = vadd.f32 0.0, %v1661
  %1663 = vmatmul.bf16.gmra.mxu0 %v446
  %v1664 = vpop.f32.mrf.mxu0
  %v1665 = vadd.f32 0.0, %v1664
  %v1666 = vpop.f32.mrf.mxu0
  %v1667 = vadd.f32 0.0, %v1666
  %1668 = vmatmul.bf16.gmra.mxu0 %v449
  %v1669 = vpop.f32.mrf.mxu0
  %v1670 = vadd.f32 0.0, %v1669
  %v1671 = vpop.f32.mrf.mxu0
  %v1672 = vadd.f32 0.0, %v1671
  %1673 = vmatmul.bf16.gmra.mxu0 %v452
  %v1674 = vpop.f32.mrf.mxu0
  %v1675 = vadd.f32 0.0, %v1674
  %v1676 = vpop.f32.mrf.mxu0
  %v1677 = vadd.f32 0.0, %v1676
  %1678 = vmatmul.bf16.gmra.mxu0 %v1111
  %v1679 = vpop.f32.mrf.mxu0
  %v1680 = vadd.f32 0.0, %v1679
  %v1681 = vpop.f32.mrf.mxu0
  %v1682 = vadd.f32 0.0, %v1681
  %1683 = vdwg.mxu0
  %v1684 = vadd.f32 %v1568, %v1606
  %v1685 = vadd.f32 %v1569, %v1650
  %v1686 = vadd.f32 %v1570, %v1608
  %v1687 = vadd.f32 %v1571, %v1652
  %v1688 = vadd.f32 %v1572, %v1611
  %v1689 = vadd.f32 %v1573, %v1655
  %v1690 = vadd.f32 %v1574, %v1613
  %v1691 = vadd.f32 %v1575, %v1657
  %v1692 = vadd.f32 %v1576, %v1616
  %v1693 = vadd.f32 %v1577, %v1660
  %v1694 = vadd.f32 %v1578, %v1618
  %v1695 = vadd.f32 %v1579, %v1662
  %v1696 = vadd.f32 %v1580, %v1621
  %v1697 = vadd.f32 %v1581, %v1665
  %v1698 = vadd.f32 %v1582, %v1623
  %v1699 = vadd.f32 %v1583, %v1667
  %v1700 = vadd.f32 %v1584, %v1626
  %v1701 = vadd.f32 %v1585, %v1670
  %v1702 = vadd.f32 %v1586, %v1628
  %v1703 = vadd.f32 %v1587, %v1672
  %v1704 = vadd.f32 %v1588, %v1631
  %v1705 = vadd.f32 %v1589, %v1675
  %v1706 = vadd.f32 %v1590, %v1633
  %v1707 = vadd.f32 %v1591, %v1677
  %v1708 = vadd.f32 %v1592, %v1636
  %v1709 = vadd.f32 %v1593, %v1680
  %v1710 = vadd.f32 %v1594, %v1638
  %v1711 = vadd.f32 %v1595, %v1682
  %v1714 = vunpack.c.l.b16 %v70
  %v1715 = vunpack.c.l.b16 %v71
  %v1716 = vpack.c.b16 %v1715, %v1714
  %v1718 = vsel %vm228, %v1716, 0
  %1720 = vmatpush.bf16.msra.mxu0 0
  %1721 = vmatpush.bf16.msra.mxu0 0
  %1722 = vmatpush.bf16.msra.mxu0 %v1096
  %1723 = vmatpush.bf16.msra.mxu0 %v1094
  %1724 = vmatpush.bf16.msra.mxu0 %v1092
  %1725 = vmatpush.bf16.msra.mxu0 %v1090
  %1726 = vmatpush.bf16.msra.mxu0 %v1088
  %1727 = vmatpush.bf16.msra.mxu0 %v1086
  %1728 = vmatmul.bf16.gmra.mxu0 %v233
  %v1729 = vpop.f32.mrf.mxu0
  %v1730 = vadd.f32 0.0, %v1729
  %v1731 = vpop.f32.mrf.mxu0
  %v1732 = vadd.f32 0.0, %v1731
  %1733 = vmatmul.bf16.gmra.mxu0 %v236
  %v1734 = vpop.f32.mrf.mxu0
  %v1735 = vadd.f32 0.0, %v1734
  %v1736 = vpop.f32.mrf.mxu0
  %v1737 = vadd.f32 0.0, %v1736
  %1738 = vmatmul.bf16.gmra.mxu0 %v239
  %v1739 = vpop.f32.mrf.mxu0
  %v1740 = vadd.f32 0.0, %v1739
  %v1741 = vpop.f32.mrf.mxu0
  %v1742 = vadd.f32 0.0, %v1741
  %1743 = vmatmul.bf16.gmra.mxu0 %v242
  %v1744 = vpop.f32.mrf.mxu0
  %v1745 = vadd.f32 0.0, %v1744
  %v1746 = vpop.f32.mrf.mxu0
  %v1747 = vadd.f32 0.0, %v1746
  %1748 = vmatmul.bf16.gmra.mxu0 %v245
  %v1749 = vpop.f32.mrf.mxu0
  %v1750 = vadd.f32 0.0, %v1749
  %v1751 = vpop.f32.mrf.mxu0
  %v1752 = vadd.f32 0.0, %v1751
  %1753 = vmatmul.bf16.gmra.mxu0 %v248
  %v1754 = vpop.f32.mrf.mxu0
  %v1755 = vadd.f32 0.0, %v1754
  %v1756 = vpop.f32.mrf.mxu0
  %v1757 = vadd.f32 0.0, %v1756
  %1758 = vmatmul.bf16.gmra.mxu0 %v1718
  %v1759 = vpop.f32.mrf.mxu0
  %v1760 = vadd.f32 0.0, %v1759
  %v1761 = vpop.f32.mrf.mxu0
  %v1762 = vadd.f32 0.0, %v1761
  %1763 = vdwg.mxu0
  %1764 = vmatpush.bf16.msra.mxu0 0
  %1765 = vmatpush.bf16.msra.mxu0 0
  %1766 = vmatpush.bf16.msra.mxu0 %v1097
  %1767 = vmatpush.bf16.msra.mxu0 %v1095
  %1768 = vmatpush.bf16.msra.mxu0 %v1093
  %1769 = vmatpush.bf16.msra.mxu0 %v1091
  %1770 = vmatpush.bf16.msra.mxu0 %v1089
  %1771 = vmatpush.bf16.msra.mxu0 %v1087
  %1772 = vmatmul.bf16.gmra.mxu0 %v233
  %v1773 = vpop.f32.mrf.mxu0
  %v1774 = vadd.f32 0.0, %v1773
  %v1775 = vpop.f32.mrf.mxu0
  %v1776 = vadd.f32 0.0, %v1775
  %1777 = vmatmul.bf16.gmra.mxu0 %v236
  %v1778 = vpop.f32.mrf.mxu0
  %v1779 = vadd.f32 0.0, %v1778
  %v1780 = vpop.f32.mrf.mxu0
  %v1781 = vadd.f32 0.0, %v1780
  %1782 = vmatmul.bf16.gmra.mxu0 %v239
  %v1783 = vpop.f32.mrf.mxu0
  %v1784 = vadd.f32 0.0, %v1783
  %v1785 = vpop.f32.mrf.mxu0
  %v1786 = vadd.f32 0.0, %v1785
  %1787 = vmatmul.bf16.gmra.mxu0 %v242
  %v1788 = vpop.f32.mrf.mxu0
  %v1789 = vadd.f32 0.0, %v1788
  %v1790 = vpop.f32.mrf.mxu0
  %v1791 = vadd.f32 0.0, %v1790
  %1792 = vmatmul.bf16.gmra.mxu0 %v245
  %v1793 = vpop.f32.mrf.mxu0
  %v1794 = vadd.f32 0.0, %v1793
  %v1795 = vpop.f32.mrf.mxu0
  %v1796 = vadd.f32 0.0, %v1795
  %1797 = vmatmul.bf16.gmra.mxu0 %v248
  %v1798 = vpop.f32.mrf.mxu0
  %v1799 = vadd.f32 0.0, %v1798
  %v1800 = vpop.f32.mrf.mxu0
  %v1801 = vadd.f32 0.0, %v1800
  %1802 = vmatmul.bf16.gmra.mxu0 %v1718
  %v1803 = vpop.f32.mrf.mxu0
  %v1804 = vadd.f32 0.0, %v1803
  %v1805 = vpop.f32.mrf.mxu0
  %v1806 = vadd.f32 0.0, %v1805
  %1807 = vdwg.mxu0
  %v1808 = vadd.f32 %v1684, %v1730
  %v1809 = vadd.f32 %v1685, %v1774
  %v1810 = vadd.f32 %v1686, %v1732
  %v1811 = vadd.f32 %v1687, %v1776
  %v1812 = vadd.f32 %v1688, %v1735
  %v1813 = vadd.f32 %v1689, %v1779
  %v1814 = vadd.f32 %v1690, %v1737
  %v1815 = vadd.f32 %v1691, %v1781
  %v1816 = vadd.f32 %v1692, %v1740
  %v1817 = vadd.f32 %v1693, %v1784
  %v1818 = vadd.f32 %v1694, %v1742
  %v1819 = vadd.f32 %v1695, %v1786
  %v1820 = vadd.f32 %v1696, %v1745
  %v1821 = vadd.f32 %v1697, %v1789
  %v1822 = vadd.f32 %v1698, %v1747
  %v1823 = vadd.f32 %v1699, %v1791
  %v1824 = vadd.f32 %v1700, %v1750
  %v1825 = vadd.f32 %v1701, %v1794
  %v1826 = vadd.f32 %v1702, %v1752
  %v1827 = vadd.f32 %v1703, %v1796
  %v1828 = vadd.f32 %v1704, %v1755
  %v1829 = vadd.f32 %v1705, %v1799
  %v1830 = vadd.f32 %v1706, %v1757
  %v1831 = vadd.f32 %v1707, %v1801
  %v1832 = vadd.f32 %v1708, %v1760
  %v1833 = vadd.f32 %v1709, %v1804
  %v1834 = vadd.f32 %v1710, %v1762
  %v1835 = vadd.f32 %v1711, %v1806
  %v1836 = vadd.f32 %v1808, %v1230
  %v1837 = vadd.f32 %v1809, %v1231
  %v1838 = vadd.f32 %v1810, %v1230
  %v1839 = vadd.f32 %v1811, %v1231
  %v1840 = vadd.f32 %v1812, %v1230
  %v1841 = vadd.f32 %v1813, %v1231
  %v1842 = vadd.f32 %v1814, %v1230
  %v1843 = vadd.f32 %v1815, %v1231
  %v1844 = vadd.f32 %v1816, %v1230
  %v1845 = vadd.f32 %v1817, %v1231
  %v1846 = vadd.f32 %v1818, %v1230
  %v1847 = vadd.f32 %v1819, %v1231
  %v1848 = vadd.f32 %v1820, %v1230
  %v1849 = vadd.f32 %v1821, %v1231
  %v1850 = vadd.f32 %v1822, %v1230
  %v1851 = vadd.f32 %v1823, %v1231
  %v1852 = vadd.f32 %v1824, %v1230
  %v1853 = vadd.f32 %v1825, %v1231
  %v1854 = vadd.f32 %v1826, %v1230
  %v1855 = vadd.f32 %v1827, %v1231
  %v1856 = vadd.f32 %v1828, %v1230
  %v1857 = vadd.f32 %v1829, %v1231
  %v1858 = vadd.f32 %v1830, %v1230
  %v1859 = vadd.f32 %v1831, %v1231
  %v1860 = vadd.f32 %v1832, %v1230
  %v1861 = vadd.f32 %v1833, %v1231
  %v1862 = vadd.f32 %v1834, %v1230
  %v1863 = vadd.f32 %v1835, %v1231
  %v1864 = vmax.f32 %v1836, 0.0
  %v1865 = vmax.f32 %v1837, 0.0
  %v1866 = vmax.f32 %v1838, 0.0
  %v1867 = vmax.f32 %v1839, 0.0
  %v1868 = vmax.f32 %v1840, 0.0
  %v1869 = vmax.f32 %v1841, 0.0
  %v1870 = vmax.f32 %v1842, 0.0
  %v1871 = vmax.f32 %v1843, 0.0
  %v1872 = vmax.f32 %v1844, 0.0
  %v1873 = vmax.f32 %v1845, 0.0
  %v1874 = vmax.f32 %v1846, 0.0
  %v1875 = vmax.f32 %v1847, 0.0
  %v1876 = vmax.f32 %v1848, 0.0
  %v1877 = vmax.f32 %v1849, 0.0
  %v1878 = vmax.f32 %v1850, 0.0
  %v1879 = vmax.f32 %v1851, 0.0
  %v1880 = vmax.f32 %v1852, 0.0
  %v1881 = vmax.f32 %v1853, 0.0
  %v1882 = vmax.f32 %v1854, 0.0
  %v1883 = vmax.f32 %v1855, 0.0
  %v1884 = vmax.f32 %v1856, 0.0
  %v1885 = vmax.f32 %v1857, 0.0
  %v1886 = vmax.f32 %v1858, 0.0
  %v1887 = vmax.f32 %v1859, 0.0
  %v1888 = vmax.f32 %v1860, 0.0
  %v1889 = vmax.f32 %v1861, 0.0
  %v1890 = vmax.f32 %v1862, 0.0
  %v1891 = vmax.f32 %v1863, 0.0
  %v1892 = vmax.f32 %v1864, %v1865
  %v1893 = vmax.f32 %v1866, %v1867
  %v1894 = vmax.f32 %v1868, %v1869
  %v1895 = vmax.f32 %v1870, %v1871
  %v1896 = vmax.f32 %v1872, %v1873
  %v1897 = vmax.f32 %v1874, %v1875
  %v1898 = vmax.f32 %v1876, %v1877
  %v1899 = vmax.f32 %v1878, %v1879
  %v1900 = vmax.f32 %v1880, %v1881
  %v1901 = vmax.f32 %v1882, %v1883
  %v1902 = vmax.f32 %v1884, %v1885
  %v1903 = vmax.f32 %v1886, %v1887
  %v1904 = vmax.f32 %v1888, %v1889
  %v1905 = vmax.f32 %v1890, %v1891
  %v1906 = vmax.f32 %v1290, %v1892
  %v1907 = vmax.f32 %v1291, %v1893
  %v1908 = vmax.f32 %v1292, %v1894
  %v1909 = vmax.f32 %v1293, %v1895
  %v1910 = vmax.f32 %v1294, %v1896
  %v1911 = vmax.f32 %v1295, %v1897
  %v1912 = vmax.f32 %v1296, %v1898
  %v1913 = vmax.f32 %v1297, %v1899
  %v1914 = vmax.f32 %v1298, %v1900
  %v1915 = vmax.f32 %v1299, %v1901
  %v1916 = vmax.f32 %v1300, %v1902
  %v1917 = vmax.f32 %v1301, %v1903
  %v1918 = vmax.f32 %v1302, %v1904
  %v1919 = vmax.f32 %v1303, %v1905
  %v1920 = vpack.c.bf16 %v1906, %v1906
  %v1921 = vpack.c.bf16 %v1907, %v1907
  %v1922 = vpack.c.bf16 %v1908, %v1908
  %v1923 = vpack.c.bf16 %v1909, %v1909
  %v1924 = vpack.c.bf16 %v1910, %v1910
  %v1925 = vpack.c.bf16 %v1911, %v1911
  %v1926 = vpack.c.bf16 %v1912, %v1912
  %v1927 = vpack.c.bf16 %v1913, %v1913
  %v1928 = vpack.c.bf16 %v1914, %v1914
  %v1929 = vpack.c.bf16 %v1915, %v1915
  %v1930 = vpack.c.bf16 %v1916, %v1916
  %v1931 = vpack.c.bf16 %v1917, %v1917
  %v1932 = vpack.c.bf16 %v1918, %v1918
  %v1933 = vpack.c.bf16 %v1919, %v1919
  %1934 = vmatpush.bf16.msra.mxu0 0
  %1935 = vmatpush.bf16.msra.mxu0 0
  %1936 = vmatpush.bf16.msra.mxu0 %v214
  %1937 = vmatpush.bf16.msra.mxu0 %v212
  %1938 = vmatpush.bf16.msra.mxu0 %v210
  %1939 = vmatpush.bf16.msra.mxu0 %v208
  %1940 = vmatpush.bf16.msra.mxu0 %v206
  %1941 = vmatpush.bf16.msra.mxu0 %v204
  %1942 = vmatmul.bf16.gmra.mxu0 %v896
  %v1943 = vpop.f32.mrf.mxu0
  %v1944 = vadd.f32 0.0, %v1943
  %v1945 = vpop.f32.mrf.mxu0
  %v1946 = vadd.f32 0.0, %v1945
  %1947 = vmatmul.bf16.gmra.mxu0 %v899
  %v1948 = vpop.f32.mrf.mxu0
  %v1949 = vadd.f32 0.0, %v1948
  %v1950 = vpop.f32.mrf.mxu0
  %v1951 = vadd.f32 0.0, %v1950
  %1952 = vmatmul.bf16.gmra.mxu0 %v902
  %v1953 = vpop.f32.mrf.mxu0
  %v1954 = vadd.f32 0.0, %v1953
  %v1955 = vpop.f32.mrf.mxu0
  %v1956 = vadd.f32 0.0, %v1955
  %1957 = vmatmul.bf16.gmra.mxu0 %v905
  %v1958 = vpop.f32.mrf.mxu0
  %v1959 = vadd.f32 0.0, %v1958
  %v1960 = vpop.f32.mrf.mxu0
  %v1961 = vadd.f32 0.0, %v1960
  %1962 = vmatmul.bf16.gmra.mxu0 %v908
  %v1963 = vpop.f32.mrf.mxu0
  %v1964 = vadd.f32 0.0, %v1963
  %v1965 = vpop.f32.mrf.mxu0
  %v1966 = vadd.f32 0.0, %v1965
  %1967 = vmatmul.bf16.gmra.mxu0 %v911
  %v1968 = vpop.f32.mrf.mxu0
  %v1969 = vadd.f32 0.0, %v1968
  %v1970 = vpop.f32.mrf.mxu0
  %v1971 = vadd.f32 0.0, %v1970
  %1972 = vmatmul.bf16.gmra.mxu0 %v914
  %v1973 = vpop.f32.mrf.mxu0
  %v1974 = vadd.f32 0.0, %v1973
  %v1975 = vpop.f32.mrf.mxu0
  %v1976 = vadd.f32 0.0, %v1975
  %1977 = vdwg.mxu0
  %1978 = vmatpush.bf16.msra.mxu0 0
  %1979 = vmatpush.bf16.msra.mxu0 0
  %1980 = vmatpush.bf16.msra.mxu0 %v215
  %1981 = vmatpush.bf16.msra.mxu0 %v213
  %1982 = vmatpush.bf16.msra.mxu0 %v211
  %1983 = vmatpush.bf16.msra.mxu0 %v209
  %1984 = vmatpush.bf16.msra.mxu0 %v207
  %1985 = vmatpush.bf16.msra.mxu0 %v205
  %1986 = vmatmul.bf16.gmra.mxu0 %v896
  %v1987 = vpop.f32.mrf.mxu0
  %v1988 = vadd.f32 0.0, %v1987
  %v1989 = vpop.f32.mrf.mxu0
  %v1990 = vadd.f32 0.0, %v1989
  %1991 = vmatmul.bf16.gmra.mxu0 %v899
  %v1992 = vpop.f32.mrf.mxu0
  %v1993 = vadd.f32 0.0, %v1992
  %v1994 = vpop.f32.mrf.mxu0
  %v1995 = vadd.f32 0.0, %v1994
  %1996 = vmatmul.bf16.gmra.mxu0 %v902
  %v1997 = vpop.f32.mrf.mxu0
  %v1998 = vadd.f32 0.0, %v1997
  %v1999 = vpop.f32.mrf.mxu0
  %v2000 = vadd.f32 0.0, %v1999
  %2001 = vmatmul.bf16.gmra.mxu0 %v905
  %v2002 = vpop.f32.mrf.mxu0
  %v2003 = vadd.f32 0.0, %v2002
  %v2004 = vpop.f32.mrf.mxu0
  %v2005 = vadd.f32 0.0, %v2004
  %2006 = vmatmul.bf16.gmra.mxu0 %v908
  %v2007 = vpop.f32.mrf.mxu0
  %v2008 = vadd.f32 0.0, %v2007
  %v2009 = vpop.f32.mrf.mxu0
  %v2010 = vadd.f32 0.0, %v2009
  %2011 = vmatmul.bf16.gmra.mxu0 %v911
  %v2012 = vpop.f32.mrf.mxu0
  %v2013 = vadd.f32 0.0, %v2012
  %v2014 = vpop.f32.mrf.mxu0
  %v2015 = vadd.f32 0.0, %v2014
  %2016 = vmatmul.bf16.gmra.mxu0 %v914
  %v2017 = vpop.f32.mrf.mxu0
  %v2018 = vadd.f32 0.0, %v2017
  %v2019 = vpop.f32.mrf.mxu0
  %v2020 = vadd.f32 0.0, %v2019
  %2021 = vdwg.mxu0
  %2022 = vmatpush.bf16.msra.mxu0 0
  %2023 = vmatpush.bf16.msra.mxu0 0
  %2024 = vmatpush.bf16.msra.mxu0 %v419
  %2025 = vmatpush.bf16.msra.mxu0 %v417
  %2026 = vmatpush.bf16.msra.mxu0 %v415
  %2027 = vmatpush.bf16.msra.mxu0 %v413
  %2028 = vmatpush.bf16.msra.mxu0 %v411
  %2029 = vmatpush.bf16.msra.mxu0 %v409
  %2030 = vmatmul.bf16.gmra.mxu0 %v651
  %v2031 = vpop.f32.mrf.mxu0
  %v2032 = vadd.f32 %v1944, %v2031
  %v2033 = vpop.f32.mrf.mxu0
  %v2034 = vadd.f32 %v1946, %v2033
  %2035 = vmatmul.bf16.gmra.mxu0 %v654
  %v2036 = vpop.f32.mrf.mxu0
  %v2037 = vadd.f32 %v1949, %v2036
  %v2038 = vpop.f32.mrf.mxu0
  %v2039 = vadd.f32 %v1951, %v2038
  %2040 = vmatmul.bf16.gmra.mxu0 %v657
  %v2041 = vpop.f32.mrf.mxu0
  %v2042 = vadd.f32 %v1954, %v2041
  %v2043 = vpop.f32.mrf.mxu0
  %v2044 = vadd.f32 %v1956, %v2043
  %2045 = vmatmul.bf16.gmra.mxu0 %v660
  %v2046 = vpop.f32.mrf.mxu0
  %v2047 = vadd.f32 %v1959, %v2046
  %v2048 = vpop.f32.mrf.mxu0
  %v2049 = vadd.f32 %v1961, %v2048
  %2050 = vmatmul.bf16.gmra.mxu0 %v663
  %v2051 = vpop.f32.mrf.mxu0
  %v2052 = vadd.f32 %v1964, %v2051
  %v2053 = vpop.f32.mrf.mxu0
  %v2054 = vadd.f32 %v1966, %v2053
  %2055 = vmatmul.bf16.gmra.mxu0 %v666
  %v2056 = vpop.f32.mrf.mxu0
  %v2057 = vadd.f32 %v1969, %v2056
  %v2058 = vpop.f32.mrf.mxu0
  %v2059 = vadd.f32 %v1971, %v2058
  %2060 = vmatmul.bf16.gmra.mxu0 %v669
  %v2061 = vpop.f32.mrf.mxu0
  %v2062 = vadd.f32 %v1974, %v2061
  %v2063 = vpop.f32.mrf.mxu0
  %v2064 = vadd.f32 %v1976, %v2063
  %2065 = vdwg.mxu0
  %2066 = vmatpush.bf16.msra.mxu0 0
  %2067 = vmatpush.bf16.msra.mxu0 0
  %2068 = vmatpush.bf16.msra.mxu0 %v420
  %2069 = vmatpush.bf16.msra.mxu0 %v418
  %2070 = vmatpush.bf16.msra.mxu0 %v416
  %2071 = vmatpush.bf16.msra.mxu0 %v414
  %2072 = vmatpush.bf16.msra.mxu0 %v412
  %2073 = vmatpush.bf16.msra.mxu0 %v410
  %2074 = vmatmul.bf16.gmra.mxu0 %v651
  %v2075 = vpop.f32.mrf.mxu0
  %v2076 = vadd.f32 %v1988, %v2075
  %v2077 = vpop.f32.mrf.mxu0
  %v2078 = vadd.f32 %v1990, %v2077
  %2079 = vmatmul.bf16.gmra.mxu0 %v654
  %v2080 = vpop.f32.mrf.mxu0
  %v2081 = vadd.f32 %v1993, %v2080
  %v2082 = vpop.f32.mrf.mxu0
  %v2083 = vadd.f32 %v1995, %v2082
  %2084 = vmatmul.bf16.gmra.mxu0 %v657
  %v2085 = vpop.f32.mrf.mxu0
  %v2086 = vadd.f32 %v1998, %v2085
  %v2087 = vpop.f32.mrf.mxu0
  %v2088 = vadd.f32 %v2000, %v2087
  %2089 = vmatmul.bf16.gmra.mxu0 %v660
  %v2090 = vpop.f32.mrf.mxu0
  %v2091 = vadd.f32 %v2003, %v2090
  %v2092 = vpop.f32.mrf.mxu0
  %v2093 = vadd.f32 %v2005, %v2092
  %2094 = vmatmul.bf16.gmra.mxu0 %v663
  %v2095 = vpop.f32.mrf.mxu0
  %v2096 = vadd.f32 %v2008, %v2095
  %v2097 = vpop.f32.mrf.mxu0
  %v2098 = vadd.f32 %v2010, %v2097
  %2099 = vmatmul.bf16.gmra.mxu0 %v666
  %v2100 = vpop.f32.mrf.mxu0
  %v2101 = vadd.f32 %v2013, %v2100
  %v2102 = vpop.f32.mrf.mxu0
  %v2103 = vadd.f32 %v2015, %v2102
  %2104 = vmatmul.bf16.gmra.mxu0 %v669
  %v2105 = vpop.f32.mrf.mxu0
  %v2106 = vadd.f32 %v2018, %v2105
  %v2107 = vpop.f32.mrf.mxu0
  %v2108 = vadd.f32 %v2020, %v2107
  %2109 = vdwg.mxu0
  %2110 = vmatpush.bf16.msra.mxu0 0
  %2111 = vmatpush.bf16.msra.mxu0 0
  %2112 = vmatpush.bf16.msra.mxu0 %v636
  %2113 = vmatpush.bf16.msra.mxu0 %v634
  %2114 = vmatpush.bf16.msra.mxu0 %v632
  %2115 = vmatpush.bf16.msra.mxu0 %v630
  %2116 = vmatpush.bf16.msra.mxu0 %v628
  %2117 = vmatpush.bf16.msra.mxu0 %v626
  %2118 = vmatmul.bf16.gmra.mxu0 %v437
  %v2119 = vpop.f32.mrf.mxu0
  %v2120 = vadd.f32 0.0, %v2119
  %v2121 = vpop.f32.mrf.mxu0
  %v2122 = vadd.f32 0.0, %v2121
  %2123 = vmatmul.bf16.gmra.mxu0 %v440
  %v2124 = vpop.f32.mrf.mxu0
  %v2125 = vadd.f32 0.0, %v2124
  %v2126 = vpop.f32.mrf.mxu0
  %v2127 = vadd.f32 0.0, %v2126
  %2128 = vmatmul.bf16.gmra.mxu0 %v443
  %v2129 = vpop.f32.mrf.mxu0
  %v2130 = vadd.f32 0.0, %v2129
  %v2131 = vpop.f32.mrf.mxu0
  %v2132 = vadd.f32 0.0, %v2131
  %2133 = vmatmul.bf16.gmra.mxu0 %v446
  %v2134 = vpop.f32.mrf.mxu0
  %v2135 = vadd.f32 0.0, %v2134
  %v2136 = vpop.f32.mrf.mxu0
  %v2137 = vadd.f32 0.0, %v2136
  %2138 = vmatmul.bf16.gmra.mxu0 %v449
  %v2139 = vpop.f32.mrf.mxu0
  %v2140 = vadd.f32 0.0, %v2139
  %v2141 = vpop.f32.mrf.mxu0
  %v2142 = vadd.f32 0.0, %v2141
  %2143 = vmatmul.bf16.gmra.mxu0 %v452
  %v2144 = vpop.f32.mrf.mxu0
  %v2145 = vadd.f32 0.0, %v2144
  %v2146 = vpop.f32.mrf.mxu0
  %v2147 = vadd.f32 0.0, %v2146
  %2148 = vmatmul.bf16.gmra.mxu0 %v1111
  %v2149 = vpop.f32.mrf.mxu0
  %v2150 = vadd.f32 0.0, %v2149
  %v2151 = vpop.f32.mrf.mxu0
  %v2152 = vadd.f32 0.0, %v2151
  %2153 = vdwg.mxu0
  %2154 = vmatpush.bf16.msra.mxu0 0
  %2155 = vmatpush.bf16.msra.mxu0 0
  %2156 = vmatpush.bf16.msra.mxu0 %v637
  %2157 = vmatpush.bf16.msra.mxu0 %v635
  %2158 = vmatpush.bf16.msra.mxu0 %v633
  %2159 = vmatpush.bf16.msra.mxu0 %v631
  %2160 = vmatpush.bf16.msra.mxu0 %v629
  %2161 = vmatpush.bf16.msra.mxu0 %v627
  %2162 = vmatmul.bf16.gmra.mxu0 %v437
  %v2163 = vpop.f32.mrf.mxu0
  %v2164 = vadd.f32 0.0, %v2163
  %v2165 = vpop.f32.mrf.mxu0
  %v2166 = vadd.f32 0.0, %v2165
  %2167 = vmatmul.bf16.gmra.mxu0 %v440
  %v2168 = vpop.f32.mrf.mxu0
  %v2169 = vadd.f32 0.0, %v2168
  %v2170 = vpop.f32.mrf.mxu0
  %v2171 = vadd.f32 0.0, %v2170
  %2172 = vmatmul.bf16.gmra.mxu0 %v443
  %v2173 = vpop.f32.mrf.mxu0
  %v2174 = vadd.f32 0.0, %v2173
  %v2175 = vpop.f32.mrf.mxu0
  %v2176 = vadd.f32 0.0, %v2175
  %2177 = vmatmul.bf16.gmra.mxu0 %v446
  %v2178 = vpop.f32.mrf.mxu0
  %v2179 = vadd.f32 0.0, %v2178
  %v2180 = vpop.f32.mrf.mxu0
  %v2181 = vadd.f32 0.0, %v2180
  %2182 = vmatmul.bf16.gmra.mxu0 %v449
  %v2183 = vpop.f32.mrf.mxu0
  %v2184 = vadd.f32 0.0, %v2183
  %v2185 = vpop.f32.mrf.mxu0
  %v2186 = vadd.f32 0.0, %v2185
  %2187 = vmatmul.bf16.gmra.mxu0 %v452
  %v2188 = vpop.f32.mrf.mxu0
  %v2189 = vadd.f32 0.0, %v2188
  %v2190 = vpop.f32.mrf.mxu0
  %v2191 = vadd.f32 0.0, %v2190
  %2192 = vmatmul.bf16.gmra.mxu0 %v1111
  %v2193 = vpop.f32.mrf.mxu0
  %v2194 = vadd.f32 0.0, %v2193
  %v2195 = vpop.f32.mrf.mxu0
  %v2196 = vadd.f32 0.0, %v2195
  %2197 = vdwg.mxu0
  %v2198 = vadd.f32 %v2032, %v2120
  %v2199 = vadd.f32 %v2076, %v2164
  %v2200 = vadd.f32 %v2034, %v2122
  %v2201 = vadd.f32 %v2078, %v2166
  %v2202 = vadd.f32 %v2037, %v2125
  %v2203 = vadd.f32 %v2081, %v2169
  %v2204 = vadd.f32 %v2039, %v2127
  %v2205 = vadd.f32 %v2083, %v2171
  %v2206 = vadd.f32 %v2042, %v2130
  %v2207 = vadd.f32 %v2086, %v2174
  %v2208 = vadd.f32 %v2044, %v2132
  %v2209 = vadd.f32 %v2088, %v2176
  %v2210 = vadd.f32 %v2047, %v2135
  %v2211 = vadd.f32 %v2091, %v2179
  %v2212 = vadd.f32 %v2049, %v2137
  %v2213 = vadd.f32 %v2093, %v2181
  %v2214 = vadd.f32 %v2052, %v2140
  %v2215 = vadd.f32 %v2096, %v2184
  %v2216 = vadd.f32 %v2054, %v2142
  %v2217 = vadd.f32 %v2098, %v2186
  %v2218 = vadd.f32 %v2057, %v2145
  %v2219 = vadd.f32 %v2101, %v2189
  %v2220 = vadd.f32 %v2059, %v2147
  %v2221 = vadd.f32 %v2103, %v2191
  %v2222 = vadd.f32 %v2062, %v2150
  %v2223 = vadd.f32 %v2106, %v2194
  %v2224 = vadd.f32 %v2064, %v2152
  %v2225 = vadd.f32 %v2108, %v2196
  %2226 = vmatpush.bf16.msra.mxu0 0
  %2227 = vmatpush.bf16.msra.mxu0 0
  %2228 = vmatpush.bf16.msra.mxu0 %v881
  %2229 = vmatpush.bf16.msra.mxu0 %v879
  %2230 = vmatpush.bf16.msra.mxu0 %v877
  %2231 = vmatpush.bf16.msra.mxu0 %v875
  %2232 = vmatpush.bf16.msra.mxu0 %v873
  %2233 = vmatpush.bf16.msra.mxu0 %v871
  %2234 = vmatmul.bf16.gmra.mxu0 %v233
  %v2235 = vpop.f32.mrf.mxu0
  %v2236 = vadd.f32 0.0, %v2235
  %v2237 = vpop.f32.mrf.mxu0
  %v2238 = vadd.f32 0.0, %v2237
  %2239 = vmatmul.bf16.gmra.mxu0 %v236
  %v2240 = vpop.f32.mrf.mxu0
  %v2241 = vadd.f32 0.0, %v2240
  %v2242 = vpop.f32.mrf.mxu0
  %v2243 = vadd.f32 0.0, %v2242
  %2244 = vmatmul.bf16.gmra.mxu0 %v239
  %v2245 = vpop.f32.mrf.mxu0
  %v2246 = vadd.f32 0.0, %v2245
  %v2247 = vpop.f32.mrf.mxu0
  %v2248 = vadd.f32 0.0, %v2247
  %2249 = vmatmul.bf16.gmra.mxu0 %v242
  %v2250 = vpop.f32.mrf.mxu0
  %v2251 = vadd.f32 0.0, %v2250
  %v2252 = vpop.f32.mrf.mxu0
  %v2253 = vadd.f32 0.0, %v2252
  %2254 = vmatmul.bf16.gmra.mxu0 %v245
  %v2255 = vpop.f32.mrf.mxu0
  %v2256 = vadd.f32 0.0, %v2255
  %v2257 = vpop.f32.mrf.mxu0
  %v2258 = vadd.f32 0.0, %v2257
  %2259 = vmatmul.bf16.gmra.mxu0 %v248
  %v2260 = vpop.f32.mrf.mxu0
  %v2261 = vadd.f32 0.0, %v2260
  %v2262 = vpop.f32.mrf.mxu0
  %v2263 = vadd.f32 0.0, %v2262
  %2264 = vmatmul.bf16.gmra.mxu0 %v1718
  %v2265 = vpop.f32.mrf.mxu0
  %v2266 = vadd.f32 0.0, %v2265
  %v2267 = vpop.f32.mrf.mxu0
  %v2268 = vadd.f32 0.0, %v2267
  %2269 = vdwg.mxu0
  %2270 = vmatpush.bf16.msra.mxu0 0
  %2271 = vmatpush.bf16.msra.mxu0 0
  %2272 = vmatpush.bf16.msra.mxu0 %v882
  %2273 = vmatpush.bf16.msra.mxu0 %v880
  %2274 = vmatpush.bf16.msra.mxu0 %v878
  %2275 = vmatpush.bf16.msra.mxu0 %v876
  %2276 = vmatpush.bf16.msra.mxu0 %v874
  %2277 = vmatpush.bf16.msra.mxu0 %v872
  %2278 = vmatmul.bf16.gmra.mxu0 %v233
  %v2279 = vpop.f32.mrf.mxu0
  %v2280 = vadd.f32 0.0, %v2279
  %v2281 = vpop.f32.mrf.mxu0
  %v2282 = vadd.f32 0.0, %v2281
  %2283 = vmatmul.bf16.gmra.mxu0 %v236
  %v2284 = vpop.f32.mrf.mxu0
  %v2285 = vadd.f32 0.0, %v2284
  %v2286 = vpop.f32.mrf.mxu0
  %v2287 = vadd.f32 0.0, %v2286
  %2288 = vmatmul.bf16.gmra.mxu0 %v239
  %v2289 = vpop.f32.mrf.mxu0
  %v2290 = vadd.f32 0.0, %v2289
  %v2291 = vpop.f32.mrf.mxu0
  %v2292 = vadd.f32 0.0, %v2291
  %2293 = vmatmul.bf16.gmra.mxu0 %v242
  %v2294 = vpop.f32.mrf.mxu0
  %v2295 = vadd.f32 0.0, %v2294
  %v2296 = vpop.f32.mrf.mxu0
  %v2297 = vadd.f32 0.0, %v2296
  %2298 = vmatmul.bf16.gmra.mxu0 %v245
  %v2299 = vpop.f32.mrf.mxu0
  %v2300 = vadd.f32 0.0, %v2299
  %v2301 = vpop.f32.mrf.mxu0
  %v2302 = vadd.f32 0.0, %v2301
  %2303 = vmatmul.bf16.gmra.mxu0 %v248
  %v2304 = vpop.f32.mrf.mxu0
  %v2305 = vadd.f32 0.0, %v2304
  %v2306 = vpop.f32.mrf.mxu0
  %v2307 = vadd.f32 0.0, %v2306
  %2308 = vmatmul.bf16.gmra.mxu0 %v1718
  %v2309 = vpop.f32.mrf.mxu0
  %v2310 = vadd.f32 0.0, %v2309
  %v2311 = vpop.f32.mrf.mxu0
  %v2312 = vadd.f32 0.0, %v2311
  %2313 = vdwg.mxu0
  %v2314 = vadd.f32 %v2198, %v2236
  %v2315 = vadd.f32 %v2199, %v2280
  %v2316 = vadd.f32 %v2200, %v2238
  %v2317 = vadd.f32 %v2201, %v2282
  %v2318 = vadd.f32 %v2202, %v2241
  %v2319 = vadd.f32 %v2203, %v2285
  %v2320 = vadd.f32 %v2204, %v2243
  %v2321 = vadd.f32 %v2205, %v2287
  %v2322 = vadd.f32 %v2206, %v2246
  %v2323 = vadd.f32 %v2207, %v2290
  %v2324 = vadd.f32 %v2208, %v2248
  %v2325 = vadd.f32 %v2209, %v2292
  %v2326 = vadd.f32 %v2210, %v2251
  %v2327 = vadd.f32 %v2211, %v2295
  %v2328 = vadd.f32 %v2212, %v2253
  %v2329 = vadd.f32 %v2213, %v2297
  %v2330 = vadd.f32 %v2214, %v2256
  %v2331 = vadd.f32 %v2215, %v2300
  %v2332 = vadd.f32 %v2216, %v2258
  %v2333 = vadd.f32 %v2217, %v2302
  %v2334 = vadd.f32 %v2218, %v2261
  %v2335 = vadd.f32 %v2219, %v2305
  %v2336 = vadd.f32 %v2220, %v2263
  %v2337 = vadd.f32 %v2221, %v2307
  %v2338 = vadd.f32 %v2222, %v2266
  %v2339 = vadd.f32 %v2223, %v2310
  %v2340 = vadd.f32 %v2224, %v2268
  %v2341 = vadd.f32 %v2225, %v2312
  %v2344 = vunpack.c.l.b16 %v87
  %v2345 = vunpack.c.l.b16 %v88
  %v2346 = vpack.c.b16 %v2345, %v2344
  %v2348 = vsel %vm228, %v2346, 0
  %2350 = vmatpush.bf16.msra.mxu0 0
  %2351 = vmatpush.bf16.msra.mxu0 0
  %2352 = vmatpush.bf16.msra.mxu0 %v1096
  %2353 = vmatpush.bf16.msra.mxu0 %v1094
  %2354 = vmatpush.bf16.msra.mxu0 %v1092
  %2355 = vmatpush.bf16.msra.mxu0 %v1090
  %2356 = vmatpush.bf16.msra.mxu0 %v1088
  %2357 = vmatpush.bf16.msra.mxu0 %v1086
  %2358 = vmatmul.bf16.gmra.mxu0 %v654
  %v2359 = vpop.f32.mrf.mxu0
  %v2360 = vadd.f32 0.0, %v2359
  %v2361 = vpop.f32.mrf.mxu0
  %v2362 = vadd.f32 0.0, %v2361
  %2363 = vmatmul.bf16.gmra.mxu0 %v657
  %v2364 = vpop.f32.mrf.mxu0
  %v2365 = vadd.f32 0.0, %v2364
  %v2366 = vpop.f32.mrf.mxu0
  %v2367 = vadd.f32 0.0, %v2366
  %2368 = vmatmul.bf16.gmra.mxu0 %v660
  %v2369 = vpop.f32.mrf.mxu0
  %v2370 = vadd.f32 0.0, %v2369
  %v2371 = vpop.f32.mrf.mxu0
  %v2372 = vadd.f32 0.0, %v2371
  %2373 = vmatmul.bf16.gmra.mxu0 %v663
  %v2374 = vpop.f32.mrf.mxu0
  %v2375 = vadd.f32 0.0, %v2374
  %v2376 = vpop.f32.mrf.mxu0
  %v2377 = vadd.f32 0.0, %v2376
  %2378 = vmatmul.bf16.gmra.mxu0 %v666
  %v2379 = vpop.f32.mrf.mxu0
  %v2380 = vadd.f32 0.0, %v2379
  %v2381 = vpop.f32.mrf.mxu0
  %v2382 = vadd.f32 0.0, %v2381
  %2383 = vmatmul.bf16.gmra.mxu0 %v669
  %v2384 = vpop.f32.mrf.mxu0
  %v2385 = vadd.f32 0.0, %v2384
  %v2386 = vpop.f32.mrf.mxu0
  %v2387 = vadd.f32 0.0, %v2386
  %2388 = vmatmul.bf16.gmra.mxu0 %v2348
  %v2389 = vpop.f32.mrf.mxu0
  %v2390 = vadd.f32 0.0, %v2389
  %v2391 = vpop.f32.mrf.mxu0
  %v2392 = vadd.f32 0.0, %v2391
  %2393 = vdwg.mxu0
  %2394 = vmatpush.bf16.msra.mxu0 0
  %2395 = vmatpush.bf16.msra.mxu0 0
  %2396 = vmatpush.bf16.msra.mxu0 %v1097
  %2397 = vmatpush.bf16.msra.mxu0 %v1095
  %2398 = vmatpush.bf16.msra.mxu0 %v1093
  %2399 = vmatpush.bf16.msra.mxu0 %v1091
  %2400 = vmatpush.bf16.msra.mxu0 %v1089
  %2401 = vmatpush.bf16.msra.mxu0 %v1087
  %2402 = vmatmul.bf16.gmra.mxu0 %v654
  %v2403 = vpop.f32.mrf.mxu0
  %v2404 = vadd.f32 0.0, %v2403
  %v2405 = vpop.f32.mrf.mxu0
  %v2406 = vadd.f32 0.0, %v2405
  %2407 = vmatmul.bf16.gmra.mxu0 %v657
  %v2408 = vpop.f32.mrf.mxu0
  %v2409 = vadd.f32 0.0, %v2408
  %v2410 = vpop.f32.mrf.mxu0
  %v2411 = vadd.f32 0.0, %v2410
  %2412 = vmatmul.bf16.gmra.mxu0 %v660
  %v2413 = vpop.f32.mrf.mxu0
  %v2414 = vadd.f32 0.0, %v2413
  %v2415 = vpop.f32.mrf.mxu0
  %v2416 = vadd.f32 0.0, %v2415
  %2417 = vmatmul.bf16.gmra.mxu0 %v663
  %v2418 = vpop.f32.mrf.mxu0
  %v2419 = vadd.f32 0.0, %v2418
  %v2420 = vpop.f32.mrf.mxu0
  %v2421 = vadd.f32 0.0, %v2420
  %2422 = vmatmul.bf16.gmra.mxu0 %v666
  %v2423 = vpop.f32.mrf.mxu0
  %v2424 = vadd.f32 0.0, %v2423
  %v2425 = vpop.f32.mrf.mxu0
  %v2426 = vadd.f32 0.0, %v2425
  %2427 = vmatmul.bf16.gmra.mxu0 %v669
  %v2428 = vpop.f32.mrf.mxu0
  %v2429 = vadd.f32 0.0, %v2428
  %v2430 = vpop.f32.mrf.mxu0
  %v2431 = vadd.f32 0.0, %v2430
  %2432 = vmatmul.bf16.gmra.mxu0 %v2348
  %v2433 = vpop.f32.mrf.mxu0
  %v2434 = vadd.f32 0.0, %v2433
  %v2435 = vpop.f32.mrf.mxu0
  %v2436 = vadd.f32 0.0, %v2435
  %2437 = vdwg.mxu0
  %v2438 = vadd.f32 %v2314, %v2360
  %v2439 = vadd.f32 %v2315, %v2404
  %v2440 = vadd.f32 %v2316, %v2362
  %v2441 = vadd.f32 %v2317, %v2406
  %v2442 = vadd.f32 %v2318, %v2365
  %v2443 = vadd.f32 %v2319, %v2409
  %v2444 = vadd.f32 %v2320, %v2367
  %v2445 = vadd.f32 %v2321, %v2411
  %v2446 = vadd.f32 %v2322, %v2370
  %v2447 = vadd.f32 %v2323, %v2414
  %v2448 = vadd.f32 %v2324, %v2372
  %v2449 = vadd.f32 %v2325, %v2416
  %v2450 = vadd.f32 %v2326, %v2375
  %v2451 = vadd.f32 %v2327, %v2419
  %v2452 = vadd.f32 %v2328, %v2377
  %v2453 = vadd.f32 %v2329, %v2421
  %v2454 = vadd.f32 %v2330, %v2380
  %v2455 = vadd.f32 %v2331, %v2424
  %v2456 = vadd.f32 %v2332, %v2382
  %v2457 = vadd.f32 %v2333, %v2426
  %v2458 = vadd.f32 %v2334, %v2385
  %v2459 = vadd.f32 %v2335, %v2429
  %v2460 = vadd.f32 %v2336, %v2387
  %v2461 = vadd.f32 %v2337, %v2431
  %v2462 = vadd.f32 %v2338, %v2390
  %v2463 = vadd.f32 %v2339, %v2434
  %v2464 = vadd.f32 %v2340, %v2392
  %v2465 = vadd.f32 %v2341, %v2436
  %v2466 = vadd.f32 %v2438, %v1230
  %v2467 = vadd.f32 %v2439, %v1231
  %v2468 = vadd.f32 %v2440, %v1230
  %v2469 = vadd.f32 %v2441, %v1231
  %v2470 = vadd.f32 %v2442, %v1230
  %v2471 = vadd.f32 %v2443, %v1231
  %v2472 = vadd.f32 %v2444, %v1230
  %v2473 = vadd.f32 %v2445, %v1231
  %v2474 = vadd.f32 %v2446, %v1230
  %v2475 = vadd.f32 %v2447, %v1231
  %v2476 = vadd.f32 %v2448, %v1230
  %v2477 = vadd.f32 %v2449, %v1231
  %v2478 = vadd.f32 %v2450, %v1230
  %v2479 = vadd.f32 %v2451, %v1231
  %v2480 = vadd.f32 %v2452, %v1230
  %v2481 = vadd.f32 %v2453, %v1231
  %v2482 = vadd.f32 %v2454, %v1230
  %v2483 = vadd.f32 %v2455, %v1231
  %v2484 = vadd.f32 %v2456, %v1230
  %v2485 = vadd.f32 %v2457, %v1231
  %v2486 = vadd.f32 %v2458, %v1230
  %v2487 = vadd.f32 %v2459, %v1231
  %v2488 = vadd.f32 %v2460, %v1230
  %v2489 = vadd.f32 %v2461, %v1231
  %v2490 = vadd.f32 %v2462, %v1230
  %v2491 = vadd.f32 %v2463, %v1231
  %v2492 = vadd.f32 %v2464, %v1230
  %v2493 = vadd.f32 %v2465, %v1231
  %v2494 = vmax.f32 %v2466, 0.0
  %v2495 = vmax.f32 %v2467, 0.0
  %v2496 = vmax.f32 %v2468, 0.0
  %v2497 = vmax.f32 %v2469, 0.0
  %v2498 = vmax.f32 %v2470, 0.0
  %v2499 = vmax.f32 %v2471, 0.0
  %v2500 = vmax.f32 %v2472, 0.0
  %v2501 = vmax.f32 %v2473, 0.0
  %v2502 = vmax.f32 %v2474, 0.0
  %v2503 = vmax.f32 %v2475, 0.0
  %v2504 = vmax.f32 %v2476, 0.0
  %v2505 = vmax.f32 %v2477, 0.0
  %v2506 = vmax.f32 %v2478, 0.0
  %v2507 = vmax.f32 %v2479, 0.0
  %v2508 = vmax.f32 %v2480, 0.0
  %v2509 = vmax.f32 %v2481, 0.0
  %v2510 = vmax.f32 %v2482, 0.0
  %v2511 = vmax.f32 %v2483, 0.0
  %v2512 = vmax.f32 %v2484, 0.0
  %v2513 = vmax.f32 %v2485, 0.0
  %v2514 = vmax.f32 %v2486, 0.0
  %v2515 = vmax.f32 %v2487, 0.0
  %v2516 = vmax.f32 %v2488, 0.0
  %v2517 = vmax.f32 %v2489, 0.0
  %v2518 = vmax.f32 %v2490, 0.0
  %v2519 = vmax.f32 %v2491, 0.0
  %v2520 = vmax.f32 %v2492, 0.0
  %v2521 = vmax.f32 %v2493, 0.0
  %v2522 = vmax.f32 %v2494, %v2495
  %v2523 = vmax.f32 %v2496, %v2497
  %v2524 = vmax.f32 %v2498, %v2499
  %v2525 = vmax.f32 %v2500, %v2501
  %v2526 = vmax.f32 %v2502, %v2503
  %v2527 = vmax.f32 %v2504, %v2505
  %v2528 = vmax.f32 %v2506, %v2507
  %v2529 = vmax.f32 %v2508, %v2509
  %v2530 = vmax.f32 %v2510, %v2511
  %v2531 = vmax.f32 %v2512, %v2513
  %v2532 = vmax.f32 %v2514, %v2515
  %v2533 = vmax.f32 %v2516, %v2517
  %v2534 = vmax.f32 %v2518, %v2519
  %v2535 = vmax.f32 %v2520, %v2521
  %2536 = vmatpush.bf16.msra.mxu0 0
  %2537 = vmatpush.bf16.msra.mxu0 0
  %2538 = vmatpush.bf16.msra.mxu0 %v214
  %2539 = vmatpush.bf16.msra.mxu0 %v212
  %2540 = vmatpush.bf16.msra.mxu0 %v210
  %2541 = vmatpush.bf16.msra.mxu0 %v208
  %2542 = vmatpush.bf16.msra.mxu0 %v206
  %2543 = vmatpush.bf16.msra.mxu0 %v204
  %2544 = vmatmul.bf16.gmra.mxu0 %v437
  %v2545 = vpop.f32.mrf.mxu0
  %v2546 = vadd.f32 0.0, %v2545
  %v2547 = vpop.f32.mrf.mxu0
  %v2548 = vadd.f32 0.0, %v2547
  %2549 = vmatmul.bf16.gmra.mxu0 %v440
  %v2550 = vpop.f32.mrf.mxu0
  %v2551 = vadd.f32 0.0, %v2550
  %v2552 = vpop.f32.mrf.mxu0
  %v2553 = vadd.f32 0.0, %v2552
  %2554 = vmatmul.bf16.gmra.mxu0 %v443
  %v2555 = vpop.f32.mrf.mxu0
  %v2556 = vadd.f32 0.0, %v2555
  %v2557 = vpop.f32.mrf.mxu0
  %v2558 = vadd.f32 0.0, %v2557
  %2559 = vmatmul.bf16.gmra.mxu0 %v446
  %v2560 = vpop.f32.mrf.mxu0
  %v2561 = vadd.f32 0.0, %v2560
  %v2562 = vpop.f32.mrf.mxu0
  %v2563 = vadd.f32 0.0, %v2562
  %2564 = vmatmul.bf16.gmra.mxu0 %v449
  %v2565 = vpop.f32.mrf.mxu0
  %v2566 = vadd.f32 0.0, %v2565
  %v2567 = vpop.f32.mrf.mxu0
  %v2568 = vadd.f32 0.0, %v2567
  %2569 = vmatmul.bf16.gmra.mxu0 %v452
  %v2570 = vpop.f32.mrf.mxu0
  %v2571 = vadd.f32 0.0, %v2570
  %v2572 = vpop.f32.mrf.mxu0
  %v2573 = vadd.f32 0.0, %v2572
  %2574 = vmatmul.bf16.gmra.mxu0 %v1111
  %v2575 = vpop.f32.mrf.mxu0
  %v2576 = vadd.f32 0.0, %v2575
  %v2577 = vpop.f32.mrf.mxu0
  %v2578 = vadd.f32 0.0, %v2577
  %2579 = vdwg.mxu0
  %2580 = vmatpush.bf16.msra.mxu0 0
  %2581 = vmatpush.bf16.msra.mxu0 0
  %2582 = vmatpush.bf16.msra.mxu0 %v215
  %2583 = vmatpush.bf16.msra.mxu0 %v213
  %2584 = vmatpush.bf16.msra.mxu0 %v211
  %2585 = vmatpush.bf16.msra.mxu0 %v209
  %2586 = vmatpush.bf16.msra.mxu0 %v207
  %2587 = vmatpush.bf16.msra.mxu0 %v205
  %2588 = vmatmul.bf16.gmra.mxu0 %v437
  %v2589 = vpop.f32.mrf.mxu0
  %v2590 = vadd.f32 0.0, %v2589
  %v2591 = vpop.f32.mrf.mxu0
  %v2592 = vadd.f32 0.0, %v2591
  %2593 = vmatmul.bf16.gmra.mxu0 %v440
  %v2594 = vpop.f32.mrf.mxu0
  %v2595 = vadd.f32 0.0, %v2594
  %v2596 = vpop.f32.mrf.mxu0
  %v2597 = vadd.f32 0.0, %v2596
  %2598 = vmatmul.bf16.gmra.mxu0 %v443
  %v2599 = vpop.f32.mrf.mxu0
  %v2600 = vadd.f32 0.0, %v2599
  %v2601 = vpop.f32.mrf.mxu0
  %v2602 = vadd.f32 0.0, %v2601
  %2603 = vmatmul.bf16.gmra.mxu0 %v446
  %v2604 = vpop.f32.mrf.mxu0
  %v2605 = vadd.f32 0.0, %v2604
  %v2606 = vpop.f32.mrf.mxu0
  %v2607 = vadd.f32 0.0, %v2606
  %2608 = vmatmul.bf16.gmra.mxu0 %v449
  %v2609 = vpop.f32.mrf.mxu0
  %v2610 = vadd.f32 0.0, %v2609
  %v2611 = vpop.f32.mrf.mxu0
  %v2612 = vadd.f32 0.0, %v2611
  %2613 = vmatmul.bf16.gmra.mxu0 %v452
  %v2614 = vpop.f32.mrf.mxu0
  %v2615 = vadd.f32 0.0, %v2614
  %v2616 = vpop.f32.mrf.mxu0
  %v2617 = vadd.f32 0.0, %v2616
  %2618 = vmatmul.bf16.gmra.mxu0 %v1111
  %v2619 = vpop.f32.mrf.mxu0
  %v2620 = vadd.f32 0.0, %v2619
  %v2621 = vpop.f32.mrf.mxu0
  %v2622 = vadd.f32 0.0, %v2621
  %2623 = vdwg.mxu0
  %2624 = vmatpush.bf16.msra.mxu0 0
  %2625 = vmatpush.bf16.msra.mxu0 0
  %2626 = vmatpush.bf16.msra.mxu0 %v419
  %2627 = vmatpush.bf16.msra.mxu0 %v417
  %2628 = vmatpush.bf16.msra.mxu0 %v415
  %2629 = vmatpush.bf16.msra.mxu0 %v413
  %2630 = vmatpush.bf16.msra.mxu0 %v411
  %2631 = vmatpush.bf16.msra.mxu0 %v409
  %2632 = vmatmul.bf16.gmra.mxu0 %v896
  %v2633 = vpop.f32.mrf.mxu0
  %v2634 = vadd.f32 %v2546, %v2633
  %v2635 = vpop.f32.mrf.mxu0
  %v2636 = vadd.f32 %v2548, %v2635
  %2637 = vmatmul.bf16.gmra.mxu0 %v899
  %v2638 = vpop.f32.mrf.mxu0
  %v2639 = vadd.f32 %v2551, %v2638
  %v2640 = vpop.f32.mrf.mxu0
  %v2641 = vadd.f32 %v2553, %v2640
  %2642 = vmatmul.bf16.gmra.mxu0 %v902
  %v2643 = vpop.f32.mrf.mxu0
  %v2644 = vadd.f32 %v2556, %v2643
  %v2645 = vpop.f32.mrf.mxu0
  %v2646 = vadd.f32 %v2558, %v2645
  %2647 = vmatmul.bf16.gmra.mxu0 %v905
  %v2648 = vpop.f32.mrf.mxu0
  %v2649 = vadd.f32 %v2561, %v2648
  %v2650 = vpop.f32.mrf.mxu0
  %v2651 = vadd.f32 %v2563, %v2650
  %2652 = vmatmul.bf16.gmra.mxu0 %v908
  %v2653 = vpop.f32.mrf.mxu0
  %v2654 = vadd.f32 %v2566, %v2653
  %v2655 = vpop.f32.mrf.mxu0
  %v2656 = vadd.f32 %v2568, %v2655
  %2657 = vmatmul.bf16.gmra.mxu0 %v911
  %v2658 = vpop.f32.mrf.mxu0
  %v2659 = vadd.f32 %v2571, %v2658
  %v2660 = vpop.f32.mrf.mxu0
  %v2661 = vadd.f32 %v2573, %v2660
  %2662 = vmatmul.bf16.gmra.mxu0 %v914
  %v2663 = vpop.f32.mrf.mxu0
  %v2664 = vadd.f32 %v2576, %v2663
  %v2665 = vpop.f32.mrf.mxu0
  %v2666 = vadd.f32 %v2578, %v2665
  %2667 = vdwg.mxu0
  %2668 = vmatpush.bf16.msra.mxu0 0
  %2669 = vmatpush.bf16.msra.mxu0 0
  %2670 = vmatpush.bf16.msra.mxu0 %v420
  %2671 = vmatpush.bf16.msra.mxu0 %v418
  %2672 = vmatpush.bf16.msra.mxu0 %v416
  %2673 = vmatpush.bf16.msra.mxu0 %v414
  %2674 = vmatpush.bf16.msra.mxu0 %v412
  %2675 = vmatpush.bf16.msra.mxu0 %v410
  %2676 = vmatmul.bf16.gmra.mxu0 %v896
  %v2677 = vpop.f32.mrf.mxu0
  %v2678 = vadd.f32 %v2590, %v2677
  %v2679 = vpop.f32.mrf.mxu0
  %v2680 = vadd.f32 %v2592, %v2679
  %2681 = vmatmul.bf16.gmra.mxu0 %v899
  %v2682 = vpop.f32.mrf.mxu0
  %v2683 = vadd.f32 %v2595, %v2682
  %v2684 = vpop.f32.mrf.mxu0
  %v2685 = vadd.f32 %v2597, %v2684
  %2686 = vmatmul.bf16.gmra.mxu0 %v902
  %v2687 = vpop.f32.mrf.mxu0
  %v2688 = vadd.f32 %v2600, %v2687
  %v2689 = vpop.f32.mrf.mxu0
  %v2690 = vadd.f32 %v2602, %v2689
  %2691 = vmatmul.bf16.gmra.mxu0 %v905
  %v2692 = vpop.f32.mrf.mxu0
  %v2693 = vadd.f32 %v2605, %v2692
  %v2694 = vpop.f32.mrf.mxu0
  %v2695 = vadd.f32 %v2607, %v2694
  %2696 = vmatmul.bf16.gmra.mxu0 %v908
  %v2697 = vpop.f32.mrf.mxu0
  %v2698 = vadd.f32 %v2610, %v2697
  %v2699 = vpop.f32.mrf.mxu0
  %v2700 = vadd.f32 %v2612, %v2699
  %2701 = vmatmul.bf16.gmra.mxu0 %v911
  %v2702 = vpop.f32.mrf.mxu0
  %v2703 = vadd.f32 %v2615, %v2702
  %v2704 = vpop.f32.mrf.mxu0
  %v2705 = vadd.f32 %v2617, %v2704
  %2706 = vmatmul.bf16.gmra.mxu0 %v914
  %v2707 = vpop.f32.mrf.mxu0
  %v2708 = vadd.f32 %v2620, %v2707
  %v2709 = vpop.f32.mrf.mxu0
  %v2710 = vadd.f32 %v2622, %v2709
  %2711 = vdwg.mxu0
  %2712 = vmatpush.bf16.msra.mxu0 0
  %2713 = vmatpush.bf16.msra.mxu0 0
  %2714 = vmatpush.bf16.msra.mxu0 %v636
  %2715 = vmatpush.bf16.msra.mxu0 %v634
  %2716 = vmatpush.bf16.msra.mxu0 %v632
  %2717 = vmatpush.bf16.msra.mxu0 %v630
  %2718 = vmatpush.bf16.msra.mxu0 %v628
  %2719 = vmatpush.bf16.msra.mxu0 %v626
  %2720 = vmatmul.bf16.gmra.mxu0 %v233
  %v2721 = vpop.f32.mrf.mxu0
  %v2722 = vadd.f32 0.0, %v2721
  %v2723 = vpop.f32.mrf.mxu0
  %v2724 = vadd.f32 0.0, %v2723
  %2725 = vmatmul.bf16.gmra.mxu0 %v236
  %v2726 = vpop.f32.mrf.mxu0
  %v2727 = vadd.f32 0.0, %v2726
  %v2728 = vpop.f32.mrf.mxu0
  %v2729 = vadd.f32 0.0, %v2728
  %2730 = vmatmul.bf16.gmra.mxu0 %v239
  %v2731 = vpop.f32.mrf.mxu0
  %v2732 = vadd.f32 0.0, %v2731
  %v2733 = vpop.f32.mrf.mxu0
  %v2734 = vadd.f32 0.0, %v2733
  %2735 = vmatmul.bf16.gmra.mxu0 %v242
  %v2736 = vpop.f32.mrf.mxu0
  %v2737 = vadd.f32 0.0, %v2736
  %v2738 = vpop.f32.mrf.mxu0
  %v2739 = vadd.f32 0.0, %v2738
  %2740 = vmatmul.bf16.gmra.mxu0 %v245
  %v2741 = vpop.f32.mrf.mxu0
  %v2742 = vadd.f32 0.0, %v2741
  %v2743 = vpop.f32.mrf.mxu0
  %v2744 = vadd.f32 0.0, %v2743
  %2745 = vmatmul.bf16.gmra.mxu0 %v248
  %v2746 = vpop.f32.mrf.mxu0
  %v2747 = vadd.f32 0.0, %v2746
  %v2748 = vpop.f32.mrf.mxu0
  %v2749 = vadd.f32 0.0, %v2748
  %2750 = vmatmul.bf16.gmra.mxu0 %v1718
  %v2751 = vpop.f32.mrf.mxu0
  %v2752 = vadd.f32 0.0, %v2751
  %v2753 = vpop.f32.mrf.mxu0
  %v2754 = vadd.f32 0.0, %v2753
  %2755 = vdwg.mxu0
  %2756 = vmatpush.bf16.msra.mxu0 0
  %2757 = vmatpush.bf16.msra.mxu0 0
  %2758 = vmatpush.bf16.msra.mxu0 %v637
  %2759 = vmatpush.bf16.msra.mxu0 %v635
  %2760 = vmatpush.bf16.msra.mxu0 %v633
  %2761 = vmatpush.bf16.msra.mxu0 %v631
  %2762 = vmatpush.bf16.msra.mxu0 %v629
  %2763 = vmatpush.bf16.msra.mxu0 %v627
  %2764 = vmatmul.bf16.gmra.mxu0 %v233
  %v2765 = vpop.f32.mrf.mxu0
  %v2766 = vadd.f32 0.0, %v2765
  %v2767 = vpop.f32.mrf.mxu0
  %v2768 = vadd.f32 0.0, %v2767
  %2769 = vmatmul.bf16.gmra.mxu0 %v236
  %v2770 = vpop.f32.mrf.mxu0
  %v2771 = vadd.f32 0.0, %v2770
  %v2772 = vpop.f32.mrf.mxu0
  %v2773 = vadd.f32 0.0, %v2772
  %2774 = vmatmul.bf16.gmra.mxu0 %v239
  %v2775 = vpop.f32.mrf.mxu0
  %v2776 = vadd.f32 0.0, %v2775
  %v2777 = vpop.f32.mrf.mxu0
  %v2778 = vadd.f32 0.0, %v2777
  %2779 = vmatmul.bf16.gmra.mxu0 %v242
  %v2780 = vpop.f32.mrf.mxu0
  %v2781 = vadd.f32 0.0, %v2780
  %v2782 = vpop.f32.mrf.mxu0
  %v2783 = vadd.f32 0.0, %v2782
  %2784 = vmatmul.bf16.gmra.mxu0 %v245
  %v2785 = vpop.f32.mrf.mxu0
  %v2786 = vadd.f32 0.0, %v2785
  %v2787 = vpop.f32.mrf.mxu0
  %v2788 = vadd.f32 0.0, %v2787
  %2789 = vmatmul.bf16.gmra.mxu0 %v248
  %v2790 = vpop.f32.mrf.mxu0
  %v2791 = vadd.f32 0.0, %v2790
  %v2792 = vpop.f32.mrf.mxu0
  %v2793 = vadd.f32 0.0, %v2792
  %2794 = vmatmul.bf16.gmra.mxu0 %v1718
  %v2795 = vpop.f32.mrf.mxu0
  %v2796 = vadd.f32 0.0, %v2795
  %v2797 = vpop.f32.mrf.mxu0
  %v2798 = vadd.f32 0.0, %v2797
  %2799 = vdwg.mxu0
  %v2800 = vadd.f32 %v2634, %v2722
  %v2801 = vadd.f32 %v2678, %v2766
  %v2802 = vadd.f32 %v2636, %v2724
  %v2803 = vadd.f32 %v2680, %v2768
  %v2804 = vadd.f32 %v2639, %v2727
  %v2805 = vadd.f32 %v2683, %v2771
  %v2806 = vadd.f32 %v2641, %v2729
  %v2807 = vadd.f32 %v2685, %v2773
  %v2808 = vadd.f32 %v2644, %v2732
  %v2809 = vadd.f32 %v2688, %v2776
  %v2810 = vadd.f32 %v2646, %v2734
  %v2811 = vadd.f32 %v2690, %v2778
  %v2812 = vadd.f32 %v2649, %v2737
  %v2813 = vadd.f32 %v2693, %v2781
  %v2814 = vadd.f32 %v2651, %v2739
  %v2815 = vadd.f32 %v2695, %v2783
  %v2816 = vadd.f32 %v2654, %v2742
  %v2817 = vadd.f32 %v2698, %v2786
  %v2818 = vadd.f32 %v2656, %v2744
  %v2819 = vadd.f32 %v2700, %v2788
  %v2820 = vadd.f32 %v2659, %v2747
  %v2821 = vadd.f32 %v2703, %v2791
  %v2822 = vadd.f32 %v2661, %v2749
  %v2823 = vadd.f32 %v2705, %v2793
  %v2824 = vadd.f32 %v2664, %v2752
  %v2825 = vadd.f32 %v2708, %v2796
  %v2826 = vadd.f32 %v2666, %v2754
  %v2827 = vadd.f32 %v2710, %v2798
  %2828 = vmatpush.bf16.msra.mxu0 0
  %2829 = vmatpush.bf16.msra.mxu0 0
  %2830 = vmatpush.bf16.msra.mxu0 %v881
  %2831 = vmatpush.bf16.msra.mxu0 %v879
  %2832 = vmatpush.bf16.msra.mxu0 %v877
  %2833 = vmatpush.bf16.msra.mxu0 %v875
  %2834 = vmatpush.bf16.msra.mxu0 %v873
  %2835 = vmatpush.bf16.msra.mxu0 %v871
  %2836 = vmatmul.bf16.gmra.mxu0 %v654
  %v2837 = vpop.f32.mrf.mxu0
  %v2838 = vadd.f32 0.0, %v2837
  %v2839 = vpop.f32.mrf.mxu0
  %v2840 = vadd.f32 0.0, %v2839
  %2841 = vmatmul.bf16.gmra.mxu0 %v657
  %v2842 = vpop.f32.mrf.mxu0
  %v2843 = vadd.f32 0.0, %v2842
  %v2844 = vpop.f32.mrf.mxu0
  %v2845 = vadd.f32 0.0, %v2844
  %2846 = vmatmul.bf16.gmra.mxu0 %v660
  %v2847 = vpop.f32.mrf.mxu0
  %v2848 = vadd.f32 0.0, %v2847
  %v2849 = vpop.f32.mrf.mxu0
  %v2850 = vadd.f32 0.0, %v2849
  %2851 = vmatmul.bf16.gmra.mxu0 %v663
  %v2852 = vpop.f32.mrf.mxu0
  %v2853 = vadd.f32 0.0, %v2852
  %v2854 = vpop.f32.mrf.mxu0
  %v2855 = vadd.f32 0.0, %v2854
  %2856 = vmatmul.bf16.gmra.mxu0 %v666
  %v2857 = vpop.f32.mrf.mxu0
  %v2858 = vadd.f32 0.0, %v2857
  %v2859 = vpop.f32.mrf.mxu0
  %v2860 = vadd.f32 0.0, %v2859
  %2861 = vmatmul.bf16.gmra.mxu0 %v669
  %v2862 = vpop.f32.mrf.mxu0
  %v2863 = vadd.f32 0.0, %v2862
  %v2864 = vpop.f32.mrf.mxu0
  %v2865 = vadd.f32 0.0, %v2864
  %2866 = vmatmul.bf16.gmra.mxu0 %v2348
  %v2867 = vpop.f32.mrf.mxu0
  %v2868 = vadd.f32 0.0, %v2867
  %v2869 = vpop.f32.mrf.mxu0
  %v2870 = vadd.f32 0.0, %v2869
  %2871 = vdwg.mxu0
  %2872 = vmatpush.bf16.msra.mxu0 0
  %2873 = vmatpush.bf16.msra.mxu0 0
  %2874 = vmatpush.bf16.msra.mxu0 %v882
  %2875 = vmatpush.bf16.msra.mxu0 %v880
  %2876 = vmatpush.bf16.msra.mxu0 %v878
  %2877 = vmatpush.bf16.msra.mxu0 %v876
  %2878 = vmatpush.bf16.msra.mxu0 %v874
  %2879 = vmatpush.bf16.msra.mxu0 %v872
  %2880 = vmatmul.bf16.gmra.mxu0 %v654
  %v2881 = vpop.f32.mrf.mxu0
  %v2882 = vadd.f32 0.0, %v2881
  %v2883 = vpop.f32.mrf.mxu0
  %v2884 = vadd.f32 0.0, %v2883
  %2885 = vmatmul.bf16.gmra.mxu0 %v657
  %v2886 = vpop.f32.mrf.mxu0
  %v2887 = vadd.f32 0.0, %v2886
  %v2888 = vpop.f32.mrf.mxu0
  %v2889 = vadd.f32 0.0, %v2888
  %2890 = vmatmul.bf16.gmra.mxu0 %v660
  %v2891 = vpop.f32.mrf.mxu0
  %v2892 = vadd.f32 0.0, %v2891
  %v2893 = vpop.f32.mrf.mxu0
  %v2894 = vadd.f32 0.0, %v2893
  %2895 = vmatmul.bf16.gmra.mxu0 %v663
  %v2896 = vpop.f32.mrf.mxu0
  %v2897 = vadd.f32 0.0, %v2896
  %v2898 = vpop.f32.mrf.mxu0
  %v2899 = vadd.f32 0.0, %v2898
  %2900 = vmatmul.bf16.gmra.mxu0 %v666
  %v2901 = vpop.f32.mrf.mxu0
  %v2902 = vadd.f32 0.0, %v2901
  %v2903 = vpop.f32.mrf.mxu0
  %v2904 = vadd.f32 0.0, %v2903
  %2905 = vmatmul.bf16.gmra.mxu0 %v669
  %v2906 = vpop.f32.mrf.mxu0
  %v2907 = vadd.f32 0.0, %v2906
  %v2908 = vpop.f32.mrf.mxu0
  %v2909 = vadd.f32 0.0, %v2908
  %2910 = vmatmul.bf16.gmra.mxu0 %v2348
  %v2911 = vpop.f32.mrf.mxu0
  %v2912 = vadd.f32 0.0, %v2911
  %v2913 = vpop.f32.mrf.mxu0
  %v2914 = vadd.f32 0.0, %v2913
  %2915 = vdwg.mxu0
  %v2916 = vadd.f32 %v2800, %v2838
  %v2917 = vadd.f32 %v2801, %v2882
  %v2918 = vadd.f32 %v2802, %v2840
  %v2919 = vadd.f32 %v2803, %v2884
  %v2920 = vadd.f32 %v2804, %v2843
  %v2921 = vadd.f32 %v2805, %v2887
  %v2922 = vadd.f32 %v2806, %v2845
  %v2923 = vadd.f32 %v2807, %v2889
  %v2924 = vadd.f32 %v2808, %v2848
  %v2925 = vadd.f32 %v2809, %v2892
  %v2926 = vadd.f32 %v2810, %v2850
  %v2927 = vadd.f32 %v2811, %v2894
  %v2928 = vadd.f32 %v2812, %v2853
  %v2929 = vadd.f32 %v2813, %v2897
  %v2930 = vadd.f32 %v2814, %v2855
  %v2931 = vadd.f32 %v2815, %v2899
  %v2932 = vadd.f32 %v2816, %v2858
  %v2933 = vadd.f32 %v2817, %v2902
  %v2934 = vadd.f32 %v2818, %v2860
  %v2935 = vadd.f32 %v2819, %v2904
  %v2936 = vadd.f32 %v2820, %v2863
  %v2937 = vadd.f32 %v2821, %v2907
  %v2938 = vadd.f32 %v2822, %v2865
  %v2939 = vadd.f32 %v2823, %v2909
  %v2940 = vadd.f32 %v2824, %v2868
  %v2941 = vadd.f32 %v2825, %v2912
  %v2942 = vadd.f32 %v2826, %v2870
  %v2943 = vadd.f32 %v2827, %v2914
  %v2946 = vunpack.c.l.b16 %v104
  %v2947 = vunpack.c.l.b16 %v105
  %v2948 = vpack.c.b16 %v2947, %v2946
  %v2950 = vsel %vm228, %v2948, 0
  %2952 = vmatpush.bf16.msra.mxu0 0
  %2953 = vmatpush.bf16.msra.mxu0 0
  %2954 = vmatpush.bf16.msra.mxu0 %v1096
  %2955 = vmatpush.bf16.msra.mxu0 %v1094
  %2956 = vmatpush.bf16.msra.mxu0 %v1092
  %2957 = vmatpush.bf16.msra.mxu0 %v1090
  %2958 = vmatpush.bf16.msra.mxu0 %v1088
  %2959 = vmatpush.bf16.msra.mxu0 %v1086
  %2960 = vmatmul.bf16.gmra.mxu0 %v899
  %v2961 = vpop.f32.mrf.mxu0
  %v2962 = vadd.f32 0.0, %v2961
  %v2963 = vpop.f32.mrf.mxu0
  %v2964 = vadd.f32 0.0, %v2963
  %2965 = vmatmul.bf16.gmra.mxu0 %v902
  %v2966 = vpop.f32.mrf.mxu0
  %v2967 = vadd.f32 0.0, %v2966
  %v2968 = vpop.f32.mrf.mxu0
  %v2969 = vadd.f32 0.0, %v2968
  %2970 = vmatmul.bf16.gmra.mxu0 %v905
  %v2971 = vpop.f32.mrf.mxu0
  %v2972 = vadd.f32 0.0, %v2971
  %v2973 = vpop.f32.mrf.mxu0
  %v2974 = vadd.f32 0.0, %v2973
  %2975 = vmatmul.bf16.gmra.mxu0 %v908
  %v2976 = vpop.f32.mrf.mxu0
  %v2977 = vadd.f32 0.0, %v2976
  %v2978 = vpop.f32.mrf.mxu0
  %v2979 = vadd.f32 0.0, %v2978
  %2980 = vmatmul.bf16.gmra.mxu0 %v911
  %v2981 = vpop.f32.mrf.mxu0
  %v2982 = vadd.f32 0.0, %v2981
  %v2983 = vpop.f32.mrf.mxu0
  %v2984 = vadd.f32 0.0, %v2983
  %2985 = vmatmul.bf16.gmra.mxu0 %v914
  %v2986 = vpop.f32.mrf.mxu0
  %v2987 = vadd.f32 0.0, %v2986
  %v2988 = vpop.f32.mrf.mxu0
  %v2989 = vadd.f32 0.0, %v2988
  %2990 = vmatmul.bf16.gmra.mxu0 %v2950
  %v2991 = vpop.f32.mrf.mxu0
  %v2992 = vadd.f32 0.0, %v2991
  %v2993 = vpop.f32.mrf.mxu0
  %v2994 = vadd.f32 0.0, %v2993
  %2995 = vdwg.mxu0
  %2996 = vmatpush.bf16.msra.mxu0 0
  %2997 = vmatpush.bf16.msra.mxu0 0
  %2998 = vmatpush.bf16.msra.mxu0 %v1097
  %2999 = vmatpush.bf16.msra.mxu0 %v1095
  %3000 = vmatpush.bf16.msra.mxu0 %v1093
  %3001 = vmatpush.bf16.msra.mxu0 %v1091
  %3002 = vmatpush.bf16.msra.mxu0 %v1089
  %3003 = vmatpush.bf16.msra.mxu0 %v1087
  %3004 = vmatmul.bf16.gmra.mxu0 %v899
  %v3005 = vpop.f32.mrf.mxu0
  %v3006 = vadd.f32 0.0, %v3005
  %v3007 = vpop.f32.mrf.mxu0
  %v3008 = vadd.f32 0.0, %v3007
  %3009 = vmatmul.bf16.gmra.mxu0 %v902
  %v3010 = vpop.f32.mrf.mxu0
  %v3011 = vadd.f32 0.0, %v3010
  %v3012 = vpop.f32.mrf.mxu0
  %v3013 = vadd.f32 0.0, %v3012
  %3014 = vmatmul.bf16.gmra.mxu0 %v905
  %v3015 = vpop.f32.mrf.mxu0
  %v3016 = vadd.f32 0.0, %v3015
  %v3017 = vpop.f32.mrf.mxu0
  %v3018 = vadd.f32 0.0, %v3017
  %3019 = vmatmul.bf16.gmra.mxu0 %v908
  %v3020 = vpop.f32.mrf.mxu0
  %v3021 = vadd.f32 0.0, %v3020
  %v3022 = vpop.f32.mrf.mxu0
  %v3023 = vadd.f32 0.0, %v3022
  %3024 = vmatmul.bf16.gmra.mxu0 %v911
  %v3025 = vpop.f32.mrf.mxu0
  %v3026 = vadd.f32 0.0, %v3025
  %v3027 = vpop.f32.mrf.mxu0
  %v3028 = vadd.f32 0.0, %v3027
  %3029 = vmatmul.bf16.gmra.mxu0 %v914
  %v3030 = vpop.f32.mrf.mxu0
  %v3031 = vadd.f32 0.0, %v3030
  %v3032 = vpop.f32.mrf.mxu0
  %v3033 = vadd.f32 0.0, %v3032
  %3034 = vmatmul.bf16.gmra.mxu0 %v2950
  %v3035 = vpop.f32.mrf.mxu0
  %v3036 = vadd.f32 0.0, %v3035
  %v3037 = vpop.f32.mrf.mxu0
  %v3038 = vadd.f32 0.0, %v3037
  %3039 = vdwg.mxu0
  %v3040 = vadd.f32 %v2916, %v2962
  %v3041 = vadd.f32 %v2917, %v3006
  %v3042 = vadd.f32 %v2918, %v2964
  %v3043 = vadd.f32 %v2919, %v3008
  %v3044 = vadd.f32 %v2920, %v2967
  %v3045 = vadd.f32 %v2921, %v3011
  %v3046 = vadd.f32 %v2922, %v2969
  %v3047 = vadd.f32 %v2923, %v3013
  %v3048 = vadd.f32 %v2924, %v2972
  %v3049 = vadd.f32 %v2925, %v3016
  %v3050 = vadd.f32 %v2926, %v2974
  %v3051 = vadd.f32 %v2927, %v3018
  %v3052 = vadd.f32 %v2928, %v2977
  %v3053 = vadd.f32 %v2929, %v3021
  %v3054 = vadd.f32 %v2930, %v2979
  %v3055 = vadd.f32 %v2931, %v3023
  %v3056 = vadd.f32 %v2932, %v2982
  %v3057 = vadd.f32 %v2933, %v3026
  %v3058 = vadd.f32 %v2934, %v2984
  %v3059 = vadd.f32 %v2935, %v3028
  %v3060 = vadd.f32 %v2936, %v2987
  %v3061 = vadd.f32 %v2937, %v3031
  %v3062 = vadd.f32 %v2938, %v2989
  %v3063 = vadd.f32 %v2939, %v3033
  %v3064 = vadd.f32 %v2940, %v2992
  %v3065 = vadd.f32 %v2941, %v3036
  %v3066 = vadd.f32 %v2942, %v2994
  %v3067 = vadd.f32 %v2943, %v3038
  %v3068 = vadd.f32 %v3040, %v1230
  %v3069 = vadd.f32 %v3041, %v1231
  %v3070 = vadd.f32 %v3042, %v1230
  %v3071 = vadd.f32 %v3043, %v1231
  %v3072 = vadd.f32 %v3044, %v1230
  %v3073 = vadd.f32 %v3045, %v1231
  %v3074 = vadd.f32 %v3046, %v1230
  %v3075 = vadd.f32 %v3047, %v1231
  %v3076 = vadd.f32 %v3048, %v1230
  %v3077 = vadd.f32 %v3049, %v1231
  %v3078 = vadd.f32 %v3050, %v1230
  %v3079 = vadd.f32 %v3051, %v1231
  %v3080 = vadd.f32 %v3052, %v1230
  %v3081 = vadd.f32 %v3053, %v1231
  %v3082 = vadd.f32 %v3054, %v1230
  %v3083 = vadd.f32 %v3055, %v1231
  %v3084 = vadd.f32 %v3056, %v1230
  %v3085 = vadd.f32 %v3057, %v1231
  %v3086 = vadd.f32 %v3058, %v1230
  %v3087 = vadd.f32 %v3059, %v1231
  %v3088 = vadd.f32 %v3060, %v1230
  %v3089 = vadd.f32 %v3061, %v1231
  %v3090 = vadd.f32 %v3062, %v1230
  %v3091 = vadd.f32 %v3063, %v1231
  %v3092 = vadd.f32 %v3064, %v1230
  %v3093 = vadd.f32 %v3065, %v1231
  %v3094 = vadd.f32 %v3066, %v1230
  %v3095 = vadd.f32 %v3067, %v1231
  %v3096 = vmax.f32 %v3068, 0.0
  %v3097 = vmax.f32 %v3069, 0.0
  %v3098 = vmax.f32 %v3070, 0.0
  %v3099 = vmax.f32 %v3071, 0.0
  %v3100 = vmax.f32 %v3072, 0.0
  %v3101 = vmax.f32 %v3073, 0.0
  %v3102 = vmax.f32 %v3074, 0.0
  %v3103 = vmax.f32 %v3075, 0.0
  %v3104 = vmax.f32 %v3076, 0.0
  %v3105 = vmax.f32 %v3077, 0.0
  %v3106 = vmax.f32 %v3078, 0.0
  %v3107 = vmax.f32 %v3079, 0.0
  %v3108 = vmax.f32 %v3080, 0.0
  %v3109 = vmax.f32 %v3081, 0.0
  %v3110 = vmax.f32 %v3082, 0.0
  %v3111 = vmax.f32 %v3083, 0.0
  %v3112 = vmax.f32 %v3084, 0.0
  %v3113 = vmax.f32 %v3085, 0.0
  %v3114 = vmax.f32 %v3086, 0.0
  %v3115 = vmax.f32 %v3087, 0.0
  %v3116 = vmax.f32 %v3088, 0.0
  %v3117 = vmax.f32 %v3089, 0.0
  %v3118 = vmax.f32 %v3090, 0.0
  %v3119 = vmax.f32 %v3091, 0.0
  %v3120 = vmax.f32 %v3092, 0.0
  %v3121 = vmax.f32 %v3093, 0.0
  %v3122 = vmax.f32 %v3094, 0.0
  %v3123 = vmax.f32 %v3095, 0.0
  %v3124 = vmax.f32 %v3096, %v3097
  %v3125 = vmax.f32 %v3098, %v3099
  %v3126 = vmax.f32 %v3100, %v3101
  %v3127 = vmax.f32 %v3102, %v3103
  %v3128 = vmax.f32 %v3104, %v3105
  %v3129 = vmax.f32 %v3106, %v3107
  %v3130 = vmax.f32 %v3108, %v3109
  %v3131 = vmax.f32 %v3110, %v3111
  %v3132 = vmax.f32 %v3112, %v3113
  %v3133 = vmax.f32 %v3114, %v3115
  %v3134 = vmax.f32 %v3116, %v3117
  %v3135 = vmax.f32 %v3118, %v3119
  %v3136 = vmax.f32 %v3120, %v3121
  %v3137 = vmax.f32 %v3122, %v3123
  %v3138 = vmax.f32 %v2522, %v3124
  %v3139 = vmax.f32 %v2523, %v3125
  %v3140 = vmax.f32 %v2524, %v3126
  %v3141 = vmax.f32 %v2525, %v3127
  %v3142 = vmax.f32 %v2526, %v3128
  %v3143 = vmax.f32 %v2527, %v3129
  %v3144 = vmax.f32 %v2528, %v3130
  %v3145 = vmax.f32 %v2529, %v3131
  %v3146 = vmax.f32 %v2530, %v3132
  %v3147 = vmax.f32 %v2531, %v3133
  %v3148 = vmax.f32 %v2532, %v3134
  %v3149 = vmax.f32 %v2533, %v3135
  %v3150 = vmax.f32 %v2534, %v3136
  %v3151 = vmax.f32 %v2535, %v3137
  %v3152 = vpack.c.bf16 %v3138, %v3138
  %v3153 = vpack.c.bf16 %v3139, %v3139
  %v3154 = vpack.c.bf16 %v3140, %v3140
  %v3155 = vpack.c.bf16 %v3141, %v3141
  %v3156 = vpack.c.bf16 %v3142, %v3142
  %v3157 = vpack.c.bf16 %v3143, %v3143
  %v3158 = vpack.c.bf16 %v3144, %v3144
  %v3159 = vpack.c.bf16 %v3145, %v3145
  %v3160 = vpack.c.bf16 %v3146, %v3146
  %v3161 = vpack.c.bf16 %v3147, %v3147
  %v3162 = vpack.c.bf16 %v3148, %v3148
  %v3163 = vpack.c.bf16 %v3149, %v3149
  %v3164 = vpack.c.bf16 %v3150, %v3150
  %v3165 = vpack.c.bf16 %v3151, %v3151
  %v3166 = vld [vmem:[%s3] sm:$0xff]
  %v3167 = vld [vmem:[%s3 + $0x8] sm:$0xff]
  %v3168 = vld [vmem:[%s3 + $0x10] sm:$0xff]
  %v3169 = vld [vmem:[%s3 + $0x18] sm:$0xff]
  %v3170 = vld [vmem:[%s3 + $0x20] sm:$0xff]
  %v3171 = vld [vmem:[%s3 + $0x28] sm:$0xff]
  %v3172 = vld [vmem:[%s3 + $0x30] sm:$0xff]
  %v3173 = vld [vmem:[%s3 + $0x38] sm:$0xff]
  %v3174 = vld [vmem:[%s3 + $0x40] sm:$0xff]
  %v3175 = vld [vmem:[%s3 + $0x48] sm:$0xff]
  %v3176 = vld [vmem:[%s3 + $0x50] sm:$0xff]
  %v3177 = vld [vmem:[%s3 + $0x58] sm:$0xff]
  %v3178 = vld [vmem:[%s3 + $0x60] sm:$0xff]
  %v3179 = vld [vmem:[%s3 + $0x68] sm:$0xff]
  %v3180 = vld [vmem:[%s3 + $0x70] sm:$0xff]
  %v3181 = vld [vmem:[%s3 + $0x78] sm:$0xff]
  %s3182 = scalar_lea.vmem %s3, 128
  %v3183 = vld [vmem:[%s3182] sm:$0xff]
  %v3184 = vld [vmem:[%s3182 + $0x8] sm:$0xff]
  %v3185 = vld [vmem:[%s3182 + $0x10] sm:$0xff]
  %v3186 = vld [vmem:[%s3182 + $0x18] sm:$0xff]
  %v3187 = vld [vmem:[%s3182 + $0x20] sm:$0xff]
  %v3188 = vld [vmem:[%s3182 + $0x28] sm:$0xff]
  %v3189 = vld [vmem:[%s3182 + $0x30] sm:$0xff]
  %v3190 = vld [vmem:[%s3182 + $0x38] sm:$0xff]
  %v3191 = vld [vmem:[%s3182 + $0x40] sm:$0xff]
  %v3192 = vld [vmem:[%s3182 + $0x48] sm:$0xff]
  %v3193 = vld [vmem:[%s3182 + $0x50] sm:$0xff]
  %v3194 = vld [vmem:[%s3182 + $0x58] sm:$0xff]
  %v3195 = vld [vmem:[%s3182 + $0x60] sm:$0xff]
  %v3196 = vld [vmem:[%s3182 + $0x68] sm:$0xff]
  %v3197 = vld [vmem:[%s3182 + $0x70] sm:$0xff]
  %v3198 = vld [vmem:[%s3182 + $0x78] sm:$0xff]
  %v3209 = vunpack.c.l.b16 %v3152
  %v3210 = vunpack.c.l.b16 %v3153
  %v3211 = vunpack.c.l.b16 %v3154
  %v3212 = vunpack.c.l.b16 %v3155
  %v3213 = vunpack.c.l.b16 %v3156
  %v3214 = vunpack.c.l.b16 %v3157
  %v3215 = vunpack.c.l.b16 %v3158
  %v3216 = vunpack.c.l.b16 %v3159
  %v3217 = vunpack.c.l.b16 %v3160
  %v3218 = vunpack.c.l.b16 %v3161
  %v3219 = vpack.c.b16 %v3210, %v3209
  %v3220 = vpack.c.b16 %v3212, %v3211
  %v3221 = vpack.c.b16 %v3214, %v3213
  %v3222 = vpack.c.b16 %v3216, %v3215
  %v3223 = vpack.c.b16 %v3218, %v3217
  %v3245 = vunpack.c.l.b16 %v3183
  %v3246 = vunpack.c.h.b16 %v3183
  %v3247 = vunpack.c.l.b16 %v3184
  %v3248 = vunpack.c.h.b16 %v3184
  %v3249 = vunpack.c.l.b16 %v3185
  %v3250 = vunpack.c.h.b16 %v3185
  %v3251 = vunpack.c.l.b16 %v3186
  %v3252 = vunpack.c.h.b16 %v3186
  %v3253 = vunpack.c.l.b16 %v3187
  %v3254 = vunpack.c.h.b16 %v3187
  %v3255 = vunpack.c.l.b16 %v3188
  %v3256 = vunpack.c.h.b16 %v3188
  %v3257 = vunpack.c.l.b16 %v3189
  %v3258 = vunpack.c.h.b16 %v3189
  %v3259 = vunpack.c.l.b16 %v3190
  %v3260 = vunpack.c.h.b16 %v3190
  %v3261 = vunpack.c.l.b16 %v3191
  %v3262 = vunpack.c.h.b16 %v3191
  %v3263 = vunpack.c.l.b16 %v3192
  %v3264 = vunpack.c.h.b16 %v3192
  %v3265 = vunpack.c.l.b16 %v3193
  %v3266 = vunpack.c.h.b16 %v3193
  %v3267 = vunpack.c.l.b16 %v3194
  %v3268 = vunpack.c.h.b16 %v3194
  %v3269 = vunpack.c.l.b16 %v3195
  %v3270 = vunpack.c.h.b16 %v3195
  %v3271 = vunpack.c.l.b16 %v3196
  %v3272 = vunpack.c.h.b16 %v3196
  %v3273 = vunpack.c.l.b16 %v3197
  %v3274 = vunpack.c.h.b16 %v3197
  %v3275 = vunpack.c.l.b16 %v3198
  %v3276 = vunpack.c.h.b16 %v3198
  %v3277 = vpack.c.b16 %v3247, %v3245
  %v3278 = vpack.c.b16 %v3248, %v3246
  %v3279 = vpack.c.b16 %v3251, %v3249
  %v3280 = vpack.c.b16 %v3252, %v3250
  %v3281 = vpack.c.b16 %v3255, %v3253
  %v3282 = vpack.c.b16 %v3256, %v3254
  %v3283 = vpack.c.b16 %v3259, %v3257
  %v3284 = vpack.c.b16 %v3260, %v3258
  %v3285 = vpack.c.b16 %v3263, %v3261
  %v3286 = vpack.c.b16 %v3264, %v3262
  %v3287 = vpack.c.b16 %v3267, %v3265
  %v3288 = vpack.c.b16 %v3268, %v3266
  %v3289 = vpack.c.b16 %v3271, %v3269
  %v3290 = vpack.c.b16 %v3272, %v3270
  %v3291 = vpack.c.b16 %v3275, %v3273
  %v3292 = vpack.c.b16 %v3276, %v3274
  %3309 = vmatpush.bf16.msra.mxu0 %v3291
  %3310 = vmatpush.bf16.msra.mxu0 %v3289
  %3311 = vmatpush.bf16.msra.mxu0 %v3287
  %3312 = vmatpush.bf16.msra.mxu0 %v3285
  %3313 = vmatpush.bf16.msra.mxu0 %v3283
  %3314 = vmatpush.bf16.msra.mxu0 %v3281
  %3315 = vmatpush.bf16.msra.mxu0 %v3279
  %3316 = vmatpush.bf16.msra.mxu0 %v3277
  %3317 = vmatmul.bf16.gmra.mxu0 %v3219
  %v3318 = vpop.f32.mrf.mxu0
  %v3319 = vadd.f32 0.0, %v3318
  %v3320 = vpop.f32.mrf.mxu0
  %v3321 = vadd.f32 0.0, %v3320
  %3322 = vmatmul.bf16.gmra.mxu0 %v3220
  %v3323 = vpop.f32.mrf.mxu0
  %v3324 = vadd.f32 0.0, %v3323
  %v3325 = vpop.f32.mrf.mxu0
  %v3326 = vadd.f32 0.0, %v3325
  %3327 = vmatmul.bf16.gmra.mxu0 %v3221
  %v3328 = vpop.f32.mrf.mxu0
  %v3329 = vadd.f32 0.0, %v3328
  %v3330 = vpop.f32.mrf.mxu0
  %v3331 = vadd.f32 0.0, %v3330
  %3332 = vmatmul.bf16.gmra.mxu0 %v3222
  %v3333 = vpop.f32.mrf.mxu0
  %v3334 = vadd.f32 0.0, %v3333
  %v3335 = vpop.f32.mrf.mxu0
  %v3336 = vadd.f32 0.0, %v3335
  %3337 = vmatmul.bf16.gmra.mxu0 %v3223
  %v3338 = vpop.f32.mrf.mxu0
  %v3339 = vadd.f32 0.0, %v3338
  %v3340 = vpop.f32.mrf.mxu0
  %v3341 = vadd.f32 0.0, %v3340
  %3342 = vdwg.mxu0
  %3343 = vmatpush.bf16.msra.mxu0 %v3292
  %3344 = vmatpush.bf16.msra.mxu0 %v3290
  %3345 = vmatpush.bf16.msra.mxu0 %v3288
  %3346 = vmatpush.bf16.msra.mxu0 %v3286
  %3347 = vmatpush.bf16.msra.mxu0 %v3284
  %3348 = vmatpush.bf16.msra.mxu0 %v3282
  %3349 = vmatpush.bf16.msra.mxu0 %v3280
  %3350 = vmatpush.bf16.msra.mxu0 %v3278
  %3351 = vmatmul.bf16.gmra.mxu0 %v3219
  %v3352 = vpop.f32.mrf.mxu0
  %v3353 = vadd.f32 0.0, %v3352
  %v3354 = vpop.f32.mrf.mxu0
  %v3355 = vadd.f32 0.0, %v3354
  %3356 = vmatmul.bf16.gmra.mxu0 %v3220
  %v3357 = vpop.f32.mrf.mxu0
  %v3358 = vadd.f32 0.0, %v3357
  %v3359 = vpop.f32.mrf.mxu0
  %v3360 = vadd.f32 0.0, %v3359
  %3361 = vmatmul.bf16.gmra.mxu0 %v3221
  %v3362 = vpop.f32.mrf.mxu0
  %v3363 = vadd.f32 0.0, %v3362
  %v3364 = vpop.f32.mrf.mxu0
  %v3365 = vadd.f32 0.0, %v3364
  %3366 = vmatmul.bf16.gmra.mxu0 %v3222
  %v3367 = vpop.f32.mrf.mxu0
  %v3368 = vadd.f32 0.0, %v3367
  %v3369 = vpop.f32.mrf.mxu0
  %v3370 = vadd.f32 0.0, %v3369
  %3371 = vmatmul.bf16.gmra.mxu0 %v3223
  %v3372 = vpop.f32.mrf.mxu0
  %v3373 = vadd.f32 0.0, %v3372
  %v3374 = vpop.f32.mrf.mxu0
  %v3375 = vadd.f32 0.0, %v3374
  %3376 = vdwg.mxu0
  %v3387 = vunpack.c.l.b16 %v1920
  %v3388 = vunpack.c.l.b16 %v1921
  %v3389 = vunpack.c.l.b16 %v1922
  %v3390 = vunpack.c.l.b16 %v1923
  %v3391 = vunpack.c.l.b16 %v1924
  %v3392 = vunpack.c.l.b16 %v1925
  %v3393 = vunpack.c.l.b16 %v1926
  %v3394 = vunpack.c.l.b16 %v1927
  %v3395 = vunpack.c.l.b16 %v1928
  %v3396 = vunpack.c.l.b16 %v1929
  %v3397 = vpack.c.b16 %v3388, %v3387
  %v3398 = vpack.c.b16 %v3390, %v3389
  %v3399 = vpack.c.b16 %v3392, %v3391
  %v3400 = vpack.c.b16 %v3394, %v3393
  %v3401 = vpack.c.b16 %v3396, %v3395
  %v3423 = vunpack.c.l.b16 %v3166
  %v3424 = vunpack.c.h.b16 %v3166
  %v3425 = vunpack.c.l.b16 %v3167
  %v3426 = vunpack.c.h.b16 %v3167
  %v3427 = vunpack.c.l.b16 %v3168
  %v3428 = vunpack.c.h.b16 %v3168
  %v3429 = vunpack.c.l.b16 %v3169
  %v3430 = vunpack.c.h.b16 %v3169
  %v3431 = vunpack.c.l.b16 %v3170
  %v3432 = vunpack.c.h.b16 %v3170
  %v3433 = vunpack.c.l.b16 %v3171
  %v3434 = vunpack.c.h.b16 %v3171
  %v3435 = vunpack.c.l.b16 %v3172
  %v3436 = vunpack.c.h.b16 %v3172
  %v3437 = vunpack.c.l.b16 %v3173
  %v3438 = vunpack.c.h.b16 %v3173
  %v3439 = vunpack.c.l.b16 %v3174
  %v3440 = vunpack.c.h.b16 %v3174
  %v3441 = vunpack.c.l.b16 %v3175
  %v3442 = vunpack.c.h.b16 %v3175
  %v3443 = vunpack.c.l.b16 %v3176
  %v3444 = vunpack.c.h.b16 %v3176
  %v3445 = vunpack.c.l.b16 %v3177
  %v3446 = vunpack.c.h.b16 %v3177
  %v3447 = vunpack.c.l.b16 %v3178
  %v3448 = vunpack.c.h.b16 %v3178
  %v3449 = vunpack.c.l.b16 %v3179
  %v3450 = vunpack.c.h.b16 %v3179
  %v3451 = vunpack.c.l.b16 %v3180
  %v3452 = vunpack.c.h.b16 %v3180
  %v3453 = vunpack.c.l.b16 %v3181
  %v3454 = vunpack.c.h.b16 %v3181
  %v3455 = vpack.c.b16 %v3425, %v3423
  %v3456 = vpack.c.b16 %v3426, %v3424
  %v3457 = vpack.c.b16 %v3429, %v3427
  %v3458 = vpack.c.b16 %v3430, %v3428
  %v3459 = vpack.c.b16 %v3433, %v3431
  %v3460 = vpack.c.b16 %v3434, %v3432
  %v3461 = vpack.c.b16 %v3437, %v3435
  %v3462 = vpack.c.b16 %v3438, %v3436
  %v3463 = vpack.c.b16 %v3441, %v3439
  %v3464 = vpack.c.b16 %v3442, %v3440
  %v3465 = vpack.c.b16 %v3445, %v3443
  %v3466 = vpack.c.b16 %v3446, %v3444
  %v3467 = vpack.c.b16 %v3449, %v3447
  %v3468 = vpack.c.b16 %v3450, %v3448
  %v3469 = vpack.c.b16 %v3453, %v3451
  %v3470 = vpack.c.b16 %v3454, %v3452
  %3487 = vmatpush.bf16.msra.mxu0 %v3469
  %3488 = vmatpush.bf16.msra.mxu0 %v3467
  %3489 = vmatpush.bf16.msra.mxu0 %v3465
  %3490 = vmatpush.bf16.msra.mxu0 %v3463
  %3491 = vmatpush.bf16.msra.mxu0 %v3461
  %3492 = vmatpush.bf16.msra.mxu0 %v3459
  %3493 = vmatpush.bf16.msra.mxu0 %v3457
  %3494 = vmatpush.bf16.msra.mxu0 %v3455
  %3495 = vmatmul.bf16.gmra.mxu0 %v3397
  %v3496 = vpop.f32.mrf.mxu0
  %v3497 = vadd.f32 %v3319, %v3496
  %v3498 = vpop.f32.mrf.mxu0
  %v3499 = vadd.f32 %v3321, %v3498
  %3500 = vmatmul.bf16.gmra.mxu0 %v3398
  %v3501 = vpop.f32.mrf.mxu0
  %v3502 = vadd.f32 %v3324, %v3501
  %v3503 = vpop.f32.mrf.mxu0
  %v3504 = vadd.f32 %v3326, %v3503
  %3505 = vmatmul.bf16.gmra.mxu0 %v3399
  %v3506 = vpop.f32.mrf.mxu0
  %v3507 = vadd.f32 %v3329, %v3506
  %v3508 = vpop.f32.mrf.mxu0
  %v3509 = vadd.f32 %v3331, %v3508
  %3510 = vmatmul.bf16.gmra.mxu0 %v3400
  %v3511 = vpop.f32.mrf.mxu0
  %v3512 = vadd.f32 %v3334, %v3511
  %v3513 = vpop.f32.mrf.mxu0
  %v3514 = vadd.f32 %v3336, %v3513
  %3515 = vmatmul.bf16.gmra.mxu0 %v3401
  %v3516 = vpop.f32.mrf.mxu0
  %v3517 = vadd.f32 %v3339, %v3516
  %v3518 = vpop.f32.mrf.mxu0
  %v3519 = vadd.f32 %v3341, %v3518
  %3520 = vdwg.mxu0
  %3521 = vmatpush.bf16.msra.mxu0 %v3470
  %3522 = vmatpush.bf16.msra.mxu0 %v3468
  %3523 = vmatpush.bf16.msra.mxu0 %v3466
  %3524 = vmatpush.bf16.msra.mxu0 %v3464
  %3525 = vmatpush.bf16.msra.mxu0 %v3462
  %3526 = vmatpush.bf16.msra.mxu0 %v3460
  %3527 = vmatpush.bf16.msra.mxu0 %v3458
  %3528 = vmatpush.bf16.msra.mxu0 %v3456
  %3529 = vmatmul.bf16.gmra.mxu0 %v3397
  %v3530 = vpop.f32.mrf.mxu0
  %v3531 = vadd.f32 %v3353, %v3530
  %v3532 = vpop.f32.mrf.mxu0
  %v3533 = vadd.f32 %v3355, %v3532
  %3534 = vmatmul.bf16.gmra.mxu0 %v3398
  %v3535 = vpop.f32.mrf.mxu0
  %v3536 = vadd.f32 %v3358, %v3535
  %v3537 = vpop.f32.mrf.mxu0
  %v3538 = vadd.f32 %v3360, %v3537
  %3539 = vmatmul.bf16.gmra.mxu0 %v3399
  %v3540 = vpop.f32.mrf.mxu0
  %v3541 = vadd.f32 %v3363, %v3540
  %v3542 = vpop.f32.mrf.mxu0
  %v3543 = vadd.f32 %v3365, %v3542
  %3544 = vmatmul.bf16.gmra.mxu0 %v3400
  %v3545 = vpop.f32.mrf.mxu0
  %v3546 = vadd.f32 %v3368, %v3545
  %v3547 = vpop.f32.mrf.mxu0
  %v3548 = vadd.f32 %v3370, %v3547
  %3549 = vmatmul.bf16.gmra.mxu0 %v3401
  %v3550 = vpop.f32.mrf.mxu0
  %v3551 = vadd.f32 %v3373, %v3550
  %v3552 = vpop.f32.mrf.mxu0
  %v3553 = vadd.f32 %v3375, %v3552
  %3554 = vdwg.mxu0
  %s3555 = scalar_lea.vmem %s3, 256
  %v3556 = vld [vmem:[%s3555] sm:$0xff]
  %v3557 = vld [vmem:[%s3555 + $0x8] sm:$0xff]
  %v3558 = vld [vmem:[%s3555 + $0x10] sm:$0xff]
  %v3559 = vld [vmem:[%s3555 + $0x18] sm:$0xff]
  %v3560 = vld [vmem:[%s3555 + $0x20] sm:$0xff]
  %v3561 = vld [vmem:[%s3555 + $0x28] sm:$0xff]
  %v3562 = vld [vmem:[%s3555 + $0x30] sm:$0xff]
  %v3563 = vld [vmem:[%s3555 + $0x38] sm:$0xff]
  %v3564 = vld [vmem:[%s3555 + $0x40] sm:$0xff]
  %v3565 = vld [vmem:[%s3555 + $0x48] sm:$0xff]
  %v3566 = vld [vmem:[%s3555 + $0x50] sm:$0xff]
  %v3567 = vld [vmem:[%s3555 + $0x58] sm:$0xff]
  %v3568 = vld [vmem:[%s3555 + $0x60] sm:$0xff]
  %v3569 = vld [vmem:[%s3555 + $0x68] sm:$0xff]
  %v3570 = vld [vmem:[%s3555 + $0x70] sm:$0xff]
  %v3571 = vld [vmem:[%s3555 + $0x78] sm:$0xff]
  %v3574 = vunpack.c.l.b16 %v1930
  %v3575 = vunpack.c.l.b16 %v1931
  %v3576 = vpack.c.b16 %v3575, %v3574
  %v3594 = vunpack.c.l.b16 %v3556
  %v3595 = vunpack.c.h.b16 %v3556
  %v3596 = vunpack.c.l.b16 %v3557
  %v3597 = vunpack.c.h.b16 %v3557
  %v3598 = vunpack.c.l.b16 %v3558
  %v3599 = vunpack.c.h.b16 %v3558
  %v3600 = vunpack.c.l.b16 %v3559
  %v3601 = vunpack.c.h.b16 %v3559
  %v3602 = vunpack.c.l.b16 %v3560
  %v3603 = vunpack.c.h.b16 %v3560
  %v3604 = vunpack.c.l.b16 %v3561
  %v3605 = vunpack.c.h.b16 %v3561
  %v3606 = vunpack.c.l.b16 %v3562
  %v3607 = vunpack.c.h.b16 %v3562
  %v3608 = vunpack.c.l.b16 %v3563
  %v3609 = vunpack.c.h.b16 %v3563
  %v3610 = vunpack.c.l.b16 %v3564
  %v3611 = vunpack.c.h.b16 %v3564
  %v3612 = vunpack.c.l.b16 %v3565
  %v3613 = vunpack.c.h.b16 %v3565
  %v3614 = vunpack.c.l.b16 %v3566
  %v3615 = vunpack.c.h.b16 %v3566
  %v3616 = vunpack.c.l.b16 %v3567
  %v3617 = vunpack.c.h.b16 %v3567
  %v3618 = vunpack.c.l.b16 %v3568
  %v3619 = vunpack.c.h.b16 %v3568
  %v3620 = vunpack.c.l.b16 %v3569
  %v3621 = vunpack.c.h.b16 %v3569
  %v3622 = vunpack.c.l.b16 %v3570
  %v3623 = vunpack.c.h.b16 %v3570
  %v3624 = vunpack.c.l.b16 %v3571
  %v3625 = vunpack.c.h.b16 %v3571
  %v3626 = vpack.c.b16 %v3596, %v3594
  %v3627 = vpack.c.b16 %v3597, %v3595
  %v3628 = vpack.c.b16 %v3600, %v3598
  %v3629 = vpack.c.b16 %v3601, %v3599
  %v3630 = vpack.c.b16 %v3604, %v3602
  %v3631 = vpack.c.b16 %v3605, %v3603
  %v3632 = vpack.c.b16 %v3608, %v3606
  %v3633 = vpack.c.b16 %v3609, %v3607
  %v3634 = vpack.c.b16 %v3612, %v3610
  %v3635 = vpack.c.b16 %v3613, %v3611
  %v3636 = vpack.c.b16 %v3616, %v3614
  %v3637 = vpack.c.b16 %v3617, %v3615
  %v3638 = vpack.c.b16 %v3620, %v3618
  %v3639 = vpack.c.b16 %v3621, %v3619
  %v3640 = vpack.c.b16 %v3624, %v3622
  %v3641 = vpack.c.b16 %v3625, %v3623
  %3658 = vmatpush.bf16.msra.mxu0 %v3640
  %3659 = vmatpush.bf16.msra.mxu0 %v3638
  %3660 = vmatpush.bf16.msra.mxu0 %v3636
  %3661 = vmatpush.bf16.msra.mxu0 %v3634
  %3662 = vmatpush.bf16.msra.mxu0 %v3632
  %3663 = vmatpush.bf16.msra.mxu0 %v3630
  %3664 = vmatpush.bf16.msra.mxu0 %v3628
  %3665 = vmatpush.bf16.msra.mxu0 %v3626
  %3666 = vmatmul.bf16.gmra.mxu0 %v3398
  %v3667 = vpop.f32.mrf.mxu0
  %v3668 = vadd.f32 0.0, %v3667
  %v3669 = vpop.f32.mrf.mxu0
  %v3670 = vadd.f32 0.0, %v3669
  %3671 = vmatmul.bf16.gmra.mxu0 %v3399
  %v3672 = vpop.f32.mrf.mxu0
  %v3673 = vadd.f32 0.0, %v3672
  %v3674 = vpop.f32.mrf.mxu0
  %v3675 = vadd.f32 0.0, %v3674
  %3676 = vmatmul.bf16.gmra.mxu0 %v3400
  %v3677 = vpop.f32.mrf.mxu0
  %v3678 = vadd.f32 0.0, %v3677
  %v3679 = vpop.f32.mrf.mxu0
  %v3680 = vadd.f32 0.0, %v3679
  %3681 = vmatmul.bf16.gmra.mxu0 %v3401
  %v3682 = vpop.f32.mrf.mxu0
  %v3683 = vadd.f32 0.0, %v3682
  %v3684 = vpop.f32.mrf.mxu0
  %v3685 = vadd.f32 0.0, %v3684
  %3686 = vmatmul.bf16.gmra.mxu0 %v3576
  %v3687 = vpop.f32.mrf.mxu0
  %v3688 = vadd.f32 0.0, %v3687
  %v3689 = vpop.f32.mrf.mxu0
  %v3690 = vadd.f32 0.0, %v3689
  %3691 = vdwg.mxu0
  %3692 = vmatpush.bf16.msra.mxu0 %v3641
  %3693 = vmatpush.bf16.msra.mxu0 %v3639
  %3694 = vmatpush.bf16.msra.mxu0 %v3637
  %3695 = vmatpush.bf16.msra.mxu0 %v3635
  %3696 = vmatpush.bf16.msra.mxu0 %v3633
  %3697 = vmatpush.bf16.msra.mxu0 %v3631
  %3698 = vmatpush.bf16.msra.mxu0 %v3629
  %3699 = vmatpush.bf16.msra.mxu0 %v3627
  %3700 = vmatmul.bf16.gmra.mxu0 %v3398
  %v3701 = vpop.f32.mrf.mxu0
  %v3702 = vadd.f32 0.0, %v3701
  %v3703 = vpop.f32.mrf.mxu0
  %v3704 = vadd.f32 0.0, %v3703
  %3705 = vmatmul.bf16.gmra.mxu0 %v3399
  %v3706 = vpop.f32.mrf.mxu0
  %v3707 = vadd.f32 0.0, %v3706
  %v3708 = vpop.f32.mrf.mxu0
  %v3709 = vadd.f32 0.0, %v3708
  %3710 = vmatmul.bf16.gmra.mxu0 %v3400
  %v3711 = vpop.f32.mrf.mxu0
  %v3712 = vadd.f32 0.0, %v3711
  %v3713 = vpop.f32.mrf.mxu0
  %v3714 = vadd.f32 0.0, %v3713
  %3715 = vmatmul.bf16.gmra.mxu0 %v3401
  %v3716 = vpop.f32.mrf.mxu0
  %v3717 = vadd.f32 0.0, %v3716
  %v3718 = vpop.f32.mrf.mxu0
  %v3719 = vadd.f32 0.0, %v3718
  %3720 = vmatmul.bf16.gmra.mxu0 %v3576
  %v3721 = vpop.f32.mrf.mxu0
  %v3722 = vadd.f32 0.0, %v3721
  %v3723 = vpop.f32.mrf.mxu0
  %v3724 = vadd.f32 0.0, %v3723
  %3725 = vdwg.mxu0
  %v3726 = vadd.f32 %v3497, %v3668
  %v3727 = vadd.f32 %v3531, %v3702
  %v3728 = vadd.f32 %v3499, %v3670
  %v3729 = vadd.f32 %v3533, %v3704
  %v3730 = vadd.f32 %v3502, %v3673
  %v3731 = vadd.f32 %v3536, %v3707
  %v3732 = vadd.f32 %v3504, %v3675
  %v3733 = vadd.f32 %v3538, %v3709
  %v3734 = vadd.f32 %v3507, %v3678
  %v3735 = vadd.f32 %v3541, %v3712
  %v3736 = vadd.f32 %v3509, %v3680
  %v3737 = vadd.f32 %v3543, %v3714
  %v3738 = vadd.f32 %v3512, %v3683
  %v3739 = vadd.f32 %v3546, %v3717
  %v3740 = vadd.f32 %v3514, %v3685
  %v3741 = vadd.f32 %v3548, %v3719
  %v3742 = vadd.f32 %v3517, %v3688
  %v3743 = vadd.f32 %v3551, %v3722
  %v3744 = vadd.f32 %v3519, %v3690
  %v3745 = vadd.f32 %v3553, %v3724
  %s3746 = scalar_lea.vmem %s3, 384
  %v3747 = vld [vmem:[%s3746] sm:$0xff]
  %v3748 = vld [vmem:[%s3746 + $0x8] sm:$0xff]
  %v3749 = vld [vmem:[%s3746 + $0x10] sm:$0xff]
  %v3750 = vld [vmem:[%s3746 + $0x18] sm:$0xff]
  %v3751 = vld [vmem:[%s3746 + $0x20] sm:$0xff]
  %v3752 = vld [vmem:[%s3746 + $0x28] sm:$0xff]
  %v3753 = vld [vmem:[%s3746 + $0x30] sm:$0xff]
  %v3754 = vld [vmem:[%s3746 + $0x38] sm:$0xff]
  %v3755 = vld [vmem:[%s3746 + $0x40] sm:$0xff]
  %v3756 = vld [vmem:[%s3746 + $0x48] sm:$0xff]
  %v3757 = vld [vmem:[%s3746 + $0x50] sm:$0xff]
  %v3758 = vld [vmem:[%s3746 + $0x58] sm:$0xff]
  %v3759 = vld [vmem:[%s3746 + $0x60] sm:$0xff]
  %v3760 = vld [vmem:[%s3746 + $0x68] sm:$0xff]
  %v3761 = vld [vmem:[%s3746 + $0x70] sm:$0xff]
  %v3762 = vld [vmem:[%s3746 + $0x78] sm:$0xff]
  %v3765 = vunpack.c.l.b16 %v3162
  %v3766 = vunpack.c.l.b16 %v3163
  %v3767 = vpack.c.b16 %v3766, %v3765
  %v3785 = vunpack.c.l.b16 %v3747
  %v3786 = vunpack.c.h.b16 %v3747
  %v3787 = vunpack.c.l.b16 %v3748
  %v3788 = vunpack.c.h.b16 %v3748
  %v3789 = vunpack.c.l.b16 %v3749
  %v3790 = vunpack.c.h.b16 %v3749
  %v3791 = vunpack.c.l.b16 %v3750
  %v3792 = vunpack.c.h.b16 %v3750
  %v3793 = vunpack.c.l.b16 %v3751
  %v3794 = vunpack.c.h.b16 %v3751
  %v3795 = vunpack.c.l.b16 %v3752
  %v3796 = vunpack.c.h.b16 %v3752
  %v3797 = vunpack.c.l.b16 %v3753
  %v3798 = vunpack.c.h.b16 %v3753
  %v3799 = vunpack.c.l.b16 %v3754
  %v3800 = vunpack.c.h.b16 %v3754
  %v3801 = vunpack.c.l.b16 %v3755
  %v3802 = vunpack.c.h.b16 %v3755
  %v3803 = vunpack.c.l.b16 %v3756
  %v3804 = vunpack.c.h.b16 %v3756
  %v3805 = vunpack.c.l.b16 %v3757
  %v3806 = vunpack.c.h.b16 %v3757
  %v3807 = vunpack.c.l.b16 %v3758
  %v3808 = vunpack.c.h.b16 %v3758
  %v3809 = vunpack.c.l.b16 %v3759
  %v3810 = vunpack.c.h.b16 %v3759
  %v3811 = vunpack.c.l.b16 %v3760
  %v3812 = vunpack.c.h.b16 %v3760
  %v3813 = vunpack.c.l.b16 %v3761
  %v3814 = vunpack.c.h.b16 %v3761
  %v3815 = vunpack.c.l.b16 %v3762
  %v3816 = vunpack.c.h.b16 %v3762
  %v3817 = vpack.c.b16 %v3787, %v3785
  %v3818 = vpack.c.b16 %v3788, %v3786
  %v3819 = vpack.c.b16 %v3791, %v3789
  %v3820 = vpack.c.b16 %v3792, %v3790
  %v3821 = vpack.c.b16 %v3795, %v3793
  %v3822 = vpack.c.b16 %v3796, %v3794
  %v3823 = vpack.c.b16 %v3799, %v3797
  %v3824 = vpack.c.b16 %v3800, %v3798
  %v3825 = vpack.c.b16 %v3803, %v3801
  %v3826 = vpack.c.b16 %v3804, %v3802
  %v3827 = vpack.c.b16 %v3807, %v3805
  %v3828 = vpack.c.b16 %v3808, %v3806
  %v3829 = vpack.c.b16 %v3811, %v3809
  %v3830 = vpack.c.b16 %v3812, %v3810
  %v3831 = vpack.c.b16 %v3815, %v3813
  %v3832 = vpack.c.b16 %v3816, %v3814
  %3849 = vmatpush.bf16.msra.mxu0 %v3831
  %3850 = vmatpush.bf16.msra.mxu0 %v3829
  %3851 = vmatpush.bf16.msra.mxu0 %v3827
  %3852 = vmatpush.bf16.msra.mxu0 %v3825
  %3853 = vmatpush.bf16.msra.mxu0 %v3823
  %3854 = vmatpush.bf16.msra.mxu0 %v3821
  %3855 = vmatpush.bf16.msra.mxu0 %v3819
  %3856 = vmatpush.bf16.msra.mxu0 %v3817
  %3857 = vmatmul.bf16.gmra.mxu0 %v3220
  %v3858 = vpop.f32.mrf.mxu0
  %v3859 = vadd.f32 0.0, %v3858
  %v3860 = vpop.f32.mrf.mxu0
  %v3861 = vadd.f32 0.0, %v3860
  %3862 = vmatmul.bf16.gmra.mxu0 %v3221
  %v3863 = vpop.f32.mrf.mxu0
  %v3864 = vadd.f32 0.0, %v3863
  %v3865 = vpop.f32.mrf.mxu0
  %v3866 = vadd.f32 0.0, %v3865
  %3867 = vmatmul.bf16.gmra.mxu0 %v3222
  %v3868 = vpop.f32.mrf.mxu0
  %v3869 = vadd.f32 0.0, %v3868
  %v3870 = vpop.f32.mrf.mxu0
  %v3871 = vadd.f32 0.0, %v3870
  %3872 = vmatmul.bf16.gmra.mxu0 %v3223
  %v3873 = vpop.f32.mrf.mxu0
  %v3874 = vadd.f32 0.0, %v3873
  %v3875 = vpop.f32.mrf.mxu0
  %v3876 = vadd.f32 0.0, %v3875
  %3877 = vmatmul.bf16.gmra.mxu0 %v3767
  %v3878 = vpop.f32.mrf.mxu0
  %v3879 = vadd.f32 0.0, %v3878
  %v3880 = vpop.f32.mrf.mxu0
  %v3881 = vadd.f32 0.0, %v3880
  %3882 = vdwg.mxu0
  %3883 = vmatpush.bf16.msra.mxu0 %v3832
  %3884 = vmatpush.bf16.msra.mxu0 %v3830
  %3885 = vmatpush.bf16.msra.mxu0 %v3828
  %3886 = vmatpush.bf16.msra.mxu0 %v3826
  %3887 = vmatpush.bf16.msra.mxu0 %v3824
  %3888 = vmatpush.bf16.msra.mxu0 %v3822
  %3889 = vmatpush.bf16.msra.mxu0 %v3820
  %3890 = vmatpush.bf16.msra.mxu0 %v3818
  %3891 = vmatmul.bf16.gmra.mxu0 %v3220
  %v3892 = vpop.f32.mrf.mxu0
  %v3893 = vadd.f32 0.0, %v3892
  %v3894 = vpop.f32.mrf.mxu0
  %v3895 = vadd.f32 0.0, %v3894
  %3896 = vmatmul.bf16.gmra.mxu0 %v3221
  %v3897 = vpop.f32.mrf.mxu0
  %v3898 = vadd.f32 0.0, %v3897
  %v3899 = vpop.f32.mrf.mxu0
  %v3900 = vadd.f32 0.0, %v3899
  %3901 = vmatmul.bf16.gmra.mxu0 %v3222
  %v3902 = vpop.f32.mrf.mxu0
  %v3903 = vadd.f32 0.0, %v3902
  %v3904 = vpop.f32.mrf.mxu0
  %v3905 = vadd.f32 0.0, %v3904
  %3906 = vmatmul.bf16.gmra.mxu0 %v3223
  %v3907 = vpop.f32.mrf.mxu0
  %v3908 = vadd.f32 0.0, %v3907
  %v3909 = vpop.f32.mrf.mxu0
  %v3910 = vadd.f32 0.0, %v3909
  %3911 = vmatmul.bf16.gmra.mxu0 %v3767
  %v3912 = vpop.f32.mrf.mxu0
  %v3913 = vadd.f32 0.0, %v3912
  %v3914 = vpop.f32.mrf.mxu0
  %v3915 = vadd.f32 0.0, %v3914
  %3916 = vdwg.mxu0
  %v3917 = vadd.f32 %v3726, %v3859
  %v3918 = vadd.f32 %v3727, %v3893
  %v3919 = vadd.f32 %v3728, %v3861
  %v3920 = vadd.f32 %v3729, %v3895
  %v3921 = vadd.f32 %v3730, %v3864
  %v3922 = vadd.f32 %v3731, %v3898
  %v3923 = vadd.f32 %v3732, %v3866
  %v3924 = vadd.f32 %v3733, %v3900
  %v3925 = vadd.f32 %v3734, %v3869
  %v3926 = vadd.f32 %v3735, %v3903
  %v3927 = vadd.f32 %v3736, %v3871
  %v3928 = vadd.f32 %v3737, %v3905
  %v3929 = vadd.f32 %v3738, %v3874
  %v3930 = vadd.f32 %v3739, %v3908
  %v3931 = vadd.f32 %v3740, %v3876
  %v3932 = vadd.f32 %v3741, %v3910
  %v3933 = vadd.f32 %v3742, %v3879
  %v3934 = vadd.f32 %v3743, %v3913
  %v3935 = vadd.f32 %v3744, %v3881
  %v3936 = vadd.f32 %v3745, %v3915
  %s3937 = scalar_lea.vmem %s3, 512
  %v3938 = vld [vmem:[%s3937] sm:$0xff]
  %v3939 = vld [vmem:[%s3937 + $0x8] sm:$0xff]
  %v3940 = vld [vmem:[%s3937 + $0x10] sm:$0xff]
  %v3941 = vld [vmem:[%s3937 + $0x18] sm:$0xff]
  %v3942 = vld [vmem:[%s3937 + $0x20] sm:$0xff]
  %v3943 = vld [vmem:[%s3937 + $0x28] sm:$0xff]
  %v3944 = vld [vmem:[%s3937 + $0x30] sm:$0xff]
  %v3945 = vld [vmem:[%s3937 + $0x38] sm:$0xff]
  %v3946 = vld [vmem:[%s3937 + $0x40] sm:$0xff]
  %v3947 = vld [vmem:[%s3937 + $0x48] sm:$0xff]
  %v3948 = vld [vmem:[%s3937 + $0x50] sm:$0xff]
  %v3949 = vld [vmem:[%s3937 + $0x58] sm:$0xff]
  %v3950 = vld [vmem:[%s3937 + $0x60] sm:$0xff]
  %v3951 = vld [vmem:[%s3937 + $0x68] sm:$0xff]
  %v3952 = vld [vmem:[%s3937 + $0x70] sm:$0xff]
  %v3953 = vld [vmem:[%s3937 + $0x78] sm:$0xff]
  %v3956 = vunpack.c.l.b16 %v1932
  %v3957 = vunpack.c.l.b16 %v1933
  %v3958 = vpack.c.b16 %v3957, %v3956
  %v3976 = vunpack.c.l.b16 %v3938
  %v3977 = vunpack.c.h.b16 %v3938
  %v3978 = vunpack.c.l.b16 %v3939
  %v3979 = vunpack.c.h.b16 %v3939
  %v3980 = vunpack.c.l.b16 %v3940
  %v3981 = vunpack.c.h.b16 %v3940
  %v3982 = vunpack.c.l.b16 %v3941
  %v3983 = vunpack.c.h.b16 %v3941
  %v3984 = vunpack.c.l.b16 %v3942
  %v3985 = vunpack.c.h.b16 %v3942
  %v3986 = vunpack.c.l.b16 %v3943
  %v3987 = vunpack.c.h.b16 %v3943
  %v3988 = vunpack.c.l.b16 %v3944
  %v3989 = vunpack.c.h.b16 %v3944
  %v3990 = vunpack.c.l.b16 %v3945
  %v3991 = vunpack.c.h.b16 %v3945
  %v3992 = vunpack.c.l.b16 %v3946
  %v3993 = vunpack.c.h.b16 %v3946
  %v3994 = vunpack.c.l.b16 %v3947
  %v3995 = vunpack.c.h.b16 %v3947
  %v3996 = vunpack.c.l.b16 %v3948
  %v3997 = vunpack.c.h.b16 %v3948
  %v3998 = vunpack.c.l.b16 %v3949
  %v3999 = vunpack.c.h.b16 %v3949
  %v4000 = vunpack.c.l.b16 %v3950
  %v4001 = vunpack.c.h.b16 %v3950
  %v4002 = vunpack.c.l.b16 %v3951
  %v4003 = vunpack.c.h.b16 %v3951
  %v4004 = vunpack.c.l.b16 %v3952
  %v4005 = vunpack.c.h.b16 %v3952
  %v4006 = vunpack.c.l.b16 %v3953
  %v4007 = vunpack.c.h.b16 %v3953
  %v4008 = vpack.c.b16 %v3978, %v3976
  %v4009 = vpack.c.b16 %v3979, %v3977
  %v4010 = vpack.c.b16 %v3982, %v3980
  %v4011 = vpack.c.b16 %v3983, %v3981
  %v4012 = vpack.c.b16 %v3986, %v3984
  %v4013 = vpack.c.b16 %v3987, %v3985
  %v4014 = vpack.c.b16 %v3990, %v3988
  %v4015 = vpack.c.b16 %v3991, %v3989
  %v4016 = vpack.c.b16 %v3994, %v3992
  %v4017 = vpack.c.b16 %v3995, %v3993
  %v4018 = vpack.c.b16 %v3998, %v3996
  %v4019 = vpack.c.b16 %v3999, %v3997
  %v4020 = vpack.c.b16 %v4002, %v4000
  %v4021 = vpack.c.b16 %v4003, %v4001
  %v4022 = vpack.c.b16 %v4006, %v4004
  %v4023 = vpack.c.b16 %v4007, %v4005
  %4040 = vmatpush.bf16.msra.mxu0 %v4022
  %4041 = vmatpush.bf16.msra.mxu0 %v4020
  %4042 = vmatpush.bf16.msra.mxu0 %v4018
  %4043 = vmatpush.bf16.msra.mxu0 %v4016
  %4044 = vmatpush.bf16.msra.mxu0 %v4014
  %4045 = vmatpush.bf16.msra.mxu0 %v4012
  %4046 = vmatpush.bf16.msra.mxu0 %v4010
  %4047 = vmatpush.bf16.msra.mxu0 %v4008
  %4048 = vmatmul.bf16.gmra.mxu0 %v3399
  %v4049 = vpop.f32.mrf.mxu0
  %v4050 = vadd.f32 0.0, %v4049
  %v4051 = vpop.f32.mrf.mxu0
  %v4052 = vadd.f32 0.0, %v4051
  %4053 = vmatmul.bf16.gmra.mxu0 %v3400
  %v4054 = vpop.f32.mrf.mxu0
  %v4055 = vadd.f32 0.0, %v4054
  %v4056 = vpop.f32.mrf.mxu0
  %v4057 = vadd.f32 0.0, %v4056
  %4058 = vmatmul.bf16.gmra.mxu0 %v3401
  %v4059 = vpop.f32.mrf.mxu0
  %v4060 = vadd.f32 0.0, %v4059
  %v4061 = vpop.f32.mrf.mxu0
  %v4062 = vadd.f32 0.0, %v4061
  %4063 = vmatmul.bf16.gmra.mxu0 %v3576
  %v4064 = vpop.f32.mrf.mxu0
  %v4065 = vadd.f32 0.0, %v4064
  %v4066 = vpop.f32.mrf.mxu0
  %v4067 = vadd.f32 0.0, %v4066
  %4068 = vmatmul.bf16.gmra.mxu0 %v3958
  %v4069 = vpop.f32.mrf.mxu0
  %v4070 = vadd.f32 0.0, %v4069
  %v4071 = vpop.f32.mrf.mxu0
  %v4072 = vadd.f32 0.0, %v4071
  %4073 = vdwg.mxu0
  %4074 = vmatpush.bf16.msra.mxu0 %v4023
  %4075 = vmatpush.bf16.msra.mxu0 %v4021
  %4076 = vmatpush.bf16.msra.mxu0 %v4019
  %4077 = vmatpush.bf16.msra.mxu0 %v4017
  %4078 = vmatpush.bf16.msra.mxu0 %v4015
  %4079 = vmatpush.bf16.msra.mxu0 %v4013
  %4080 = vmatpush.bf16.msra.mxu0 %v4011
  %4081 = vmatpush.bf16.msra.mxu0 %v4009
  %4082 = vmatmul.bf16.gmra.mxu0 %v3399
  %v4083 = vpop.f32.mrf.mxu0
  %v4084 = vadd.f32 0.0, %v4083
  %v4085 = vpop.f32.mrf.mxu0
  %v4086 = vadd.f32 0.0, %v4085
  %4087 = vmatmul.bf16.gmra.mxu0 %v3400
  %v4088 = vpop.f32.mrf.mxu0
  %v4089 = vadd.f32 0.0, %v4088
  %v4090 = vpop.f32.mrf.mxu0
  %v4091 = vadd.f32 0.0, %v4090
  %4092 = vmatmul.bf16.gmra.mxu0 %v3401
  %v4093 = vpop.f32.mrf.mxu0
  %v4094 = vadd.f32 0.0, %v4093
  %v4095 = vpop.f32.mrf.mxu0
  %v4096 = vadd.f32 0.0, %v4095
  %4097 = vmatmul.bf16.gmra.mxu0 %v3576
  %v4098 = vpop.f32.mrf.mxu0
  %v4099 = vadd.f32 0.0, %v4098
  %v4100 = vpop.f32.mrf.mxu0
  %v4101 = vadd.f32 0.0, %v4100
  %4102 = vmatmul.bf16.gmra.mxu0 %v3958
  %v4103 = vpop.f32.mrf.mxu0
  %v4104 = vadd.f32 0.0, %v4103
  %v4105 = vpop.f32.mrf.mxu0
  %v4106 = vadd.f32 0.0, %v4105
  %4107 = vdwg.mxu0
  %v4108 = vadd.f32 %v3917, %v4050
  %v4109 = vadd.f32 %v3918, %v4084
  %v4110 = vadd.f32 %v3919, %v4052
  %v4111 = vadd.f32 %v3920, %v4086
  %v4112 = vadd.f32 %v3921, %v4055
  %v4113 = vadd.f32 %v3922, %v4089
  %v4114 = vadd.f32 %v3923, %v4057
  %v4115 = vadd.f32 %v3924, %v4091
  %v4116 = vadd.f32 %v3925, %v4060
  %v4117 = vadd.f32 %v3926, %v4094
  %v4118 = vadd.f32 %v3927, %v4062
  %v4119 = vadd.f32 %v3928, %v4096
  %v4120 = vadd.f32 %v3929, %v4065
  %v4121 = vadd.f32 %v3930, %v4099
  %v4122 = vadd.f32 %v3931, %v4067
  %v4123 = vadd.f32 %v3932, %v4101
  %v4124 = vadd.f32 %v3933, %v4070
  %v4125 = vadd.f32 %v3934, %v4104
  %v4126 = vadd.f32 %v3935, %v4072
  %v4127 = vadd.f32 %v3936, %v4106
  %v4129 = vperm.slane %v107, 0
  %v4130 = vperm.slane %v107, 1
  %v4133 = vadd.f32 %v4108, %v4129
  %v4134 = vadd.f32 %v4109, %v4130
  %v4135 = vadd.f32 %v4110, %v4129
  %v4136 = vadd.f32 %v4111, %v4130
  %v4137 = vadd.f32 %v4112, %v4129
  %v4138 = vadd.f32 %v4113, %v4130
  %v4139 = vadd.f32 %v4114, %v4129
  %v4140 = vadd.f32 %v4115, %v4130
  %v4141 = vadd.f32 %v4116, %v4129
  %v4142 = vadd.f32 %v4117, %v4130
  %v4143 = vadd.f32 %v4118, %v4129
  %v4144 = vadd.f32 %v4119, %v4130
  %v4145 = vadd.f32 %v4120, %v4129
  %v4146 = vadd.f32 %v4121, %v4130
  %v4147 = vadd.f32 %v4122, %v4129
  %v4148 = vadd.f32 %v4123, %v4130
  %v4149 = vadd.f32 %v4124, %v4129
  %v4150 = vadd.f32 %v4125, %v4130
  %v4151 = vadd.f32 %v4126, %v4129
  %v4152 = vadd.f32 %v4127, %v4130
  %v4153 = vmax.f32 %v4133, 0.0
  %v4154 = vmax.f32 %v4134, 0.0
  %v4155 = vmax.f32 %v4135, 0.0
  %v4156 = vmax.f32 %v4136, 0.0
  %v4157 = vmax.f32 %v4137, 0.0
  %v4158 = vmax.f32 %v4138, 0.0
  %v4159 = vmax.f32 %v4139, 0.0
  %v4160 = vmax.f32 %v4140, 0.0
  %v4161 = vmax.f32 %v4141, 0.0
  %v4162 = vmax.f32 %v4142, 0.0
  %v4163 = vmax.f32 %v4143, 0.0
  %v4164 = vmax.f32 %v4144, 0.0
  %v4165 = vmax.f32 %v4145, 0.0
  %v4166 = vmax.f32 %v4146, 0.0
  %v4167 = vmax.f32 %v4147, 0.0
  %v4168 = vmax.f32 %v4148, 0.0
  %v4169 = vmax.f32 %v4149, 0.0
  %v4170 = vmax.f32 %v4150, 0.0
  %v4171 = vmax.f32 %v4151, 0.0
  %v4172 = vmax.f32 %v4152, 0.0
  %v4173 = vmax.f32 %v4153, %v4154
  %v4174 = vmax.f32 %v4155, %v4156
  %v4175 = vmax.f32 %v4157, %v4158
  %v4176 = vmax.f32 %v4159, %v4160
  %v4177 = vmax.f32 %v4161, %v4162
  %v4178 = vmax.f32 %v4163, %v4164
  %v4179 = vmax.f32 %v4165, %v4166
  %v4180 = vmax.f32 %v4167, %v4168
  %v4181 = vmax.f32 %v4169, %v4170
  %v4182 = vmax.f32 %v4171, %v4172
  %4183 = vmatpush.bf16.msra.mxu0 %v3291
  %4184 = vmatpush.bf16.msra.mxu0 %v3289
  %4185 = vmatpush.bf16.msra.mxu0 %v3287
  %4186 = vmatpush.bf16.msra.mxu0 %v3285
  %4187 = vmatpush.bf16.msra.mxu0 %v3283
  %4188 = vmatpush.bf16.msra.mxu0 %v3281
  %4189 = vmatpush.bf16.msra.mxu0 %v3279
  %4190 = vmatpush.bf16.msra.mxu0 %v3277
  %4191 = vmatmul.bf16.gmra.mxu0 %v3398
  %v4192 = vpop.f32.mrf.mxu0
  %v4193 = vadd.f32 0.0, %v4192
  %v4194 = vpop.f32.mrf.mxu0
  %v4195 = vadd.f32 0.0, %v4194
  %4196 = vmatmul.bf16.gmra.mxu0 %v3399
  %v4197 = vpop.f32.mrf.mxu0
  %v4198 = vadd.f32 0.0, %v4197
  %v4199 = vpop.f32.mrf.mxu0
  %v4200 = vadd.f32 0.0, %v4199
  %4201 = vmatmul.bf16.gmra.mxu0 %v3400
  %v4202 = vpop.f32.mrf.mxu0
  %v4203 = vadd.f32 0.0, %v4202
  %v4204 = vpop.f32.mrf.mxu0
  %v4205 = vadd.f32 0.0, %v4204
  %4206 = vmatmul.bf16.gmra.mxu0 %v3401
  %v4207 = vpop.f32.mrf.mxu0
  %v4208 = vadd.f32 0.0, %v4207
  %v4209 = vpop.f32.mrf.mxu0
  %v4210 = vadd.f32 0.0, %v4209
  %4211 = vmatmul.bf16.gmra.mxu0 %v3576
  %v4212 = vpop.f32.mrf.mxu0
  %v4213 = vadd.f32 0.0, %v4212
  %v4214 = vpop.f32.mrf.mxu0
  %v4215 = vadd.f32 0.0, %v4214
  %4216 = vdwg.mxu0
  %4217 = vmatpush.bf16.msra.mxu0 %v3292
  %4218 = vmatpush.bf16.msra.mxu0 %v3290
  %4219 = vmatpush.bf16.msra.mxu0 %v3288
  %4220 = vmatpush.bf16.msra.mxu0 %v3286
  %4221 = vmatpush.bf16.msra.mxu0 %v3284
  %4222 = vmatpush.bf16.msra.mxu0 %v3282
  %4223 = vmatpush.bf16.msra.mxu0 %v3280
  %4224 = vmatpush.bf16.msra.mxu0 %v3278
  %4225 = vmatmul.bf16.gmra.mxu0 %v3398
  %v4226 = vpop.f32.mrf.mxu0
  %v4227 = vadd.f32 0.0, %v4226
  %v4228 = vpop.f32.mrf.mxu0
  %v4229 = vadd.f32 0.0, %v4228
  %4230 = vmatmul.bf16.gmra.mxu0 %v3399
  %v4231 = vpop.f32.mrf.mxu0
  %v4232 = vadd.f32 0.0, %v4231
  %v4233 = vpop.f32.mrf.mxu0
  %v4234 = vadd.f32 0.0, %v4233
  %4235 = vmatmul.bf16.gmra.mxu0 %v3400
  %v4236 = vpop.f32.mrf.mxu0
  %v4237 = vadd.f32 0.0, %v4236
  %v4238 = vpop.f32.mrf.mxu0
  %v4239 = vadd.f32 0.0, %v4238
  %4240 = vmatmul.bf16.gmra.mxu0 %v3401
  %v4241 = vpop.f32.mrf.mxu0
  %v4242 = vadd.f32 0.0, %v4241
  %v4243 = vpop.f32.mrf.mxu0
  %v4244 = vadd.f32 0.0, %v4243
  %4245 = vmatmul.bf16.gmra.mxu0 %v3576
  %v4246 = vpop.f32.mrf.mxu0
  %v4247 = vadd.f32 0.0, %v4246
  %v4248 = vpop.f32.mrf.mxu0
  %v4249 = vadd.f32 0.0, %v4248
  %4250 = vdwg.mxu0
  %4251 = vmatpush.bf16.msra.mxu0 %v3469
  %4252 = vmatpush.bf16.msra.mxu0 %v3467
  %4253 = vmatpush.bf16.msra.mxu0 %v3465
  %4254 = vmatpush.bf16.msra.mxu0 %v3463
  %4255 = vmatpush.bf16.msra.mxu0 %v3461
  %4256 = vmatpush.bf16.msra.mxu0 %v3459
  %4257 = vmatpush.bf16.msra.mxu0 %v3457
  %4258 = vmatpush.bf16.msra.mxu0 %v3455
  %4259 = vmatmul.bf16.gmra.mxu0 %v3219
  %v4260 = vpop.f32.mrf.mxu0
  %v4261 = vadd.f32 %v4193, %v4260
  %v4262 = vpop.f32.mrf.mxu0
  %v4263 = vadd.f32 %v4195, %v4262
  %4264 = vmatmul.bf16.gmra.mxu0 %v3220
  %v4265 = vpop.f32.mrf.mxu0
  %v4266 = vadd.f32 %v4198, %v4265
  %v4267 = vpop.f32.mrf.mxu0
  %v4268 = vadd.f32 %v4200, %v4267
  %4269 = vmatmul.bf16.gmra.mxu0 %v3221
  %v4270 = vpop.f32.mrf.mxu0
  %v4271 = vadd.f32 %v4203, %v4270
  %v4272 = vpop.f32.mrf.mxu0
  %v4273 = vadd.f32 %v4205, %v4272
  %4274 = vmatmul.bf16.gmra.mxu0 %v3222
  %v4275 = vpop.f32.mrf.mxu0
  %v4276 = vadd.f32 %v4208, %v4275
  %v4277 = vpop.f32.mrf.mxu0
  %v4278 = vadd.f32 %v4210, %v4277
  %4279 = vmatmul.bf16.gmra.mxu0 %v3223
  %v4280 = vpop.f32.mrf.mxu0
  %v4281 = vadd.f32 %v4213, %v4280
  %v4282 = vpop.f32.mrf.mxu0
  %v4283 = vadd.f32 %v4215, %v4282
  %4284 = vdwg.mxu0
  %4285 = vmatpush.bf16.msra.mxu0 %v3470
  %4286 = vmatpush.bf16.msra.mxu0 %v3468
  %4287 = vmatpush.bf16.msra.mxu0 %v3466
  %4288 = vmatpush.bf16.msra.mxu0 %v3464
  %4289 = vmatpush.bf16.msra.mxu0 %v3462
  %4290 = vmatpush.bf16.msra.mxu0 %v3460
  %4291 = vmatpush.bf16.msra.mxu0 %v3458
  %4292 = vmatpush.bf16.msra.mxu0 %v3456
  %4293 = vmatmul.bf16.gmra.mxu0 %v3219
  %v4294 = vpop.f32.mrf.mxu0
  %v4295 = vadd.f32 %v4227, %v4294
  %v4296 = vpop.f32.mrf.mxu0
  %v4297 = vadd.f32 %v4229, %v4296
  %4298 = vmatmul.bf16.gmra.mxu0 %v3220
  %v4299 = vpop.f32.mrf.mxu0
  %v4300 = vadd.f32 %v4232, %v4299
  %v4301 = vpop.f32.mrf.mxu0
  %v4302 = vadd.f32 %v4234, %v4301
  %4303 = vmatmul.bf16.gmra.mxu0 %v3221
  %v4304 = vpop.f32.mrf.mxu0
  %v4305 = vadd.f32 %v4237, %v4304
  %v4306 = vpop.f32.mrf.mxu0
  %v4307 = vadd.f32 %v4239, %v4306
  %4308 = vmatmul.bf16.gmra.mxu0 %v3222
  %v4309 = vpop.f32.mrf.mxu0
  %v4310 = vadd.f32 %v4242, %v4309
  %v4311 = vpop.f32.mrf.mxu0
  %v4312 = vadd.f32 %v4244, %v4311
  %4313 = vmatmul.bf16.gmra.mxu0 %v3223
  %v4314 = vpop.f32.mrf.mxu0
  %v4315 = vadd.f32 %v4247, %v4314
  %v4316 = vpop.f32.mrf.mxu0
  %v4317 = vadd.f32 %v4249, %v4316
  %4318 = vdwg.mxu0
  %4319 = vmatpush.bf16.msra.mxu0 %v3640
  %4320 = vmatpush.bf16.msra.mxu0 %v3638
  %4321 = vmatpush.bf16.msra.mxu0 %v3636
  %4322 = vmatpush.bf16.msra.mxu0 %v3634
  %4323 = vmatpush.bf16.msra.mxu0 %v3632
  %4324 = vmatpush.bf16.msra.mxu0 %v3630
  %4325 = vmatpush.bf16.msra.mxu0 %v3628
  %4326 = vmatpush.bf16.msra.mxu0 %v3626
  %4327 = vmatmul.bf16.gmra.mxu0 %v3220
  %v4328 = vpop.f32.mrf.mxu0
  %v4329 = vadd.f32 0.0, %v4328
  %v4330 = vpop.f32.mrf.mxu0
  %v4331 = vadd.f32 0.0, %v4330
  %4332 = vmatmul.bf16.gmra.mxu0 %v3221
  %v4333 = vpop.f32.mrf.mxu0
  %v4334 = vadd.f32 0.0, %v4333
  %v4335 = vpop.f32.mrf.mxu0
  %v4336 = vadd.f32 0.0, %v4335
  %4337 = vmatmul.bf16.gmra.mxu0 %v3222
  %v4338 = vpop.f32.mrf.mxu0
  %v4339 = vadd.f32 0.0, %v4338
  %v4340 = vpop.f32.mrf.mxu0
  %v4341 = vadd.f32 0.0, %v4340
  %4342 = vmatmul.bf16.gmra.mxu0 %v3223
  %v4343 = vpop.f32.mrf.mxu0
  %v4344 = vadd.f32 0.0, %v4343
  %v4345 = vpop.f32.mrf.mxu0
  %v4346 = vadd.f32 0.0, %v4345
  %4347 = vmatmul.bf16.gmra.mxu0 %v3767
  %v4348 = vpop.f32.mrf.mxu0
  %v4349 = vadd.f32 0.0, %v4348
  %v4350 = vpop.f32.mrf.mxu0
  %v4351 = vadd.f32 0.0, %v4350
  %4352 = vdwg.mxu0
  %4353 = vmatpush.bf16.msra.mxu0 %v3641
  %4354 = vmatpush.bf16.msra.mxu0 %v3639
  %4355 = vmatpush.bf16.msra.mxu0 %v3637
  %4356 = vmatpush.bf16.msra.mxu0 %v3635
  %4357 = vmatpush.bf16.msra.mxu0 %v3633
  %4358 = vmatpush.bf16.msra.mxu0 %v3631
  %4359 = vmatpush.bf16.msra.mxu0 %v3629
  %4360 = vmatpush.bf16.msra.mxu0 %v3627
  %4361 = vmatmul.bf16.gmra.mxu0 %v3220
  %v4362 = vpop.f32.mrf.mxu0
  %v4363 = vadd.f32 0.0, %v4362
  %v4364 = vpop.f32.mrf.mxu0
  %v4365 = vadd.f32 0.0, %v4364
  %4366 = vmatmul.bf16.gmra.mxu0 %v3221
  %v4367 = vpop.f32.mrf.mxu0
  %v4368 = vadd.f32 0.0, %v4367
  %v4369 = vpop.f32.mrf.mxu0
  %v4370 = vadd.f32 0.0, %v4369
  %4371 = vmatmul.bf16.gmra.mxu0 %v3222
  %v4372 = vpop.f32.mrf.mxu0
  %v4373 = vadd.f32 0.0, %v4372
  %v4374 = vpop.f32.mrf.mxu0
  %v4375 = vadd.f32 0.0, %v4374
  %4376 = vmatmul.bf16.gmra.mxu0 %v3223
  %v4377 = vpop.f32.mrf.mxu0
  %v4378 = vadd.f32 0.0, %v4377
  %v4379 = vpop.f32.mrf.mxu0
  %v4380 = vadd.f32 0.0, %v4379
  %4381 = vmatmul.bf16.gmra.mxu0 %v3767
  %v4382 = vpop.f32.mrf.mxu0
  %v4383 = vadd.f32 0.0, %v4382
  %v4384 = vpop.f32.mrf.mxu0
  %v4385 = vadd.f32 0.0, %v4384
  %4386 = vdwg.mxu0
  %v4387 = vadd.f32 %v4261, %v4329
  %v4388 = vadd.f32 %v4295, %v4363
  %v4389 = vadd.f32 %v4263, %v4331
  %v4390 = vadd.f32 %v4297, %v4365
  %v4391 = vadd.f32 %v4266, %v4334
  %v4392 = vadd.f32 %v4300, %v4368
  %v4393 = vadd.f32 %v4268, %v4336
  %v4394 = vadd.f32 %v4302, %v4370
  %v4395 = vadd.f32 %v4271, %v4339
  %v4396 = vadd.f32 %v4305, %v4373
  %v4397 = vadd.f32 %v4273, %v4341
  %v4398 = vadd.f32 %v4307, %v4375
  %v4399 = vadd.f32 %v4276, %v4344
  %v4400 = vadd.f32 %v4310, %v4378
  %v4401 = vadd.f32 %v4278, %v4346
  %v4402 = vadd.f32 %v4312, %v4380
  %v4403 = vadd.f32 %v4281, %v4349
  %v4404 = vadd.f32 %v4315, %v4383
  %v4405 = vadd.f32 %v4283, %v4351
  %v4406 = vadd.f32 %v4317, %v4385
  %4407 = vmatpush.bf16.msra.mxu0 %v3831
  %4408 = vmatpush.bf16.msra.mxu0 %v3829
  %4409 = vmatpush.bf16.msra.mxu0 %v3827
  %4410 = vmatpush.bf16.msra.mxu0 %v3825
  %4411 = vmatpush.bf16.msra.mxu0 %v3823
  %4412 = vmatpush.bf16.msra.mxu0 %v3821
  %4413 = vmatpush.bf16.msra.mxu0 %v3819
  %4414 = vmatpush.bf16.msra.mxu0 %v3817
  %4415 = vmatmul.bf16.gmra.mxu0 %v3399
  %v4416 = vpop.f32.mrf.mxu0
  %v4417 = vadd.f32 0.0, %v4416
  %v4418 = vpop.f32.mrf.mxu0
  %v4419 = vadd.f32 0.0, %v4418
  %4420 = vmatmul.bf16.gmra.mxu0 %v3400
  %v4421 = vpop.f32.mrf.mxu0
  %v4422 = vadd.f32 0.0, %v4421
  %v4423 = vpop.f32.mrf.mxu0
  %v4424 = vadd.f32 0.0, %v4423
  %4425 = vmatmul.bf16.gmra.mxu0 %v3401
  %v4426 = vpop.f32.mrf.mxu0
  %v4427 = vadd.f32 0.0, %v4426
  %v4428 = vpop.f32.mrf.mxu0
  %v4429 = vadd.f32 0.0, %v4428
  %4430 = vmatmul.bf16.gmra.mxu0 %v3576
  %v4431 = vpop.f32.mrf.mxu0
  %v4432 = vadd.f32 0.0, %v4431
  %v4433 = vpop.f32.mrf.mxu0
  %v4434 = vadd.f32 0.0, %v4433
  %4435 = vmatmul.bf16.gmra.mxu0 %v3958
  %v4436 = vpop.f32.mrf.mxu0
  %v4437 = vadd.f32 0.0, %v4436
  %v4438 = vpop.f32.mrf.mxu0
  %v4439 = vadd.f32 0.0, %v4438
  %4440 = vdwg.mxu0
  %4441 = vmatpush.bf16.msra.mxu0 %v3832
  %4442 = vmatpush.bf16.msra.mxu0 %v3830
  %4443 = vmatpush.bf16.msra.mxu0 %v3828
  %4444 = vmatpush.bf16.msra.mxu0 %v3826
  %4445 = vmatpush.bf16.msra.mxu0 %v3824
  %4446 = vmatpush.bf16.msra.mxu0 %v3822
  %4447 = vmatpush.bf16.msra.mxu0 %v3820
  %4448 = vmatpush.bf16.msra.mxu0 %v3818
  %4449 = vmatmul.bf16.gmra.mxu0 %v3399
  %v4450 = vpop.f32.mrf.mxu0
  %v4451 = vadd.f32 0.0, %v4450
  %v4452 = vpop.f32.mrf.mxu0
  %v4453 = vadd.f32 0.0, %v4452
  %4454 = vmatmul.bf16.gmra.mxu0 %v3400
  %v4455 = vpop.f32.mrf.mxu0
  %v4456 = vadd.f32 0.0, %v4455
  %v4457 = vpop.f32.mrf.mxu0
  %v4458 = vadd.f32 0.0, %v4457
  %4459 = vmatmul.bf16.gmra.mxu0 %v3401
  %v4460 = vpop.f32.mrf.mxu0
  %v4461 = vadd.f32 0.0, %v4460
  %v4462 = vpop.f32.mrf.mxu0
  %v4463 = vadd.f32 0.0, %v4462
  %4464 = vmatmul.bf16.gmra.mxu0 %v3576
  %v4465 = vpop.f32.mrf.mxu0
  %v4466 = vadd.f32 0.0, %v4465
  %v4467 = vpop.f32.mrf.mxu0
  %v4468 = vadd.f32 0.0, %v4467
  %4469 = vmatmul.bf16.gmra.mxu0 %v3958
  %v4470 = vpop.f32.mrf.mxu0
  %v4471 = vadd.f32 0.0, %v4470
  %v4472 = vpop.f32.mrf.mxu0
  %v4473 = vadd.f32 0.0, %v4472
  %4474 = vdwg.mxu0
  %v4475 = vadd.f32 %v4387, %v4417
  %v4476 = vadd.f32 %v4388, %v4451
  %v4477 = vadd.f32 %v4389, %v4419
  %v4478 = vadd.f32 %v4390, %v4453
  %v4479 = vadd.f32 %v4391, %v4422
  %v4480 = vadd.f32 %v4392, %v4456
  %v4481 = vadd.f32 %v4393, %v4424
  %v4482 = vadd.f32 %v4394, %v4458
  %v4483 = vadd.f32 %v4395, %v4427
  %v4484 = vadd.f32 %v4396, %v4461
  %v4485 = vadd.f32 %v4397, %v4429
  %v4486 = vadd.f32 %v4398, %v4463
  %v4487 = vadd.f32 %v4399, %v4432
  %v4488 = vadd.f32 %v4400, %v4466
  %v4489 = vadd.f32 %v4401, %v4434
  %v4490 = vadd.f32 %v4402, %v4468
  %v4491 = vadd.f32 %v4403, %v4437
  %v4492 = vadd.f32 %v4404, %v4471
  %v4493 = vadd.f32 %v4405, %v4439
  %v4494 = vadd.f32 %v4406, %v4473
  %v4497 = vunpack.c.l.b16 %v3164
  %v4498 = vunpack.c.l.b16 %v3165
  %v4499 = vpack.c.b16 %v4498, %v4497
  %4501 = vmatpush.bf16.msra.mxu0 %v4022
  %4502 = vmatpush.bf16.msra.mxu0 %v4020
  %4503 = vmatpush.bf16.msra.mxu0 %v4018
  %4504 = vmatpush.bf16.msra.mxu0 %v4016
  %4505 = vmatpush.bf16.msra.mxu0 %v4014
  %4506 = vmatpush.bf16.msra.mxu0 %v4012
  %4507 = vmatpush.bf16.msra.mxu0 %v4010
  %4508 = vmatpush.bf16.msra.mxu0 %v4008
  %4509 = vmatmul.bf16.gmra.mxu0 %v3221
  %v4510 = vpop.f32.mrf.mxu0
  %v4511 = vadd.f32 0.0, %v4510
  %v4512 = vpop.f32.mrf.mxu0
  %v4513 = vadd.f32 0.0, %v4512
  %4514 = vmatmul.bf16.gmra.mxu0 %v3222
  %v4515 = vpop.f32.mrf.mxu0
  %v4516 = vadd.f32 0.0, %v4515
  %v4517 = vpop.f32.mrf.mxu0
  %v4518 = vadd.f32 0.0, %v4517
  %4519 = vmatmul.bf16.gmra.mxu0 %v3223
  %v4520 = vpop.f32.mrf.mxu0
  %v4521 = vadd.f32 0.0, %v4520
  %v4522 = vpop.f32.mrf.mxu0
  %v4523 = vadd.f32 0.0, %v4522
  %4524 = vmatmul.bf16.gmra.mxu0 %v3767
  %v4525 = vpop.f32.mrf.mxu0
  %v4526 = vadd.f32 0.0, %v4525
  %v4527 = vpop.f32.mrf.mxu0
  %v4528 = vadd.f32 0.0, %v4527
  %4529 = vmatmul.bf16.gmra.mxu0 %v4499
  %v4530 = vpop.f32.mrf.mxu0
  %v4531 = vadd.f32 0.0, %v4530
  %v4532 = vpop.f32.mrf.mxu0
  %v4533 = vadd.f32 0.0, %v4532
  %4534 = vdwg.mxu0
  %4535 = vmatpush.bf16.msra.mxu0 %v4023
  %4536 = vmatpush.bf16.msra.mxu0 %v4021
  %4537 = vmatpush.bf16.msra.mxu0 %v4019
  %4538 = vmatpush.bf16.msra.mxu0 %v4017
  %4539 = vmatpush.bf16.msra.mxu0 %v4015
  %4540 = vmatpush.bf16.msra.mxu0 %v4013
  %4541 = vmatpush.bf16.msra.mxu0 %v4011
  %4542 = vmatpush.bf16.msra.mxu0 %v4009
  %4543 = vmatmul.bf16.gmra.mxu0 %v3221
  %v4544 = vpop.f32.mrf.mxu0
  %v4545 = vadd.f32 0.0, %v4544
  %v4546 = vpop.f32.mrf.mxu0
  %v4547 = vadd.f32 0.0, %v4546
  %4548 = vmatmul.bf16.gmra.mxu0 %v3222
  %v4549 = vpop.f32.mrf.mxu0
  %v4550 = vadd.f32 0.0, %v4549
  %v4551 = vpop.f32.mrf.mxu0
  %v4552 = vadd.f32 0.0, %v4551
  %4553 = vmatmul.bf16.gmra.mxu0 %v3223
  %v4554 = vpop.f32.mrf.mxu0
  %v4555 = vadd.f32 0.0, %v4554
  %v4556 = vpop.f32.mrf.mxu0
  %v4557 = vadd.f32 0.0, %v4556
  %4558 = vmatmul.bf16.gmra.mxu0 %v3767
  %v4559 = vpop.f32.mrf.mxu0
  %v4560 = vadd.f32 0.0, %v4559
  %v4561 = vpop.f32.mrf.mxu0
  %v4562 = vadd.f32 0.0, %v4561
  %4563 = vmatmul.bf16.gmra.mxu0 %v4499
  %v4564 = vpop.f32.mrf.mxu0
  %v4565 = vadd.f32 0.0, %v4564
  %v4566 = vpop.f32.mrf.mxu0
  %v4567 = vadd.f32 0.0, %v4566
  %4568 = vdwg.mxu0
  %v4569 = vadd.f32 %v4475, %v4511
  %v4570 = vadd.f32 %v4476, %v4545
  %v4571 = vadd.f32 %v4477, %v4513
  %v4572 = vadd.f32 %v4478, %v4547
  %v4573 = vadd.f32 %v4479, %v4516
  %v4574 = vadd.f32 %v4480, %v4550
  %v4575 = vadd.f32 %v4481, %v4518
  %v4576 = vadd.f32 %v4482, %v4552
  %v4577 = vadd.f32 %v4483, %v4521
  %v4578 = vadd.f32 %v4484, %v4555
  %v4579 = vadd.f32 %v4485, %v4523
  %v4580 = vadd.f32 %v4486, %v4557
  %v4581 = vadd.f32 %v4487, %v4526
  %v4582 = vadd.f32 %v4488, %v4560
  %v4583 = vadd.f32 %v4489, %v4528
  %v4584 = vadd.f32 %v4490, %v4562
  %v4585 = vadd.f32 %v4491, %v4531
  %v4586 = vadd.f32 %v4492, %v4565
  %v4587 = vadd.f32 %v4493, %v4533
  %v4588 = vadd.f32 %v4494, %v4567
  %v4589 = vadd.f32 %v4569, %v4129
  %v4590 = vadd.f32 %v4570, %v4130
  %v4591 = vadd.f32 %v4571, %v4129
  %v4592 = vadd.f32 %v4572, %v4130
  %v4593 = vadd.f32 %v4573, %v4129
  %v4594 = vadd.f32 %v4574, %v4130
  %v4595 = vadd.f32 %v4575, %v4129
  %v4596 = vadd.f32 %v4576, %v4130
  %v4597 = vadd.f32 %v4577, %v4129
  %v4598 = vadd.f32 %v4578, %v4130
  %v4599 = vadd.f32 %v4579, %v4129
  %v4600 = vadd.f32 %v4580, %v4130
  %v4601 = vadd.f32 %v4581, %v4129
  %v4602 = vadd.f32 %v4582, %v4130
  %v4603 = vadd.f32 %v4583, %v4129
  %v4604 = vadd.f32 %v4584, %v4130
  %v4605 = vadd.f32 %v4585, %v4129
  %v4606 = vadd.f32 %v4586, %v4130
  %v4607 = vadd.f32 %v4587, %v4129
  %v4608 = vadd.f32 %v4588, %v4130
  %v4609 = vmax.f32 %v4589, 0.0
  %v4610 = vmax.f32 %v4590, 0.0
  %v4611 = vmax.f32 %v4591, 0.0
  %v4612 = vmax.f32 %v4592, 0.0
  %v4613 = vmax.f32 %v4593, 0.0
  %v4614 = vmax.f32 %v4594, 0.0
  %v4615 = vmax.f32 %v4595, 0.0
  %v4616 = vmax.f32 %v4596, 0.0
  %v4617 = vmax.f32 %v4597, 0.0
  %v4618 = vmax.f32 %v4598, 0.0
  %v4619 = vmax.f32 %v4599, 0.0
  %v4620 = vmax.f32 %v4600, 0.0
  %v4621 = vmax.f32 %v4601, 0.0
  %v4622 = vmax.f32 %v4602, 0.0
  %v4623 = vmax.f32 %v4603, 0.0
  %v4624 = vmax.f32 %v4604, 0.0
  %v4625 = vmax.f32 %v4605, 0.0
  %v4626 = vmax.f32 %v4606, 0.0
  %v4627 = vmax.f32 %v4607, 0.0
  %v4628 = vmax.f32 %v4608, 0.0
  %v4629 = vmax.f32 %v4609, %v4610
  %v4630 = vmax.f32 %v4611, %v4612
  %v4631 = vmax.f32 %v4613, %v4614
  %v4632 = vmax.f32 %v4615, %v4616
  %v4633 = vmax.f32 %v4617, %v4618
  %v4634 = vmax.f32 %v4619, %v4620
  %v4635 = vmax.f32 %v4621, %v4622
  %v4636 = vmax.f32 %v4623, %v4624
  %v4637 = vmax.f32 %v4625, %v4626
  %v4638 = vmax.f32 %v4627, %v4628
  %v4639 = vmax.f32 %v4173, %v4629
  %v4640 = vmax.f32 %v4174, %v4630
  %v4641 = vmax.f32 %v4175, %v4631
  %v4642 = vmax.f32 %v4176, %v4632
  %v4643 = vmax.f32 %v4177, %v4633
  %v4644 = vmax.f32 %v4178, %v4634
  %v4645 = vmax.f32 %v4179, %v4635
  %v4646 = vmax.f32 %v4180, %v4636
  %v4647 = vmax.f32 %v4181, %v4637
  %v4648 = vmax.f32 %v4182, %v4638
  %v4649 = vpack.c.bf16 %v4639, %v4639
  %v4650 = vpack.c.bf16 %v4640, %v4640
  %v4651 = vpack.c.bf16 %v4641, %v4641
  %v4652 = vpack.c.bf16 %v4642, %v4642
  %v4653 = vpack.c.bf16 %v4643, %v4643
  %v4654 = vpack.c.bf16 %v4644, %v4644
  %v4655 = vpack.c.bf16 %v4645, %v4645
  %v4656 = vpack.c.bf16 %v4646, %v4646
  %v4657 = vpack.c.bf16 %v4647, %v4647
  %v4658 = vpack.c.bf16 %v4648, %v4648
  %v4659 = vld [vmem:[%s5] sm:$0xf]
  %v4660 = vld [vmem:[%s5 + $0x4] sm:$0xf]
  %v4661 = vld [vmem:[%s5 + $0x8] sm:$0xf]
  %v4662 = vld [vmem:[%s5 + $0xc] sm:$0xf]
  %v4663 = vld [vmem:[%s5 + $0x10] sm:$0xf]
  %v4664 = vld [vmem:[%s5 + $0x14] sm:$0xf]
  %v4665 = vld [vmem:[%s5 + $0x18] sm:$0xf]
  %v4666 = vld [vmem:[%s5 + $0x1c] sm:$0xf]
  %v4667 = vld [vmem:[%s5 + $0x20] sm:$0xf]
  %v4668 = vld [vmem:[%s5 + $0x24] sm:$0xf]
  %v4669 = vld [vmem:[%s5 + $0x28] sm:$0xf]
  %v4670 = vld [vmem:[%s5 + $0x2c] sm:$0xf]
  %v4671 = vld [vmem:[%s5 + $0x30] sm:$0xf]
  %v4672 = vld [vmem:[%s5 + $0x34] sm:$0xf]
  %v4673 = vld [vmem:[%s5 + $0x38] sm:$0xf]
  %v4674 = vld [vmem:[%s5 + $0x3c] sm:$0xf]
  %s4675 = scalar_lea.vmem %s5, 64
  %v4676 = vld [vmem:[%s4675] sm:$0xf]
  %v4677 = vld [vmem:[%s4675 + $0x4] sm:$0xf]
  %v4678 = vld [vmem:[%s4675 + $0x8] sm:$0xf]
  %v4679 = vld [vmem:[%s4675 + $0xc] sm:$0xf]
  %v4680 = vld [vmem:[%s4675 + $0x10] sm:$0xf]
  %v4681 = vld [vmem:[%s4675 + $0x14] sm:$0xf]
  %v4682 = vld [vmem:[%s4675 + $0x18] sm:$0xf]
  %v4683 = vld [vmem:[%s4675 + $0x1c] sm:$0xf]
  %v4684 = vld [vmem:[%s4675 + $0x20] sm:$0xf]
  %v4685 = vld [vmem:[%s4675 + $0x24] sm:$0xf]
  %v4686 = vld [vmem:[%s4675 + $0x28] sm:$0xf]
  %v4687 = vld [vmem:[%s4675 + $0x2c] sm:$0xf]
  %v4688 = vld [vmem:[%s4675 + $0x30] sm:$0xf]
  %v4689 = vld [vmem:[%s4675 + $0x34] sm:$0xf]
  %v4690 = vld [vmem:[%s4675 + $0x38] sm:$0xf]
  %v4691 = vld [vmem:[%s4675 + $0x3c] sm:$0xf]
  %v4694 = vunpack.c.l.b16 %v4651
  %v4695 = vunpack.c.l.b16 %v4652
  %v4696 = vpack.c.b16 %v4695, %v4694
  %v4714 = vunpack.c.l.b16 %v4676
  %v4715 = vunpack.c.l.b16 %v4677
  %v4716 = vunpack.c.l.b16 %v4678
  %v4717 = vunpack.c.l.b16 %v4679
  %v4718 = vunpack.c.l.b16 %v4680
  %v4719 = vunpack.c.l.b16 %v4681
  %v4720 = vunpack.c.l.b16 %v4682
  %v4721 = vunpack.c.l.b16 %v4683
  %v4722 = vunpack.c.l.b16 %v4684
  %v4723 = vunpack.c.l.b16 %v4685
  %v4724 = vunpack.c.l.b16 %v4686
  %v4725 = vunpack.c.l.b16 %v4687
  %v4726 = vunpack.c.l.b16 %v4688
  %v4727 = vunpack.c.l.b16 %v4689
  %v4728 = vunpack.c.l.b16 %v4690
  %v4729 = vunpack.c.l.b16 %v4691
  %v4730 = vpack.c.b16 %v4715, %v4714
  %v4731 = vpack.c.b16 %v4717, %v4716
  %v4732 = vpack.c.b16 %v4719, %v4718
  %v4733 = vpack.c.b16 %v4721, %v4720
  %v4734 = vpack.c.b16 %v4723, %v4722
  %v4735 = vpack.c.b16 %v4725, %v4724
  %v4736 = vpack.c.b16 %v4727, %v4726
  %v4737 = vpack.c.b16 %v4729, %v4728
  %4746 = vmatpush.bf16.msra.mxu0 %v4737
  %4747 = vmatpush.bf16.msra.mxu0 %v4736
  %4748 = vmatpush.bf16.msra.mxu0 %v4735
  %4749 = vmatpush.bf16.msra.mxu0 %v4734
  %4750 = vmatpush.bf16.msra.mxu0 %v4733
  %4751 = vmatpush.bf16.msra.mxu0 %v4732
  %4752 = vmatpush.bf16.msra.mxu0 %v4731
  %4753 = vmatpush.bf16.msra.mxu0 %v4730
  %4754 = vmatmul.bf16.gmra.mxu0 %v4696
  %v4755 = vpop.f32.mrf.mxu0
  %v4756 = vadd.f32 0.0, %v4755
  %v4757 = vpop.f32.mrf.mxu0
  %v4758 = vadd.f32 0.0, %v4757
  %4759 = vdwg.mxu0
  %v4762 = vunpack.c.l.b16 %v4649
  %v4763 = vunpack.c.l.b16 %v4650
  %v4764 = vpack.c.b16 %v4763, %v4762
  %v4782 = vunpack.c.l.b16 %v4659
  %v4783 = vunpack.c.l.b16 %v4660
  %v4784 = vunpack.c.l.b16 %v4661
  %v4785 = vunpack.c.l.b16 %v4662
  %v4786 = vunpack.c.l.b16 %v4663
  %v4787 = vunpack.c.l.b16 %v4664
  %v4788 = vunpack.c.l.b16 %v4665
  %v4789 = vunpack.c.l.b16 %v4666
  %v4790 = vunpack.c.l.b16 %v4667
  %v4791 = vunpack.c.l.b16 %v4668
  %v4792 = vunpack.c.l.b16 %v4669
  %v4793 = vunpack.c.l.b16 %v4670
  %v4794 = vunpack.c.l.b16 %v4671
  %v4795 = vunpack.c.l.b16 %v4672
  %v4796 = vunpack.c.l.b16 %v4673
  %v4797 = vunpack.c.l.b16 %v4674
  %v4798 = vpack.c.b16 %v4783, %v4782
  %v4799 = vpack.c.b16 %v4785, %v4784
  %v4800 = vpack.c.b16 %v4787, %v4786
  %v4801 = vpack.c.b16 %v4789, %v4788
  %v4802 = vpack.c.b16 %v4791, %v4790
  %v4803 = vpack.c.b16 %v4793, %v4792
  %v4804 = vpack.c.b16 %v4795, %v4794
  %v4805 = vpack.c.b16 %v4797, %v4796
  %4814 = vmatpush.bf16.msra.mxu0 %v4805
  %4815 = vmatpush.bf16.msra.mxu0 %v4804
  %4816 = vmatpush.bf16.msra.mxu0 %v4803
  %4817 = vmatpush.bf16.msra.mxu0 %v4802
  %4818 = vmatpush.bf16.msra.mxu0 %v4801
  %4819 = vmatpush.bf16.msra.mxu0 %v4800
  %4820 = vmatpush.bf16.msra.mxu0 %v4799
  %4821 = vmatpush.bf16.msra.mxu0 %v4798
  %4822 = vmatmul.bf16.gmra.mxu0 %v4764
  %v4823 = vpop.f32.mrf.mxu0
  %v4824 = vadd.f32 %v4756, %v4823
  %v4825 = vpop.f32.mrf.mxu0
  %v4826 = vadd.f32 %v4758, %v4825
  %4827 = vdwg.mxu0
  %s4828 = scalar_lea.vmem %s5, 128
  %v4829 = vld [vmem:[%s4828] sm:$0xf]
  %v4830 = vld [vmem:[%s4828 + $0x4] sm:$0xf]
  %v4831 = vld [vmem:[%s4828 + $0x8] sm:$0xf]
  %v4832 = vld [vmem:[%s4828 + $0xc] sm:$0xf]
  %v4833 = vld [vmem:[%s4828 + $0x10] sm:$0xf]
  %v4834 = vld [vmem:[%s4828 + $0x14] sm:$0xf]
  %v4835 = vld [vmem:[%s4828 + $0x18] sm:$0xf]
  %v4836 = vld [vmem:[%s4828 + $0x1c] sm:$0xf]
  %v4837 = vld [vmem:[%s4828 + $0x20] sm:$0xf]
  %v4838 = vld [vmem:[%s4828 + $0x24] sm:$0xf]
  %v4839 = vld [vmem:[%s4828 + $0x28] sm:$0xf]
  %v4840 = vld [vmem:[%s4828 + $0x2c] sm:$0xf]
  %v4841 = vld [vmem:[%s4828 + $0x30] sm:$0xf]
  %v4842 = vld [vmem:[%s4828 + $0x34] sm:$0xf]
  %v4843 = vld [vmem:[%s4828 + $0x38] sm:$0xf]
  %v4844 = vld [vmem:[%s4828 + $0x3c] sm:$0xf]
  %v4847 = vunpack.c.l.b16 %v4653
  %v4848 = vunpack.c.l.b16 %v4654
  %v4849 = vpack.c.b16 %v4848, %v4847
  %v4867 = vunpack.c.l.b16 %v4829
  %v4868 = vunpack.c.l.b16 %v4830
  %v4869 = vunpack.c.l.b16 %v4831
  %v4870 = vunpack.c.l.b16 %v4832
  %v4871 = vunpack.c.l.b16 %v4833
  %v4872 = vunpack.c.l.b16 %v4834
  %v4873 = vunpack.c.l.b16 %v4835
  %v4874 = vunpack.c.l.b16 %v4836
  %v4875 = vunpack.c.l.b16 %v4837
  %v4876 = vunpack.c.l.b16 %v4838
  %v4877 = vunpack.c.l.b16 %v4839
  %v4878 = vunpack.c.l.b16 %v4840
  %v4879 = vunpack.c.l.b16 %v4841
  %v4880 = vunpack.c.l.b16 %v4842
  %v4881 = vunpack.c.l.b16 %v4843
  %v4882 = vunpack.c.l.b16 %v4844
  %v4883 = vpack.c.b16 %v4868, %v4867
  %v4884 = vpack.c.b16 %v4870, %v4869
  %v4885 = vpack.c.b16 %v4872, %v4871
  %v4886 = vpack.c.b16 %v4874, %v4873
  %v4887 = vpack.c.b16 %v4876, %v4875
  %v4888 = vpack.c.b16 %v4878, %v4877
  %v4889 = vpack.c.b16 %v4880, %v4879
  %v4890 = vpack.c.b16 %v4882, %v4881
  %4899 = vmatpush.bf16.msra.mxu0 %v4890
  %4900 = vmatpush.bf16.msra.mxu0 %v4889
  %4901 = vmatpush.bf16.msra.mxu0 %v4888
  %4902 = vmatpush.bf16.msra.mxu0 %v4887
  %4903 = vmatpush.bf16.msra.mxu0 %v4886
  %4904 = vmatpush.bf16.msra.mxu0 %v4885
  %4905 = vmatpush.bf16.msra.mxu0 %v4884
  %4906 = vmatpush.bf16.msra.mxu0 %v4883
  %4907 = vmatmul.bf16.gmra.mxu0 %v4849
  %v4908 = vpop.f32.mrf.mxu0
  %v4909 = vadd.f32 0.0, %v4908
  %v4910 = vpop.f32.mrf.mxu0
  %v4911 = vadd.f32 0.0, %v4910
  %4912 = vdwg.mxu0
  %v4913 = vadd.f32 %v4824, %v4909
  %v4914 = vadd.f32 %v4826, %v4911
  %s4915 = scalar_lea.vmem %s5, 192
  %v4916 = vld [vmem:[%s4915] sm:$0xf]
  %v4917 = vld [vmem:[%s4915 + $0x4] sm:$0xf]
  %v4918 = vld [vmem:[%s4915 + $0x8] sm:$0xf]
  %v4919 = vld [vmem:[%s4915 + $0xc] sm:$0xf]
  %v4920 = vld [vmem:[%s4915 + $0x10] sm:$0xf]
  %v4921 = vld [vmem:[%s4915 + $0x14] sm:$0xf]
  %v4922 = vld [vmem:[%s4915 + $0x18] sm:$0xf]
  %v4923 = vld [vmem:[%s4915 + $0x1c] sm:$0xf]
  %v4924 = vld [vmem:[%s4915 + $0x20] sm:$0xf]
  %v4925 = vld [vmem:[%s4915 + $0x24] sm:$0xf]
  %v4926 = vld [vmem:[%s4915 + $0x28] sm:$0xf]
  %v4927 = vld [vmem:[%s4915 + $0x2c] sm:$0xf]
  %v4928 = vld [vmem:[%s4915 + $0x30] sm:$0xf]
  %v4929 = vld [vmem:[%s4915 + $0x34] sm:$0xf]
  %v4930 = vld [vmem:[%s4915 + $0x38] sm:$0xf]
  %v4931 = vld [vmem:[%s4915 + $0x3c] sm:$0xf]
  %v4934 = vunpack.c.l.b16 %v4655
  %v4935 = vunpack.c.l.b16 %v4656
  %v4936 = vpack.c.b16 %v4935, %v4934
  %v4954 = vunpack.c.l.b16 %v4916
  %v4955 = vunpack.c.l.b16 %v4917
  %v4956 = vunpack.c.l.b16 %v4918
  %v4957 = vunpack.c.l.b16 %v4919
  %v4958 = vunpack.c.l.b16 %v4920
  %v4959 = vunpack.c.l.b16 %v4921
  %v4960 = vunpack.c.l.b16 %v4922
  %v4961 = vunpack.c.l.b16 %v4923
  %v4962 = vunpack.c.l.b16 %v4924
  %v4963 = vunpack.c.l.b16 %v4925
  %v4964 = vunpack.c.l.b16 %v4926
  %v4965 = vunpack.c.l.b16 %v4927
  %v4966 = vunpack.c.l.b16 %v4928
  %v4967 = vunpack.c.l.b16 %v4929
  %v4968 = vunpack.c.l.b16 %v4930
  %v4969 = vunpack.c.l.b16 %v4931
  %v4970 = vpack.c.b16 %v4955, %v4954
  %v4971 = vpack.c.b16 %v4957, %v4956
  %v4972 = vpack.c.b16 %v4959, %v4958
  %v4973 = vpack.c.b16 %v4961, %v4960
  %v4974 = vpack.c.b16 %v4963, %v4962
  %v4975 = vpack.c.b16 %v4965, %v4964
  %v4976 = vpack.c.b16 %v4967, %v4966
  %v4977 = vpack.c.b16 %v4969, %v4968
  %4986 = vmatpush.bf16.msra.mxu0 %v4977
  %4987 = vmatpush.bf16.msra.mxu0 %v4976
  %4988 = vmatpush.bf16.msra.mxu0 %v4975
  %4989 = vmatpush.bf16.msra.mxu0 %v4974
  %4990 = vmatpush.bf16.msra.mxu0 %v4973
  %4991 = vmatpush.bf16.msra.mxu0 %v4972
  %4992 = vmatpush.bf16.msra.mxu0 %v4971
  %4993 = vmatpush.bf16.msra.mxu0 %v4970
  %4994 = vmatmul.bf16.gmra.mxu0 %v4936
  %v4995 = vpop.f32.mrf.mxu0
  %v4996 = vadd.f32 0.0, %v4995
  %v4997 = vpop.f32.mrf.mxu0
  %v4998 = vadd.f32 0.0, %v4997
  %4999 = vdwg.mxu0
  %v5000 = vadd.f32 %v4913, %v4996
  %v5001 = vadd.f32 %v4914, %v4998
  %s5002 = scalar_lea.vmem %s5, 256
  %v5003 = vld [vmem:[%s5002] sm:$0xf]
  %v5004 = vld [vmem:[%s5002 + $0x4] sm:$0xf]
  %v5005 = vld [vmem:[%s5002 + $0x8] sm:$0xf]
  %v5006 = vld [vmem:[%s5002 + $0xc] sm:$0xf]
  %v5007 = vld [vmem:[%s5002 + $0x10] sm:$0xf]
  %v5008 = vld [vmem:[%s5002 + $0x14] sm:$0xf]
  %v5009 = vld [vmem:[%s5002 + $0x18] sm:$0xf]
  %v5010 = vld [vmem:[%s5002 + $0x1c] sm:$0xf]
  %v5011 = vld [vmem:[%s5002 + $0x20] sm:$0xf]
  %v5012 = vld [vmem:[%s5002 + $0x24] sm:$0xf]
  %v5013 = vld [vmem:[%s5002 + $0x28] sm:$0xf]
  %v5014 = vld [vmem:[%s5002 + $0x2c] sm:$0xf]
  %v5015 = vld [vmem:[%s5002 + $0x30] sm:$0xf]
  %v5016 = vld [vmem:[%s5002 + $0x34] sm:$0xf]
  %v5017 = vld [vmem:[%s5002 + $0x38] sm:$0xf]
  %v5018 = vld [vmem:[%s5002 + $0x3c] sm:$0xf]
  %v5021 = vunpack.c.l.b16 %v4657
  %v5022 = vunpack.c.l.b16 %v4658
  %v5023 = vpack.c.b16 %v5022, %v5021
  %v5041 = vunpack.c.l.b16 %v5003
  %v5042 = vunpack.c.l.b16 %v5004
  %v5043 = vunpack.c.l.b16 %v5005
  %v5044 = vunpack.c.l.b16 %v5006
  %v5045 = vunpack.c.l.b16 %v5007
  %v5046 = vunpack.c.l.b16 %v5008
  %v5047 = vunpack.c.l.b16 %v5009
  %v5048 = vunpack.c.l.b16 %v5010
  %v5049 = vunpack.c.l.b16 %v5011
  %v5050 = vunpack.c.l.b16 %v5012
  %v5051 = vunpack.c.l.b16 %v5013
  %v5052 = vunpack.c.l.b16 %v5014
  %v5053 = vunpack.c.l.b16 %v5015
  %v5054 = vunpack.c.l.b16 %v5016
  %v5055 = vunpack.c.l.b16 %v5017
  %v5056 = vunpack.c.l.b16 %v5018
  %v5057 = vpack.c.b16 %v5042, %v5041
  %v5058 = vpack.c.b16 %v5044, %v5043
  %v5059 = vpack.c.b16 %v5046, %v5045
  %v5060 = vpack.c.b16 %v5048, %v5047
  %v5061 = vpack.c.b16 %v5050, %v5049
  %v5062 = vpack.c.b16 %v5052, %v5051
  %v5063 = vpack.c.b16 %v5054, %v5053
  %v5064 = vpack.c.b16 %v5056, %v5055
  %5073 = vmatpush.bf16.msra.mxu0 %v5064
  %5074 = vmatpush.bf16.msra.mxu0 %v5063
  %5075 = vmatpush.bf16.msra.mxu0 %v5062
  %5076 = vmatpush.bf16.msra.mxu0 %v5061
  %5077 = vmatpush.bf16.msra.mxu0 %v5060
  %5078 = vmatpush.bf16.msra.mxu0 %v5059
  %5079 = vmatpush.bf16.msra.mxu0 %v5058
  %5080 = vmatpush.bf16.msra.mxu0 %v5057
  %5081 = vmatmul.bf16.gmra.mxu0 %v5023
  %v5082 = vpop.f32.mrf.mxu0
  %v5083 = vadd.f32 0.0, %v5082
  %v5084 = vpop.f32.mrf.mxu0
  %v5085 = vadd.f32 0.0, %v5084
  %5086 = vdwg.mxu0
  %v5087 = vadd.f32 %v5000, %v5083
  %v5088 = vadd.f32 %v5001, %v5085
  %v5089 = vld [vmem:[%s6] sm:$0x1]
  %v5091 = vperm.slane %v5089, 0
  %v5093 = vadd.f32 %v5087, %v5091
  %v5094 = vadd.f32 %v5088, %v5091
  %v5095 = vmax.f32 %v5093, 0.0
  %v5096 = vmax.f32 %v5094, 0.0
  %v5097 = vpack.c.bf16 %v5096, %v5095
  %v5098 = vld [vmem:[%s7] sm:$0xf]
  %v5099 = vld [vmem:[%s7 + $0x4] sm:$0xf]
  %v5100 = vld [vmem:[%s7 + $0x8] sm:$0xf]
  %v5101 = vld [vmem:[%s7 + $0xc] sm:$0xf]
  %v5102 = vld [vmem:[%s7 + $0x10] sm:$0xf]
  %v5103 = vld [vmem:[%s7 + $0x14] sm:$0xf]
  %v5104 = vld [vmem:[%s7 + $0x18] sm:$0xf]
  %v5105 = vld [vmem:[%s7 + $0x1c] sm:$0xf]
  %v5106 = vld [vmem:[%s7 + $0x20] sm:$0xf]
  %v5107 = vld [vmem:[%s7 + $0x24] sm:$0xf]
  %v5108 = vld [vmem:[%s7 + $0x28] sm:$0xf]
  %v5109 = vld [vmem:[%s7 + $0x2c] sm:$0xf]
  %v5110 = vld [vmem:[%s7 + $0x30] sm:$0xf]
  %v5111 = vld [vmem:[%s7 + $0x34] sm:$0xf]
  %v5112 = vld [vmem:[%s7 + $0x38] sm:$0xf]
  %v5113 = vld [vmem:[%s8] sm:$0x1]
  %v5115 = vperm.slane %v5113, 0
  %v5132 = vunpack.c.l.b16 %v5098
  %v5133 = vunpack.c.l.b16 %v5099
  %v5134 = vunpack.c.l.b16 %v5100
  %v5135 = vunpack.c.l.b16 %v5101
  %v5136 = vunpack.c.l.b16 %v5102
  %v5137 = vunpack.c.l.b16 %v5103
  %v5138 = vunpack.c.l.b16 %v5104
  %v5139 = vunpack.c.l.b16 %v5105
  %v5140 = vunpack.c.l.b16 %v5106
  %v5141 = vunpack.c.l.b16 %v5107
  %v5142 = vunpack.c.l.b16 %v5108
  %v5143 = vunpack.c.l.b16 %v5109
  %v5144 = vunpack.c.l.b16 %v5110
  %v5145 = vunpack.c.l.b16 %v5111
  %v5146 = vunpack.c.l.b16 %v5112
  %v5147 = vpack.c.b16 %v5133, %v5132
  %v5148 = vpack.c.b16 %v5135, %v5134
  %v5149 = vpack.c.b16 %v5137, %v5136
  %v5150 = vpack.c.b16 %v5139, %v5138
  %v5151 = vpack.c.b16 %v5141, %v5140
  %v5152 = vpack.c.b16 %v5143, %v5142
  %v5153 = vpack.c.b16 %v5145, %v5144
  %v5154 = vpack.c.b16 %v5146, %v5146
  %vm5162 = vcmask 982016
  %v5164 = vsel %vm5162, %v5097, 0
  %vm5166 = vcmask 1043456
  %v5168 = vsel %vm5166, %v5154, 0
  %5170 = vmatpush.bf16.msra.mxu0 %v5168
  %5171 = vmatpush.bf16.msra.mxu0 %v5153
  %5172 = vmatpush.bf16.msra.mxu0 %v5152
  %5173 = vmatpush.bf16.msra.mxu0 %v5151
  %5174 = vmatpush.bf16.msra.mxu0 %v5150
  %5175 = vmatpush.bf16.msra.mxu0 %v5149
  %5176 = vmatpush.bf16.msra.mxu0 %v5148
  %5177 = vmatpush.bf16.msra.mxu0 %v5147
  %5178 = vmatmul.bf16.gmra.mxu0 %v5164
  %v5179 = vpop.f32.mrf.mxu0
  %v5180 = vadd.f32 %v5115, %v5179
  %v5181 = vpop.f32.mrf.mxu0
  %v5182 = vadd.f32 %v5115, %v5181
  %5183 = vdwg.mxu0
  %v5184 = vmax.f32 %v5180, 0.0
  %v5185 = vmax.f32 %v5182, 0.0
  %v5186 = vpack.c.bf16 %v5185, %v5184
  %v5187 = vld [vmem:[%s9] sm:$0xf]
  %v5188 = vld [vmem:[%s9 + $0x4] sm:$0xf]
  %v5189 = vld [vmem:[%s9 + $0x8] sm:$0xf]
  %v5190 = vld [vmem:[%s9 + $0xc] sm:$0xf]
  %v5191 = vld [vmem:[%s9 + $0x10] sm:$0xf]
  %v5192 = vld [vmem:[%s9 + $0x14] sm:$0xf]
  %v5193 = vld [vmem:[%s9 + $0x18] sm:$0xf]
  %v5194 = vld [vmem:[%s9 + $0x1c] sm:$0xf]
  %v5195 = vld [vmem:[%s9 + $0x20] sm:$0xf]
  %v5196 = vld [vmem:[%s9 + $0x24] sm:$0xf]
  %v5197 = vld [vmem:[%s9 + $0x28] sm:$0x3]
  %v5198 = vld [vmem:[%s10] sm:$0x1]
  %v5200 = vperm.slane %v5198, 0
  %v5213 = vunpack.c.l.b16 %v5187
  %v5214 = vunpack.c.l.b16 %v5188
  %v5215 = vunpack.c.l.b16 %v5189
  %v5216 = vunpack.c.l.b16 %v5190
  %v5217 = vunpack.c.l.b16 %v5191
  %v5218 = vunpack.c.l.b16 %v5192
  %v5219 = vunpack.c.l.b16 %v5193
  %v5220 = vunpack.c.l.b16 %v5194
  %v5221 = vunpack.c.l.b16 %v5195
  %v5222 = vunpack.c.l.b16 %v5196
  %v5223 = vunpack.c.l.b16 %v5197
  %v5224 = vpack.c.b16 %v5214, %v5213
  %v5225 = vpack.c.b16 %v5216, %v5215
  %v5226 = vpack.c.b16 %v5218, %v5217
  %v5227 = vpack.c.b16 %v5220, %v5219
  %v5228 = vpack.c.b16 %v5222, %v5221
  %v5229 = vpack.c.b16 %v5223, %v5223
  %vm5235 = vcmask 687104
  %v5237 = vsel %vm5235, %v5186, 0
  %vm5239 = vcmask 1041408
  %v5241 = vsel %vm5239, %v5229, 0
  %5243 = vmatpush.bf16.msra.mxu0 0
  %5244 = vmatpush.bf16.msra.mxu0 0
  %5245 = vmatpush.bf16.msra.mxu0 %v5241
  %5246 = vmatpush.bf16.msra.mxu0 %v5228
  %5247 = vmatpush.bf16.msra.mxu0 %v5227
  %5248 = vmatpush.bf16.msra.mxu0 %v5226
  %5249 = vmatpush.bf16.msra.mxu0 %v5225
  %5250 = vmatpush.bf16.msra.mxu0 %v5224
  %5251 = vmatmul.bf16.gmra.mxu0 %v5237
  %v5252 = vpop.f32.mrf.mxu0
  %v5253 = vadd.f32 %v5200, %v5252
  %v5254 = vpop.f32.mrf.mxu0
  %v5255 = vadd.f32 %v5200, %v5254
  %5256 = vdwg.mxu0
  %5257 = vst [vmem:[%s11] sm:$0xff] %v5253
  %5258 = vst [vmem:[%s11 + $0x8] sm:$0xff] %v5255
  // Predicated region
  $region46: #{forward.1} parent=0 // pred_check
    _
  $region47: #{forward.1} parent=0 // pred_check_branch
    %5260 = sbr.rel (0) target = $region49
  $region48: #{forward.1} parent=0 // pred_region
    _
  $region49: #{forward.1} parent=0 // pred_fallthru
    _
  // Predicated region
  $region50: #{forward.1} parent=0 // pred_check
    _
  $region51: #{forward.1} parent=0 // pred_check_branch
    %5262 = sbr.rel (0) target = $region53
  $region52: #{forward.1} parent=0 // pred_region
    _
  $region53: #{forward.1} parent=0 // pred_fallthru
    _

</llo_original>
